<compile_context>
chip_gen: v7x
topology: tpu7x:2x2x1
jax: 0.10.0
libtpu: 0.0.40
codegen_flags: <defaults>
</compile_context>

<pallas_src>
import functools
import math

import numpy as np

import jax
import jax.numpy as jnp
from jax.experimental import pallas as pl
from jax.experimental.pallas import tpu as pltpu

# ---------------- model config (small, structure-faithful) ----------------
PATCH = 16
HIDDEN = 64
NUM_HEADS = 4
HEAD_DIM = HIDDEN // NUM_HEADS
MLP_DIM = 128
NUM_LAYERS = 2
NUM_CLASSES = 3
LN_EPS = 1e-6                      # torchvision ViT LayerNorm eps
ATTN_SCALE = 1.0 / math.sqrt(HEAD_DIM)
CLS_PAD = 128                      # pad the 3-class head to a full lane width
NEG_INF = -1e30
_SQRT_HALF = 0.7071067811865476

# -------- packed small-vector slab layout (rows x VEC_W lanes, zero-padded) ------
VEC_W = 3 * HIDDEN                 # 192 = widest packed vector (qkv bias)
ROWS_PER_LAYER = 8
(R_LN1G, R_LN1B, R_QKVB, R_OPB, R_LN2G, R_LN2B, R_MLPB1, R_MLPB2) = range(8)
R_LNFG = NUM_LAYERS * ROWS_PER_LAYER
R_LNFB = R_LNFG + 1
R_HEADB = R_LNFG + 2
R_BASE = R_LNFG + 3                # S more rows: folded cls-token/pos-emb/conv-bias


# ------------------------------ fused kernel --------------------------------
def _vit_fused_kernel(
    patches_ref,       # (1, B*NP, PIN)       bf16  im2col patch rows (sample-major)
    attn_bias_ref,     # (BS, BS)             f32   block-diagonal 0 / -1e30 mask
    vec_ref,           # (R_BASE + S, VEC_W)  f32   packed small vectors
    conv_w_ref,        # (PIN, D)             bf16
    qkv_w_ref,         # (L, D, 3D)           bf16
    op_w_ref,          # (L, H, hd, D)        bf16  out-proj pre-split per head
    mlp_w1_ref,        # (L, D, MLP)          bf16
    mlp_w2_ref,        # (L, MLP, D)          bf16
    head_w_ref,        # (D, CLS_PAD)         bf16  zero-padded columns
    out_ref,           # (1, B, CLS_PAD)      f32
    *, b_tile, n_patches,
):
    B, NP = b_tile, n_patches
    S = NP + 1
    BS = B * S
    D = HIDDEN

    def vrow(r, w=D):                      # static slice of the packed slab -> (1, w)
        return vec_ref[r:r + 1, 0:w]

    def layernorm(v, g, b):                # f32 math (v5e has no bf16 VPU/EUP)
        mu = jnp.mean(v, axis=-1, keepdims=True)
        var = jnp.mean(jnp.square(v - mu), axis=-1, keepdims=True)
        return (v - mu) * jax.lax.rsqrt(var + LN_EPS) * g + b

    def gelu(v):                           # exact erf GELU, matches nn.GELU()
        return 0.5 * v * (1.0 + jax.lax.erf(v * _SQRT_HALF))

    attn_bias = attn_bias_ref[...]         # (BS, BS), loaded once, reused per head

    # ---- patch embedding: all samples' patch rows in one (B*NP, PIN) matmul ----
    emb = jnp.dot(patches_ref[0], conv_w_ref[...],
                  preferred_element_type=jnp.float32)          # (B*NP, D) f32

    # Token layout: rows [0, B) = class tokens, rows [B, BS) = patch tokens
    # (sample-major).  cls token / pos-emb / conv-bias are folded into "base".
    base_patch = vec_ref[R_BASE + 1:R_BASE + S, 0:D]           # (NP, D)
    patch_pos = jnp.concatenate([base_patch] * B, axis=0)      # (B*NP, D)
    cls_rows = jnp.broadcast_to(vrow(R_BASE), (B, D))          # (B, D)
    x = jnp.concatenate([cls_rows, emb + patch_pos], axis=0)   # (BS, D) f32

    for li in range(NUM_LAYERS):
        r0 = li * ROWS_PER_LAYER
        # ------------------- multi-head self-attention -------------------
        h = layernorm(x, vrow(r0 + R_LN1G), vrow(r0 + R_LN1B))
        qkv = (jnp.dot(h.astype(jnp.bfloat16), qkv_w_ref[li],
                       preferred_element_type=jnp.float32)
               + vrow(r0 + R_QKVB, 3 * D))                     # (BS, 3D), registers

        proj = vrow(r0 + R_OPB)                                # out-proj bias (1, D)
        for hi in range(NUM_HEADS):
            q = qkv[:, hi * HEAD_DIM:(hi + 1) * HEAD_DIM].astype(jnp.bfloat16)
            k = qkv[:, D + hi * HEAD_DIM:D + (hi + 1) * HEAD_DIM].astype(jnp.bfloat16)
            v = qkv[:, 2 * D + hi * HEAD_DIM:2 * D + (hi + 1) * HEAD_DIM].astype(jnp.bfloat16)

            # Block-diagonal masked scores: samples never attend across each other.
            s = jax.lax.dot_general(q, k, (((1,), (1,)), ((), ())),
                                    preferred_element_type=jnp.float32)
            s = s * ATTN_SCALE + attn_bias                     # (BS, BS) f32
            s = s - jnp.max(s, axis=-1, keepdims=True)
            e = jnp.exp(s)
            p = e * pl.reciprocal(jnp.sum(e, axis=-1, keepdims=True), approx=True)
            o = jnp.dot(p.astype(jnp.bfloat16), v,
                        preferred_element_type=jnp.float32)    # (BS, hd)
            # out-projection fused per head; f32 accumulation in registers
            proj = proj + jnp.dot(o.astype(jnp.bfloat16), op_w_ref[li, hi],
                                  preferred_element_type=jnp.float32)
        x = x + proj                                           # residual (fused)

        # ------------------------------ MLP ------------------------------
        h = layernorm(x, vrow(r0 + R_LN2G), vrow(r0 + R_LN2B))
        h1 = (jnp.dot(h.astype(jnp.bfloat16), mlp_w1_ref[li],
                      preferred_element_type=jnp.float32)
              + vrow(r0 + R_MLPB1, MLP_DIM))
        h1 = gelu(h1)
        h2 = (jnp.dot(h1.astype(jnp.bfloat16), mlp_w2_ref[li],
                      preferred_element_type=jnp.float32)
              + vrow(r0 + R_MLPB2))
        x = x + h2                                             # residual (fused)

    # -------- final LayerNorm + classification head on the class-token rows --------
    cls = layernorm(x[0:B, :], vrow(R_LNFG), vrow(R_LNFB))     # (B, D)
    logits = (jnp.dot(cls.astype(jnp.bfloat16), head_w_ref[...],
                      preferred_element_type=jnp.float32)
              + vrow(R_HEADB, CLS_PAD))                        # (B, CLS_PAD) lane-dense
    out_ref[0] = logits


# ------------------------------ parameters ----------------------------------
def init_params(key, image_size):
    """Deterministic small ViT params (PyTorch layout rewritten as (in, out))."""
    def nrm(k, shape, std=0.02):
        return (jax.random.normal(k, shape, dtype=jnp.float32) * std).astype(jnp.float32)

    n_patches = (image_size // PATCH) ** 2
    seq_len = n_patches + 1
    patch_in = 3 * PATCH * PATCH

    keys = jax.random.split(key, 4 + NUM_LAYERS)
    params = {
        "conv_w": nrm(keys[0], (patch_in, HIDDEN)),            # (C*P*P, D)
        "conv_b": jnp.zeros((HIDDEN,), jnp.float32),
        "class_token": nrm(keys[1], (1, 1, HIDDEN)),
        "pos_embedding": nrm(keys[2], (1, seq_len, HIDDEN)),
        "ln_g": jnp.ones((HIDDEN,), jnp.float32),
        "ln_b": jnp.zeros((HIDDEN,), jnp.float32),
        "head_w": nrm(keys[3], (HIDDEN, NUM_CLASSES)),
        "head_b": jnp.zeros((NUM_CLASSES,), jnp.float32),
    }
    layers = []
    for li in range(NUM_LAYERS):
        lk = jax.random.split(keys[4 + li], 4)
        layers.append(
            {
                "ln1_g": jnp.ones((HIDDEN,), jnp.float32),
                "ln1_b": jnp.zeros((HIDDEN,), jnp.float32),
                "in_proj_w": nrm(lk[0], (HIDDEN, 3 * HIDDEN)),
                "in_proj_b": jnp.zeros((3 * HIDDEN,), jnp.float32),
                "out_proj_w": nrm(lk[1], (HIDDEN, HIDDEN)),
                "out_proj_b": jnp.zeros((HIDDEN,), jnp.float32),
                "ln2_g": jnp.ones((HIDDEN,), jnp.float32),
                "ln2_b": jnp.zeros((HIDDEN,), jnp.float32),
                "mlp_w1": nrm(lk[2], (HIDDEN, MLP_DIM)),
                "mlp_b1": jnp.zeros((MLP_DIM,), jnp.float32),
                "mlp_w2": nrm(lk[3], (MLP_DIM, HIDDEN)),
                "mlp_b2": jnp.zeros((HIDDEN,), jnp.float32),
            }
        )
    params["layers"] = layers
    return params


def prepare_params(params, seq_len):
    """One-time prep: pack all tiny f32 vectors into one slab (one DMA), pre-split
    the out-projection per head, cast matmul weights to bf16, pad the head."""
    D, L = HIDDEN, NUM_LAYERS

    def stack(name):
        return jnp.stack([lyr[name] for lyr in params["layers"]], axis=0)

    vec = jnp.zeros((R_BASE + seq_len, VEC_W), jnp.float32)
    for li in range(L):
        r0 = li * ROWS_PER_LAYER
        lyr = params["layers"][li]
        vec = vec.at[r0 + R_LN1G, :D].set(lyr["ln1_g"])
        vec = vec.at[r0 + R_LN1B, :D].set(lyr["ln1_b"])
        vec = vec.at[r0 + R_QKVB, :3 * D].set(lyr["in_proj_b"])
        vec = vec.at[r0 + R_OPB, :D].set(lyr["out_proj_b"])
        vec = vec.at[r0 + R_LN2G, :D].set(lyr["ln2_g"])
        vec = vec.at[r0 + R_LN2B, :D].set(lyr["ln2_b"])
        vec = vec.at[r0 + R_MLPB1, :MLP_DIM].set(lyr["mlp_b1"])
        vec = vec.at[r0 + R_MLPB2, :D].set(lyr["mlp_b2"])
    vec = vec.at[R_LNFG, :D].set(params["ln_g"])
    vec = vec.at[R_LNFB, :D].set(params["ln_b"])
    vec = vec.at[R_HEADB, :NUM_CLASSES].set(params["head_b"])

    # cls-token + conv-bias folded into the position-embedding "base" rows.
    base = params["pos_embedding"].reshape(seq_len, D) + jnp.concatenate(
        [params["class_token"].reshape(1, D),
         jnp.broadcast_to(params["conv_b"], (seq_len - 1, D))], axis=0)
    vec = vec.at[R_BASE:R_BASE + seq_len, :D].set(base)

    head_w = jnp.zeros((D, CLS_PAD), jnp.float32).at[:, :NUM_CLASSES].set(params["head_w"])

    return {
        "vec": vec,
        "conv_w": params["conv_w"].astype(jnp.bfloat16),
        "qkv_w": stack("in_proj_w").astype(jnp.bfloat16),
        "op_w": stack("out_proj_w").reshape(L, NUM_HEADS, HEAD_DIM, D).astype(jnp.bfloat16),
        "mlp_w1": stack("mlp_w1").astype(jnp.bfloat16),
        "mlp_w2": stack("mlp_w2").astype(jnp.bfloat16),
        "head_w": head_w.astype(jnp.bfloat16),
    }


def _cost_estimate(n_total, b_tile, n_patches, patch_in):
    S = n_patches + 1
    BS = b_tile * S
    G = max(1, n_total // b_tile)
    D, M3 = HIDDEN, 3 * HIDDEN
    per_layer = (
        2 * BS * D * M3
        + NUM_HEADS * (2 * 2 * BS * BS * HEAD_DIM + 2 * BS * HEAD_DIM * D)
        + 2 * 2 * BS * D * MLP_DIM
    )
    flops = G * (2 * b_tile * n_patches * patch_in * D
                 + NUM_LAYERS * per_layer
                 + 2 * b_tile * D * CLS_PAD)
    transcendentals = G * NUM_LAYERS * (NUM_HEADS * BS * BS + BS * MLP_DIM)
    bytes_accessed = (
        n_total * n_patches * patch_in * 2                                # patches bf16
        + (patch_in * D + NUM_LAYERS * (D * M3 + D * D + 2 * D * MLP_DIM)
           + D * CLS_PAD) * 2                                             # bf16 weights
        + (R_BASE + S) * VEC_W * 4 + BS * BS * 4                          # slab + mask
        + n_total * CLS_PAD * 4                                           # logits out
    )
    return pl.CostEstimate(flops=flops, transcendentals=transcendentals,
                           bytes_accessed=bytes_accessed)


# ------------------------------ forward pass ---------------------------------
def _pick_b_tile(n, seq_len):
    """Samples per grid step: ~256 stacked rows/step fills the v6e/v7x MXU (128
    suffices on v5e) while keeping >= 2 grid steps so both v7x TCs get work."""
    if n <= 1:
        return max(n, 1)
    cap = n // 2
    target = max(1, -(-256 // seq_len))
    best = 1
    for d in range(1, cap + 1):
        if n % d == 0 and d <= target:
            best = d
    return best


def vit_forward(x_nchw, prep):
    N, C, H, W = x_nchw.shape
    nh, nw = H // PATCH, W // PATCH
    NP = nh * nw
    S = NP + 1
    PIN = C * PATCH * PATCH

    B_TILE = _pick_b_tile(N, S)
    G = N // B_TILE
    BS = B_TILE * S

    # im2col for the stride-16 patch conv.  No zero-row padding: the class-token
    # row is synthesised in-kernel from the packed base vectors.
    # TODO(synk): the im2col transpose/cast stays as one host-side XLA pass.
    patches = (
        x_nchw.reshape(N, C, nh, PATCH, nw, PATCH)
        .transpose(0, 2, 4, 1, 3, 5)
        .reshape(G, B_TILE * NP, PIN)
        .astype(jnp.bfloat16)
    )

    # Block-diagonal additive attention mask over the stacked rows (trace-time
    # numpy constant): rows [0,B_TILE) = cls tokens, rows [B_TILE,BS) = patches.
    sid = np.concatenate([np.arange(B_TILE), np.repeat(np.arange(B_TILE), NP)])
    attn_bias = jnp.asarray(
        np.where(sid[:, None] == sid[None, :], 0.0, NEG_INF).astype(np.float32))

    weight_args = [attn_bias, prep["vec"], prep["conv_w"], prep["qkv_w"],
                   prep["op_w"], prep["mlp_w1"], prep["mlp_w2"], prep["head_w"]]

    def const_spec(arr):
        zeros = (0,) * arr.ndim
        # Constant index_map: the pipeliner keeps these blocks resident across the
        # grid.  Total weight state <0.5 MiB, so default buffering is harmless on
        # v5e/v6e/v7x and no vmem_limit_bytes override is needed.
        return pl.BlockSpec(arr.shape, lambda b, _z=zeros: _z)

    in_specs = [pl.BlockSpec((1, B_TILE * NP, PIN), lambda b: (b, 0, 0))]
    in_specs += [const_spec(a) for a in weight_args]

    kern = functools.partial(_vit_fused_kernel, b_tile=B_TILE, n_patches=NP)

    out = pl.pallas_call(
        kern,
        out_shape=jax.ShapeDtypeStruct((G, B_TILE, CLS_PAD), jnp.float32),
        grid=(G,),                                            # B_TILE samples / step
        in_specs=in_specs,
        out_specs=pl.BlockSpec((1, B_TILE, CLS_PAD), lambda b: (b, 0, 0)),
        compiler_params=pltpu.CompilerParams(
            dimension_semantics=("parallel",),                # v7x: 2 TCs split grid
        ),
        cost_estimate=_cost_estimate(N, B_TILE, NP, PIN),
    )(patches, *weight_args)

    return out.reshape(N, CLS_PAD)[:, :NUM_CLASSES]           # (N, 3) logits


# ------------------------------ main ------------------------------------------
if __name__ == "__main__":
    key = jax.random.PRNGKey(0)
    k_img, k_par = jax.random.split(key)

    # small image consistent with patch-16 ViT; batch=8 exercises batch folding
    # (B_TILE=4 samples per step, grid=(2,) so both v7x TensorCores are used).
    IMG, BATCH = 32, 8
    x = jax.random.normal(k_img, (BATCH, 3, IMG, IMG), dtype=jnp.float32)

    params = init_params(k_par, image_size=IMG)
    seq_len = (IMG // PATCH) ** 2 + 1
    prep = prepare_params(params, seq_len)

    logits = jax.jit(vit_forward)(x, prep)
    jax.block_until_ready(logits)
    assert logits.shape == (BATCH, NUM_CLASSES)
    assert bool(jnp.all(jnp.isfinite(logits)))
    print("KERNEL_OK")
</pallas_src>

<mosaic_0001>
module attributes {stable_mosaic.version = 11 : i64} {
  func.func @_vit_fused_kernel(%arg0: i32, %arg1: memref<1x16x768xbf16, #tpu.memory_space<vmem>>, %arg2: memref<20x20xf32, #tpu.memory_space<vmem>>, %arg3: memref<24x192xf32, #tpu.memory_space<vmem>>, %arg4: memref<768x64xbf16, #tpu.memory_space<vmem>>, %arg5: memref<2x64x192xbf16, #tpu.memory_space<vmem>>, %arg6: memref<2x4x16x64xbf16, #tpu.memory_space<vmem>>, %arg7: memref<2x64x128xbf16, #tpu.memory_space<vmem>>, %arg8: memref<2x128x64xbf16, #tpu.memory_space<vmem>>, %arg9: memref<64x128xbf16, #tpu.memory_space<vmem>>, %arg10: memref<1x4x128xf32, #tpu.memory_space<vmem>>) attributes {dimension_semantics = [#tpu.dimension_semantics<parallel>], iteration_bounds = array<i64: 2>, scalar_prefetch = 0 : i64, scratch_operands = 0 : i64, tpu.core_type = #tpu.core_type<tc>, window_params = [{transform_indices = @transform_0, window_bounds = array<i64: 1, 16, 768>}, {pipeline_mode = #tpu.pipeline_mode<synchronous>, transform_indices = @transform_1, window_bounds = array<i64: 20, 20>}, {pipeline_mode = #tpu.pipeline_mode<synchronous>, transform_indices = @transform_2, window_bounds = array<i64: 24, 192>}, {pipeline_mode = #tpu.pipeline_mode<synchronous>, transform_indices = @transform_3, window_bounds = array<i64: 768, 64>}, {pipeline_mode = #tpu.pipeline_mode<synchronous>, transform_indices = @transform_4, window_bounds = array<i64: 2, 64, 192>}, {pipeline_mode = #tpu.pipeline_mode<synchronous>, transform_indices = @transform_5, window_bounds = array<i64: 2, 4, 16, 64>}, {pipeline_mode = #tpu.pipeline_mode<synchronous>, transform_indices = @transform_6, window_bounds = array<i64: 2, 64, 128>}, {pipeline_mode = #tpu.pipeline_mode<synchronous>, transform_indices = @transform_7, window_bounds = array<i64: 2, 128, 64>}, {pipeline_mode = #tpu.pipeline_mode<synchronous>, transform_indices = @transform_8, window_bounds = array<i64: 64, 128>}, {transform_indices = @transform_9, window_bounds = array<i64: 1, 4, 128>}]} {
    %c0 = arith.constant 0 : index
    %c0_0 = arith.constant 0 : index
    %0 = vector.load %arg2[%c0, %c0_0] : memref<20x20xf32, #tpu.memory_space<vmem>>, vector<20x20xf32>
    %c0_1 = arith.constant 0 : index
    %c0_2 = arith.constant 0 : index
    %c0_3 = arith.constant 0 : index
    %1 = vector.load %arg1[%c0_1, %c0_2, %c0_3] : memref<1x16x768xbf16, #tpu.memory_space<vmem>>, vector<1x16x768xbf16>
    %2 = vector.shape_cast %1 : vector<1x16x768xbf16> to vector<16x768xbf16>
    %c0_4 = arith.constant 0 : index
    %c0_5 = arith.constant 0 : index
    %3 = vector.load %arg4[%c0_4, %c0_5] : memref<768x64xbf16, #tpu.memory_space<vmem>>, vector<768x64xbf16>
    %cst = arith.constant dense<0.000000e+00> : vector<16x64xf32>
    %4 = tpu.matmul %2, %3, %cst {dimension_numbers = #tpu.dot_dimension_numbers<[1], [0], [0], [1], [0, 0, 1, 1], [], []>} : vector<16x768xbf16>, vector<768x64xbf16>, vector<16x64xf32> -> vector<16x64xf32>
    %c20 = arith.constant 20 : index
    %c0_6 = arith.constant 0 : index
    %5 = vector.load %arg3[%c20, %c0_6] : memref<24x192xf32, #tpu.memory_space<vmem>>, vector<4x64xf32>
    %6 = tpu.concatenate %5, %5, %5, %5 in 0 : vector<4x64xf32>, vector<4x64xf32>, vector<4x64xf32>, vector<4x64xf32> -> vector<16x64xf32>
    %c19 = arith.constant 19 : index
    %c0_7 = arith.constant 0 : index
    %7 = vector.load %arg3[%c19, %c0_7] : memref<24x192xf32, #tpu.memory_space<vmem>>, vector<1x64xf32>
    %8 = vector.shape_cast %7 : vector<1x64xf32> to vector<1x64xf32>
    %9 = vector.broadcast %8 : vector<1x64xf32> to vector<4x64xf32>
    %10 = arith.addf %4, %6 : vector<16x64xf32>
    %11 = tpu.concatenate %9, %10 in 0 : vector<4x64xf32>, vector<16x64xf32> -> vector<20x64xf32>
    %c0_8 = arith.constant 0 : index
    %c0_9 = arith.constant 0 : index
    %12 = vector.load %arg3[%c0_8, %c0_9] : memref<24x192xf32, #tpu.memory_space<vmem>>, vector<1x64xf32>
    %c1 = arith.constant 1 : index
    %c0_10 = arith.constant 0 : index
    %13 = vector.load %arg3[%c1, %c0_10] : memref<24x192xf32, #tpu.memory_space<vmem>>, vector<1x64xf32>
    %cst_11 = arith.constant dense<0.000000e+00> : vector<20xf32>
    %14 = vector.multi_reduction <add>, %11, %cst_11 [1] : vector<20x64xf32> to vector<20xf32>
    %15 = vector.shape_cast %14 : vector<20xf32> to vector<20x1xf32>
    %cst_12 = arith.constant 6.400000e+01 : f32
    %16 = vector.broadcast %cst_12 : f32 to vector<20x1xf32>
    %17 = arith.divf %15, %16 : vector<20x1xf32>
    %18 = vector.broadcast %17 : vector<20x1xf32> to vector<20x64xf32>
    %19 = arith.subf %11, %18 : vector<20x64xf32>
    %20 = arith.mulf %19, %19 : vector<20x64xf32>
    %cst_13 = arith.constant dense<0.000000e+00> : vector<20xf32>
    %21 = vector.multi_reduction <add>, %20, %cst_13 [1] : vector<20x64xf32> to vector<20xf32>
    %22 = vector.shape_cast %21 : vector<20xf32> to vector<20x1xf32>
    %cst_14 = arith.constant 6.400000e+01 : f32
    %23 = vector.broadcast %cst_14 : f32 to vector<20x1xf32>
    %24 = arith.divf %22, %23 : vector<20x1xf32>
    %25 = vector.broadcast %17 : vector<20x1xf32> to vector<20x64xf32>
    %26 = arith.subf %11, %25 : vector<20x64xf32>
    %cst_15 = arith.constant 9.99999997E-7 : f32
    %27 = vector.broadcast %cst_15 : f32 to vector<20x1xf32>
    %28 = arith.addf %24, %27 : vector<20x1xf32>
    %29 = math.rsqrt %28 : vector<20x1xf32>
    %30 = vector.broadcast %29 : vector<20x1xf32> to vector<20x64xf32>
    %31 = arith.mulf %26, %30 : vector<20x64xf32>
    %32 = vector.broadcast %12 : vector<1x64xf32> to vector<20x64xf32>
    %33 = arith.mulf %31, %32 : vector<20x64xf32>
    %34 = vector.broadcast %13 : vector<1x64xf32> to vector<20x64xf32>
    %35 = arith.addf %33, %34 : vector<20x64xf32>
    %36 = arith.truncf %35 : vector<20x64xf32> to vector<20x64xbf16>
    %c0_16 = arith.constant 0 : index
    %c0_17 = arith.constant 0 : index
    %c0_18 = arith.constant 0 : index
    %37 = vector.load %arg5[%c0_16, %c0_17, %c0_18] : memref<2x64x192xbf16, #tpu.memory_space<vmem>>, vector<1x64x192xbf16>
    %38 = vector.shape_cast %37 : vector<1x64x192xbf16> to vector<64x192xbf16>
    %cst_19 = arith.constant dense<0.000000e+00> : vector<20x192xf32>
    %39 = tpu.matmul %36, %38, %cst_19 {dimension_numbers = #tpu.dot_dimension_numbers<[1], [0], [0], [1], [0, 0, 1, 1], [], []>} : vector<20x64xbf16>, vector<64x192xbf16>, vector<20x192xf32> -> vector<20x192xf32>
    %c2 = arith.constant 2 : index
    %c0_20 = arith.constant 0 : index
    %40 = vector.load %arg3[%c2, %c0_20] : memref<24x192xf32, #tpu.memory_space<vmem>>, vector<1x192xf32>
    %41 = vector.broadcast %40 : vector<1x192xf32> to vector<20x192xf32>
    %42 = arith.addf %39, %41 : vector<20x192xf32>
    %c3 = arith.constant 3 : index
    %c0_21 = arith.constant 0 : index
    %43 = vector.load %arg3[%c3, %c0_21] : memref<24x192xf32, #tpu.memory_space<vmem>>, vector<1x64xf32>
    %44 = vector.extract_strided_slice %42 {offsets = [0, 0], sizes = [20, 16], strides = [1, 1]} : vector<20x192xf32> to vector<20x16xf32>
    %45 = arith.truncf %44 : vector<20x16xf32> to vector<20x16xbf16>
    %46 = vector.extract_strided_slice %42 {offsets = [0, 64], sizes = [20, 16], strides = [1, 1]} : vector<20x192xf32> to vector<20x16xf32>
    %47 = arith.truncf %46 : vector<20x16xf32> to vector<20x16xbf16>
    %48 = vector.extract_strided_slice %42 {offsets = [0, 128], sizes = [20, 16], strides = [1, 1]} : vector<20x192xf32> to vector<20x16xf32>
    %49 = arith.truncf %48 : vector<20x16xf32> to vector<20x16xbf16>
    %cst_22 = arith.constant dense<0.000000e+00> : vector<20x20xf32>
    %50 = tpu.matmul %45, %47, %cst_22 {dimension_numbers = #tpu.dot_dimension_numbers<[1], [1], [0], [0], [0, 0, 1, 0], [], []>} : vector<20x16xbf16>, vector<20x16xbf16>, vector<20x20xf32> -> vector<20x20xf32>
    %cst_23 = arith.constant 2.500000e-01 : f32
    %51 = vector.broadcast %cst_23 : f32 to vector<20x20xf32>
    %52 = arith.mulf %50, %51 : vector<20x20xf32>
    %53 = arith.addf %52, %0 : vector<20x20xf32>
    %cst_24 = arith.constant dense<0xFF800000> : vector<20xf32>
    %54 = vector.multi_reduction <maximumf>, %53, %cst_24 [1] : vector<20x20xf32> to vector<20xf32>
    %55 = vector.shape_cast %54 : vector<20xf32> to vector<20x1xf32>
    %56 = vector.broadcast %55 : vector<20x1xf32> to vector<20x20xf32>
    %57 = arith.subf %53, %56 : vector<20x20xf32>
    %58 = math.exp %57 : vector<20x20xf32>
    %cst_25 = arith.constant dense<0.000000e+00> : vector<20xf32>
    %59 = vector.multi_reduction <add>, %58, %cst_25 [1] : vector<20x20xf32> to vector<20xf32>
    %60 = vector.shape_cast %59 : vector<20xf32> to vector<20x1xf32>
    %61 = tpu.reciprocal %60 {approx = true} : vector<20x1xf32> -> vector<20x1xf32>
    %62 = vector.broadcast %61 : vector<20x1xf32> to vector<20x20xf32>
    %63 = arith.mulf %58, %62 : vector<20x20xf32>
    %64 = arith.truncf %63 : vector<20x20xf32> to vector<20x20xbf16>
    %cst_26 = arith.constant dense<0.000000e+00> : vector<20x16xf32>
    %65 = tpu.matmul %64, %49, %cst_26 {dimension_numbers = #tpu.dot_dimension_numbers<[1], [0], [0], [1], [0, 0, 1, 1], [], []>} : vector<20x20xbf16>, vector<20x16xbf16>, vector<20x16xf32> -> vector<20x16xf32>
    %66 = arith.truncf %65 : vector<20x16xf32> to vector<20x16xbf16>
    %c0_27 = arith.constant 0 : index
    %c0_28 = arith.constant 0 : index
    %c0_29 = arith.constant 0 : index
    %c0_30 = arith.constant 0 : index
    %67 = vector.load %arg6[%c0_27, %c0_28, %c0_29, %c0_30] : memref<2x4x16x64xbf16, #tpu.memory_space<vmem>>, vector<1x1x16x64xbf16>
    %68 = vector.shape_cast %67 : vector<1x1x16x64xbf16> to vector<16x64xbf16>
    %cst_31 = arith.constant dense<0.000000e+00> : vector<20x64xf32>
    %69 = tpu.matmul %66, %68, %cst_31 {dimension_numbers = #tpu.dot_dimension_numbers<[1], [0], [0], [1], [0, 0, 1, 1], [], []>} : vector<20x16xbf16>, vector<16x64xbf16>, vector<20x64xf32> -> vector<20x64xf32>
    %70 = vector.broadcast %43 : vector<1x64xf32> to vector<20x64xf32>
    %71 = arith.addf %70, %69 : vector<20x64xf32>
    %72 = vector.extract_strided_slice %42 {offsets = [0, 16], sizes = [20, 16], strides = [1, 1]} : vector<20x192xf32> to vector<20x16xf32>
    %73 = arith.truncf %72 : vector<20x16xf32> to vector<20x16xbf16>
    %74 = vector.extract_strided_slice %42 {offsets = [0, 80], sizes = [20, 16], strides = [1, 1]} : vector<20x192xf32> to vector<20x16xf32>
    %75 = arith.truncf %74 : vector<20x16xf32> to vector<20x16xbf16>
    %76 = vector.extract_strided_slice %42 {offsets = [0, 144], sizes = [20, 16], strides = [1, 1]} : vector<20x192xf32> to vector<20x16xf32>
    %77 = arith.truncf %76 : vector<20x16xf32> to vector<20x16xbf16>
    %cst_32 = arith.constant dense<0.000000e+00> : vector<20x20xf32>
    %78 = tpu.matmul %73, %75, %cst_32 {dimension_numbers = #tpu.dot_dimension_numbers<[1], [1], [0], [0], [0, 0, 1, 0], [], []>} : vector<20x16xbf16>, vector<20x16xbf16>, vector<20x20xf32> -> vector<20x20xf32>
    %cst_33 = arith.constant 2.500000e-01 : f32
    %79 = vector.broadcast %cst_33 : f32 to vector<20x20xf32>
    %80 = arith.mulf %78, %79 : vector<20x20xf32>
    %81 = arith.addf %80, %0 : vector<20x20xf32>
    %cst_34 = arith.constant dense<0xFF800000> : vector<20xf32>
    %82 = vector.multi_reduction <maximumf>, %81, %cst_34 [1] : vector<20x20xf32> to vector<20xf32>
    %83 = vector.shape_cast %82 : vector<20xf32> to vector<20x1xf32>
    %84 = vector.broadcast %83 : vector<20x1xf32> to vector<20x20xf32>
    %85 = arith.subf %81, %84 : vector<20x20xf32>
    %86 = math.exp %85 : vector<20x20xf32>
    %cst_35 = arith.constant dense<0.000000e+00> : vector<20xf32>
    %87 = vector.multi_reduction <add>, %86, %cst_35 [1] : vector<20x20xf32> to vector<20xf32>
    %88 = vector.shape_cast %87 : vector<20xf32> to vector<20x1xf32>
    %89 = tpu.reciprocal %88 {approx = true} : vector<20x1xf32> -> vector<20x1xf32>
    %90 = vector.broadcast %89 : vector<20x1xf32> to vector<20x20xf32>
    %91 = arith.mulf %86, %90 : vector<20x20xf32>
    %92 = arith.truncf %91 : vector<20x20xf32> to vector<20x20xbf16>
    %cst_36 = arith.constant dense<0.000000e+00> : vector<20x16xf32>
    %93 = tpu.matmul %92, %77, %cst_36 {dimension_numbers = #tpu.dot_dimension_numbers<[1], [0], [0], [1], [0, 0, 1, 1], [], []>} : vector<20x20xbf16>, vector<20x16xbf16>, vector<20x16xf32> -> vector<20x16xf32>
    %94 = arith.truncf %93 : vector<20x16xf32> to vector<20x16xbf16>
    %c0_37 = arith.constant 0 : index
    %c1_38 = arith.constant 1 : index
    %c0_39 = arith.constant 0 : index
    %c0_40 = arith.constant 0 : index
    %95 = vector.load %arg6[%c0_37, %c1_38, %c0_39, %c0_40] : memref<2x4x16x64xbf16, #tpu.memory_space<vmem>>, vector<1x1x16x64xbf16>
    %96 = vector.shape_cast %95 : vector<1x1x16x64xbf16> to vector<16x64xbf16>
    %cst_41 = arith.constant dense<0.000000e+00> : vector<20x64xf32>
    %97 = tpu.matmul %94, %96, %cst_41 {dimension_numbers = #tpu.dot_dimension_numbers<[1], [0], [0], [1], [0, 0, 1, 1], [], []>} : vector<20x16xbf16>, vector<16x64xbf16>, vector<20x64xf32> -> vector<20x64xf32>
    %98 = arith.addf %71, %97 : vector<20x64xf32>
    %99 = vector.extract_strided_slice %42 {offsets = [0, 32], sizes = [20, 16], strides = [1, 1]} : vector<20x192xf32> to vector<20x16xf32>
    %100 = arith.truncf %99 : vector<20x16xf32> to vector<20x16xbf16>
    %101 = vector.extract_strided_slice %42 {offsets = [0, 96], sizes = [20, 16], strides = [1, 1]} : vector<20x192xf32> to vector<20x16xf32>
    %102 = arith.truncf %101 : vector<20x16xf32> to vector<20x16xbf16>
    %103 = vector.extract_strided_slice %42 {offsets = [0, 160], sizes = [20, 16], strides = [1, 1]} : vector<20x192xf32> to vector<20x16xf32>
    %104 = arith.truncf %103 : vector<20x16xf32> to vector<20x16xbf16>
    %cst_42 = arith.constant dense<0.000000e+00> : vector<20x20xf32>
    %105 = tpu.matmul %100, %102, %cst_42 {dimension_numbers = #tpu.dot_dimension_numbers<[1], [1], [0], [0], [0, 0, 1, 0], [], []>} : vector<20x16xbf16>, vector<20x16xbf16>, vector<20x20xf32> -> vector<20x20xf32>
    %cst_43 = arith.constant 2.500000e-01 : f32
    %106 = vector.broadcast %cst_43 : f32 to vector<20x20xf32>
    %107 = arith.mulf %105, %106 : vector<20x20xf32>
    %108 = arith.addf %107, %0 : vector<20x20xf32>
    %cst_44 = arith.constant dense<0xFF800000> : vector<20xf32>
    %109 = vector.multi_reduction <maximumf>, %108, %cst_44 [1] : vector<20x20xf32> to vector<20xf32>
    %110 = vector.shape_cast %109 : vector<20xf32> to vector<20x1xf32>
    %111 = vector.broadcast %110 : vector<20x1xf32> to vector<20x20xf32>
    %112 = arith.subf %108, %111 : vector<20x20xf32>
    %113 = math.exp %112 : vector<20x20xf32>
    %cst_45 = arith.constant dense<0.000000e+00> : vector<20xf32>
    %114 = vector.multi_reduction <add>, %113, %cst_45 [1] : vector<20x20xf32> to vector<20xf32>
    %115 = vector.shape_cast %114 : vector<20xf32> to vector<20x1xf32>
    %116 = tpu.reciprocal %115 {approx = true} : vector<20x1xf32> -> vector<20x1xf32>
    %117 = vector.broadcast %116 : vector<20x1xf32> to vector<20x20xf32>
    %118 = arith.mulf %113, %117 : vector<20x20xf32>
    %119 = arith.truncf %118 : vector<20x20xf32> to vector<20x20xbf16>
    %cst_46 = arith.constant dense<0.000000e+00> : vector<20x16xf32>
    %120 = tpu.matmul %119, %104, %cst_46 {dimension_numbers = #tpu.dot_dimension_numbers<[1], [0], [0], [1], [0, 0, 1, 1], [], []>} : vector<20x20xbf16>, vector<20x16xbf16>, vector<20x16xf32> -> vector<20x16xf32>
    %121 = arith.truncf %120 : vector<20x16xf32> to vector<20x16xbf16>
    %c0_47 = arith.constant 0 : index
    %c2_48 = arith.constant 2 : index
    %c0_49 = arith.constant 0 : index
    %c0_50 = arith.constant 0 : index
    %122 = vector.load %arg6[%c0_47, %c2_48, %c0_49, %c0_50] : memref<2x4x16x64xbf16, #tpu.memory_space<vmem>>, vector<1x1x16x64xbf16>
    %123 = vector.shape_cast %122 : vector<1x1x16x64xbf16> to vector<16x64xbf16>
    %cst_51 = arith.constant dense<0.000000e+00> : vector<20x64xf32>
    %124 = tpu.matmul %121, %123, %cst_51 {dimension_numbers = #tpu.dot_dimension_numbers<[1], [0], [0], [1], [0, 0, 1, 1], [], []>} : vector<20x16xbf16>, vector<16x64xbf16>, vector<20x64xf32> -> vector<20x64xf32>
    %125 = arith.addf %98, %124 : vector<20x64xf32>
    %126 = vector.extract_strided_slice %42 {offsets = [0, 48], sizes = [20, 16], strides = [1, 1]} : vector<20x192xf32> to vector<20x16xf32>
    %127 = arith.truncf %126 : vector<20x16xf32> to vector<20x16xbf16>
    %128 = vector.extract_strided_slice %42 {offsets = [0, 112], sizes = [20, 16], strides = [1, 1]} : vector<20x192xf32> to vector<20x16xf32>
    %129 = arith.truncf %128 : vector<20x16xf32> to vector<20x16xbf16>
    %130 = vector.extract_strided_slice %42 {offsets = [0, 176], sizes = [20, 16], strides = [1, 1]} : vector<20x192xf32> to vector<20x16xf32>
    %131 = arith.truncf %130 : vector<20x16xf32> to vector<20x16xbf16>
    %cst_52 = arith.constant dense<0.000000e+00> : vector<20x20xf32>
    %132 = tpu.matmul %127, %129, %cst_52 {dimension_numbers = #tpu.dot_dimension_numbers<[1], [1], [0], [0], [0, 0, 1, 0], [], []>} : vector<20x16xbf16>, vector<20x16xbf16>, vector<20x20xf32> -> vector<20x20xf32>
    %cst_53 = arith.constant 2.500000e-01 : f32
    %133 = vector.broadcast %cst_53 : f32 to vector<20x20xf32>
    %134 = arith.mulf %132, %133 : vector<20x20xf32>
    %135 = arith.addf %134, %0 : vector<20x20xf32>
    %cst_54 = arith.constant dense<0xFF800000> : vector<20xf32>
    %136 = vector.multi_reduction <maximumf>, %135, %cst_54 [1] : vector<20x20xf32> to vector<20xf32>
    %137 = vector.shape_cast %136 : vector<20xf32> to vector<20x1xf32>
    %138 = vector.broadcast %137 : vector<20x1xf32> to vector<20x20xf32>
    %139 = arith.subf %135, %138 : vector<20x20xf32>
    %140 = math.exp %139 : vector<20x20xf32>
    %cst_55 = arith.constant dense<0.000000e+00> : vector<20xf32>
    %141 = vector.multi_reduction <add>, %140, %cst_55 [1] : vector<20x20xf32> to vector<20xf32>
    %142 = vector.shape_cast %141 : vector<20xf32> to vector<20x1xf32>
    %143 = tpu.reciprocal %142 {approx = true} : vector<20x1xf32> -> vector<20x1xf32>
    %144 = vector.broadcast %143 : vector<20x1xf32> to vector<20x20xf32>
    %145 = arith.mulf %140, %144 : vector<20x20xf32>
    %146 = arith.truncf %145 : vector<20x20xf32> to vector<20x20xbf16>
    %cst_56 = arith.constant dense<0.000000e+00> : vector<20x16xf32>
    %147 = tpu.matmul %146, %131, %cst_56 {dimension_numbers = #tpu.dot_dimension_numbers<[1], [0], [0], [1], [0, 0, 1, 1], [], []>} : vector<20x20xbf16>, vector<20x16xbf16>, vector<20x16xf32> -> vector<20x16xf32>
    %148 = arith.truncf %147 : vector<20x16xf32> to vector<20x16xbf16>
    %c0_57 = arith.constant 0 : index
    %c3_58 = arith.constant 3 : index
    %c0_59 = arith.constant 0 : index
    %c0_60 = arith.constant 0 : index
    %149 = vector.load %arg6[%c0_57, %c3_58, %c0_59, %c0_60] : memref<2x4x16x64xbf16, #tpu.memory_space<vmem>>, vector<1x1x16x64xbf16>
    %150 = vector.shape_cast %149 : vector<1x1x16x64xbf16> to vector<16x64xbf16>
    %cst_61 = arith.constant dense<0.000000e+00> : vector<20x64xf32>
    %151 = tpu.matmul %148, %150, %cst_61 {dimension_numbers = #tpu.dot_dimension_numbers<[1], [0], [0], [1], [0, 0, 1, 1], [], []>} : vector<20x16xbf16>, vector<16x64xbf16>, vector<20x64xf32> -> vector<20x64xf32>
    %152 = arith.addf %125, %151 : vector<20x64xf32>
    %153 = arith.addf %11, %152 : vector<20x64xf32>
    %c4 = arith.constant 4 : index
    %c0_62 = arith.constant 0 : index
    %154 = vector.load %arg3[%c4, %c0_62] : memref<24x192xf32, #tpu.memory_space<vmem>>, vector<1x64xf32>
    %c5 = arith.constant 5 : index
    %c0_63 = arith.constant 0 : index
    %155 = vector.load %arg3[%c5, %c0_63] : memref<24x192xf32, #tpu.memory_space<vmem>>, vector<1x64xf32>
    %cst_64 = arith.constant dense<0.000000e+00> : vector<20xf32>
    %156 = vector.multi_reduction <add>, %153, %cst_64 [1] : vector<20x64xf32> to vector<20xf32>
    %157 = vector.shape_cast %156 : vector<20xf32> to vector<20x1xf32>
    %cst_65 = arith.constant 6.400000e+01 : f32
    %158 = vector.broadcast %cst_65 : f32 to vector<20x1xf32>
    %159 = arith.divf %157, %158 : vector<20x1xf32>
    %160 = vector.broadcast %159 : vector<20x1xf32> to vector<20x64xf32>
    %161 = arith.subf %153, %160 : vector<20x64xf32>
    %162 = arith.mulf %161, %161 : vector<20x64xf32>
    %cst_66 = arith.constant dense<0.000000e+00> : vector<20xf32>
    %163 = vector.multi_reduction <add>, %162, %cst_66 [1] : vector<20x64xf32> to vector<20xf32>
    %164 = vector.shape_cast %163 : vector<20xf32> to vector<20x1xf32>
    %cst_67 = arith.constant 6.400000e+01 : f32
    %165 = vector.broadcast %cst_67 : f32 to vector<20x1xf32>
    %166 = arith.divf %164, %165 : vector<20x1xf32>
    %167 = vector.broadcast %159 : vector<20x1xf32> to vector<20x64xf32>
    %168 = arith.subf %153, %167 : vector<20x64xf32>
    %cst_68 = arith.constant 9.99999997E-7 : f32
    %169 = vector.broadcast %cst_68 : f32 to vector<20x1xf32>
    %170 = arith.addf %166, %169 : vector<20x1xf32>
    %171 = math.rsqrt %170 : vector<20x1xf32>
    %172 = vector.broadcast %171 : vector<20x1xf32> to vector<20x64xf32>
    %173 = arith.mulf %168, %172 : vector<20x64xf32>
    %174 = vector.broadcast %154 : vector<1x64xf32> to vector<20x64xf32>
    %175 = arith.mulf %173, %174 : vector<20x64xf32>
    %176 = vector.broadcast %155 : vector<1x64xf32> to vector<20x64xf32>
    %177 = arith.addf %175, %176 : vector<20x64xf32>
    %178 = arith.truncf %177 : vector<20x64xf32> to vector<20x64xbf16>
    %c0_69 = arith.constant 0 : index
    %c0_70 = arith.constant 0 : index
    %c0_71 = arith.constant 0 : index
    %179 = vector.load %arg7[%c0_69, %c0_70, %c0_71] : memref<2x64x128xbf16, #tpu.memory_space<vmem>>, vector<1x64x128xbf16>
    %180 = vector.shape_cast %179 : vector<1x64x128xbf16> to vector<64x128xbf16>
    %cst_72 = arith.constant dense<0.000000e+00> : vector<20x128xf32>
    %181 = tpu.matmul %178, %180, %cst_72 {dimension_numbers = #tpu.dot_dimension_numbers<[1], [0], [0], [1], [0, 0, 1, 1], [], []>} : vector<20x64xbf16>, vector<64x128xbf16>, vector<20x128xf32> -> vector<20x128xf32>
    %c6 = arith.constant 6 : index
    %c0_73 = arith.constant 0 : index
    %182 = vector.load %arg3[%c6, %c0_73] : memref<24x192xf32, #tpu.memory_space<vmem>>, vector<1x128xf32>
    %183 = vector.broadcast %182 : vector<1x128xf32> to vector<20x128xf32>
    %184 = arith.addf %181, %183 : vector<20x128xf32>
    %cst_74 = arith.constant 5.000000e-01 : f32
    %185 = vector.broadcast %cst_74 : f32 to vector<20x128xf32>
    %186 = arith.mulf %185, %184 : vector<20x128xf32>
    %cst_75 = arith.constant 0.707106769 : f32
    %187 = vector.broadcast %cst_75 : f32 to vector<20x128xf32>
    %188 = arith.mulf %184, %187 : vector<20x128xf32>
    %189 = math.erf %188 : vector<20x128xf32>
    %cst_76 = arith.constant 1.000000e+00 : f32
    %190 = vector.broadcast %cst_76 : f32 to vector<20x128xf32>
    %191 = arith.addf %190, %189 : vector<20x128xf32>
    %192 = arith.mulf %186, %191 : vector<20x128xf32>
    %193 = arith.truncf %192 : vector<20x128xf32> to vector<20x128xbf16>
    %c0_77 = arith.constant 0 : index
    %c0_78 = arith.constant 0 : index
    %c0_79 = arith.constant 0 : index
    %194 = vector.load %arg8[%c0_77, %c0_78, %c0_79] : memref<2x128x64xbf16, #tpu.memory_space<vmem>>, vector<1x128x64xbf16>
    %195 = vector.shape_cast %194 : vector<1x128x64xbf16> to vector<128x64xbf16>
    %cst_80 = arith.constant dense<0.000000e+00> : vector<20x64xf32>
    %196 = tpu.matmul %193, %195, %cst_80 {dimension_numbers = #tpu.dot_dimension_numbers<[1], [0], [0], [1], [0, 0, 1, 1], [], []>} : vector<20x128xbf16>, vector<128x64xbf16>, vector<20x64xf32> -> vector<20x64xf32>
    %c7 = arith.constant 7 : index
    %c0_81 = arith.constant 0 : index
    %197 = vector.load %arg3[%c7, %c0_81] : memref<24x192xf32, #tpu.memory_space<vmem>>, vector<1x64xf32>
    %198 = vector.broadcast %197 : vector<1x64xf32> to vector<20x64xf32>
    %199 = arith.addf %196, %198 : vector<20x64xf32>
    %200 = arith.addf %153, %199 : vector<20x64xf32>
    %c8 = arith.constant 8 : index
    %c0_82 = arith.constant 0 : index
    %201 = vector.load %arg3[%c8, %c0_82] : memref<24x192xf32, #tpu.memory_space<vmem>>, vector<1x64xf32>
    %c9 = arith.constant 9 : index
    %c0_83 = arith.constant 0 : index
    %202 = vector.load %arg3[%c9, %c0_83] : memref<24x192xf32, #tpu.memory_space<vmem>>, vector<1x64xf32>
    %cst_84 = arith.constant dense<0.000000e+00> : vector<20xf32>
    %203 = vector.multi_reduction <add>, %200, %cst_84 [1] : vector<20x64xf32> to vector<20xf32>
    %204 = vector.shape_cast %203 : vector<20xf32> to vector<20x1xf32>
    %cst_85 = arith.constant 6.400000e+01 : f32
    %205 = vector.broadcast %cst_85 : f32 to vector<20x1xf32>
    %206 = arith.divf %204, %205 : vector<20x1xf32>
    %207 = vector.broadcast %206 : vector<20x1xf32> to vector<20x64xf32>
    %208 = arith.subf %200, %207 : vector<20x64xf32>
    %209 = arith.mulf %208, %208 : vector<20x64xf32>
    %cst_86 = arith.constant dense<0.000000e+00> : vector<20xf32>
    %210 = vector.multi_reduction <add>, %209, %cst_86 [1] : vector<20x64xf32> to vector<20xf32>
    %211 = vector.shape_cast %210 : vector<20xf32> to vector<20x1xf32>
    %cst_87 = arith.constant 6.400000e+01 : f32
    %212 = vector.broadcast %cst_87 : f32 to vector<20x1xf32>
    %213 = arith.divf %211, %212 : vector<20x1xf32>
    %214 = vector.broadcast %206 : vector<20x1xf32> to vector<20x64xf32>
    %215 = arith.subf %200, %214 : vector<20x64xf32>
    %cst_88 = arith.constant 9.99999997E-7 : f32
    %216 = vector.broadcast %cst_88 : f32 to vector<20x1xf32>
    %217 = arith.addf %213, %216 : vector<20x1xf32>
    %218 = math.rsqrt %217 : vector<20x1xf32>
    %219 = vector.broadcast %218 : vector<20x1xf32> to vector<20x64xf32>
    %220 = arith.mulf %215, %219 : vector<20x64xf32>
    %221 = vector.broadcast %201 : vector<1x64xf32> to vector<20x64xf32>
    %222 = arith.mulf %220, %221 : vector<20x64xf32>
    %223 = vector.broadcast %202 : vector<1x64xf32> to vector<20x64xf32>
    %224 = arith.addf %222, %223 : vector<20x64xf32>
    %225 = arith.truncf %224 : vector<20x64xf32> to vector<20x64xbf16>
    %c1_89 = arith.constant 1 : index
    %c0_90 = arith.constant 0 : index
    %c0_91 = arith.constant 0 : index
    %226 = vector.load %arg5[%c1_89, %c0_90, %c0_91] : memref<2x64x192xbf16, #tpu.memory_space<vmem>>, vector<1x64x192xbf16>
    %227 = vector.shape_cast %226 : vector<1x64x192xbf16> to vector<64x192xbf16>
    %cst_92 = arith.constant dense<0.000000e+00> : vector<20x192xf32>
    %228 = tpu.matmul %225, %227, %cst_92 {dimension_numbers = #tpu.dot_dimension_numbers<[1], [0], [0], [1], [0, 0, 1, 1], [], []>} : vector<20x64xbf16>, vector<64x192xbf16>, vector<20x192xf32> -> vector<20x192xf32>
    %c10 = arith.constant 10 : index
    %c0_93 = arith.constant 0 : index
    %229 = vector.load %arg3[%c10, %c0_93] : memref<24x192xf32, #tpu.memory_space<vmem>>, vector<1x192xf32>
    %230 = vector.broadcast %229 : vector<1x192xf32> to vector<20x192xf32>
    %231 = arith.addf %228, %230 : vector<20x192xf32>
    %c11 = arith.constant 11 : index
    %c0_94 = arith.constant 0 : index
    %232 = vector.load %arg3[%c11, %c0_94] : memref<24x192xf32, #tpu.memory_space<vmem>>, vector<1x64xf32>
    %233 = vector.extract_strided_slice %231 {offsets = [0, 0], sizes = [20, 16], strides = [1, 1]} : vector<20x192xf32> to vector<20x16xf32>
    %234 = arith.truncf %233 : vector<20x16xf32> to vector<20x16xbf16>
    %235 = vector.extract_strided_slice %231 {offsets = [0, 64], sizes = [20, 16], strides = [1, 1]} : vector<20x192xf32> to vector<20x16xf32>
    %236 = arith.truncf %235 : vector<20x16xf32> to vector<20x16xbf16>
    %237 = vector.extract_strided_slice %231 {offsets = [0, 128], sizes = [20, 16], strides = [1, 1]} : vector<20x192xf32> to vector<20x16xf32>
    %238 = arith.truncf %237 : vector<20x16xf32> to vector<20x16xbf16>
    %cst_95 = arith.constant dense<0.000000e+00> : vector<20x20xf32>
    %239 = tpu.matmul %234, %236, %cst_95 {dimension_numbers = #tpu.dot_dimension_numbers<[1], [1], [0], [0], [0, 0, 1, 0], [], []>} : vector<20x16xbf16>, vector<20x16xbf16>, vector<20x20xf32> -> vector<20x20xf32>
    %cst_96 = arith.constant 2.500000e-01 : f32
    %240 = vector.broadcast %cst_96 : f32 to vector<20x20xf32>
    %241 = arith.mulf %239, %240 : vector<20x20xf32>
    %242 = arith.addf %241, %0 : vector<20x20xf32>
    %cst_97 = arith.constant dense<0xFF800000> : vector<20xf32>
    %243 = vector.multi_reduction <maximumf>, %242, %cst_97 [1] : vector<20x20xf32> to vector<20xf32>
    %244 = vector.shape_cast %243 : vector<20xf32> to vector<20x1xf32>
    %245 = vector.broadcast %244 : vector<20x1xf32> to vector<20x20xf32>
    %246 = arith.subf %242, %245 : vector<20x20xf32>
    %247 = math.exp %246 : vector<20x20xf32>
    %cst_98 = arith.constant dense<0.000000e+00> : vector<20xf32>
    %248 = vector.multi_reduction <add>, %247, %cst_98 [1] : vector<20x20xf32> to vector<20xf32>
    %249 = vector.shape_cast %248 : vector<20xf32> to vector<20x1xf32>
    %250 = tpu.reciprocal %249 {approx = true} : vector<20x1xf32> -> vector<20x1xf32>
    %251 = vector.broadcast %250 : vector<20x1xf32> to vector<20x20xf32>
    %252 = arith.mulf %247, %251 : vector<20x20xf32>
    %253 = arith.truncf %252 : vector<20x20xf32> to vector<20x20xbf16>
    %cst_99 = arith.constant dense<0.000000e+00> : vector<20x16xf32>
    %254 = tpu.matmul %253, %238, %cst_99 {dimension_numbers = #tpu.dot_dimension_numbers<[1], [0], [0], [1], [0, 0, 1, 1], [], []>} : vector<20x20xbf16>, vector<20x16xbf16>, vector<20x16xf32> -> vector<20x16xf32>
    %255 = arith.truncf %254 : vector<20x16xf32> to vector<20x16xbf16>
    %c1_100 = arith.constant 1 : index
    %c0_101 = arith.constant 0 : index
    %c0_102 = arith.constant 0 : index
    %c0_103 = arith.constant 0 : index
    %256 = vector.load %arg6[%c1_100, %c0_101, %c0_102, %c0_103] : memref<2x4x16x64xbf16, #tpu.memory_space<vmem>>, vector<1x1x16x64xbf16>
    %257 = vector.shape_cast %256 : vector<1x1x16x64xbf16> to vector<16x64xbf16>
    %cst_104 = arith.constant dense<0.000000e+00> : vector<20x64xf32>
    %258 = tpu.matmul %255, %257, %cst_104 {dimension_numbers = #tpu.dot_dimension_numbers<[1], [0], [0], [1], [0, 0, 1, 1], [], []>} : vector<20x16xbf16>, vector<16x64xbf16>, vector<20x64xf32> -> vector<20x64xf32>
    %259 = vector.broadcast %232 : vector<1x64xf32> to vector<20x64xf32>
    %260 = arith.addf %259, %258 : vector<20x64xf32>
    %261 = vector.extract_strided_slice %231 {offsets = [0, 16], sizes = [20, 16], strides = [1, 1]} : vector<20x192xf32> to vector<20x16xf32>
    %262 = arith.truncf %261 : vector<20x16xf32> to vector<20x16xbf16>
    %263 = vector.extract_strided_slice %231 {offsets = [0, 80], sizes = [20, 16], strides = [1, 1]} : vector<20x192xf32> to vector<20x16xf32>
    %264 = arith.truncf %263 : vector<20x16xf32> to vector<20x16xbf16>
    %265 = vector.extract_strided_slice %231 {offsets = [0, 144], sizes = [20, 16], strides = [1, 1]} : vector<20x192xf32> to vector<20x16xf32>
    %266 = arith.truncf %265 : vector<20x16xf32> to vector<20x16xbf16>
    %cst_105 = arith.constant dense<0.000000e+00> : vector<20x20xf32>
    %267 = tpu.matmul %262, %264, %cst_105 {dimension_numbers = #tpu.dot_dimension_numbers<[1], [1], [0], [0], [0, 0, 1, 0], [], []>} : vector<20x16xbf16>, vector<20x16xbf16>, vector<20x20xf32> -> vector<20x20xf32>
    %cst_106 = arith.constant 2.500000e-01 : f32
    %268 = vector.broadcast %cst_106 : f32 to vector<20x20xf32>
    %269 = arith.mulf %267, %268 : vector<20x20xf32>
    %270 = arith.addf %269, %0 : vector<20x20xf32>
    %cst_107 = arith.constant dense<0xFF800000> : vector<20xf32>
    %271 = vector.multi_reduction <maximumf>, %270, %cst_107 [1] : vector<20x20xf32> to vector<20xf32>
    %272 = vector.shape_cast %271 : vector<20xf32> to vector<20x1xf32>
    %273 = vector.broadcast %272 : vector<20x1xf32> to vector<20x20xf32>
    %274 = arith.subf %270, %273 : vector<20x20xf32>
    %275 = math.exp %274 : vector<20x20xf32>
    %cst_108 = arith.constant dense<0.000000e+00> : vector<20xf32>
    %276 = vector.multi_reduction <add>, %275, %cst_108 [1] : vector<20x20xf32> to vector<20xf32>
    %277 = vector.shape_cast %276 : vector<20xf32> to vector<20x1xf32>
    %278 = tpu.reciprocal %277 {approx = true} : vector<20x1xf32> -> vector<20x1xf32>
    %279 = vector.broadcast %278 : vector<20x1xf32> to vector<20x20xf32>
    %280 = arith.mulf %275, %279 : vector<20x20xf32>
    %281 = arith.truncf %280 : vector<20x20xf32> to vector<20x20xbf16>
    %cst_109 = arith.constant dense<0.000000e+00> : vector<20x16xf32>
    %282 = tpu.matmul %281, %266, %cst_109 {dimension_numbers = #tpu.dot_dimension_numbers<[1], [0], [0], [1], [0, 0, 1, 1], [], []>} : vector<20x20xbf16>, vector<20x16xbf16>, vector<20x16xf32> -> vector<20x16xf32>
    %283 = arith.truncf %282 : vector<20x16xf32> to vector<20x16xbf16>
    %c1_110 = arith.constant 1 : index
    %c1_111 = arith.constant 1 : index
    %c0_112 = arith.constant 0 : index
    %c0_113 = arith.constant 0 : index
    %284 = vector.load %arg6[%c1_110, %c1_111, %c0_112, %c0_113] : memref<2x4x16x64xbf16, #tpu.memory_space<vmem>>, vector<1x1x16x64xbf16>
    %285 = vector.shape_cast %284 : vector<1x1x16x64xbf16> to vector<16x64xbf16>
    %cst_114 = arith.constant dense<0.000000e+00> : vector<20x64xf32>
    %286 = tpu.matmul %283, %285, %cst_114 {dimension_numbers = #tpu.dot_dimension_numbers<[1], [0], [0], [1], [0, 0, 1, 1], [], []>} : vector<20x16xbf16>, vector<16x64xbf16>, vector<20x64xf32> -> vector<20x64xf32>
    %287 = arith.addf %260, %286 : vector<20x64xf32>
    %288 = vector.extract_strided_slice %231 {offsets = [0, 32], sizes = [20, 16], strides = [1, 1]} : vector<20x192xf32> to vector<20x16xf32>
    %289 = arith.truncf %288 : vector<20x16xf32> to vector<20x16xbf16>
    %290 = vector.extract_strided_slice %231 {offsets = [0, 96], sizes = [20, 16], strides = [1, 1]} : vector<20x192xf32> to vector<20x16xf32>
    %291 = arith.truncf %290 : vector<20x16xf32> to vector<20x16xbf16>
    %292 = vector.extract_strided_slice %231 {offsets = [0, 160], sizes = [20, 16], strides = [1, 1]} : vector<20x192xf32> to vector<20x16xf32>
    %293 = arith.truncf %292 : vector<20x16xf32> to vector<20x16xbf16>
    %cst_115 = arith.constant dense<0.000000e+00> : vector<20x20xf32>
    %294 = tpu.matmul %289, %291, %cst_115 {dimension_numbers = #tpu.dot_dimension_numbers<[1], [1], [0], [0], [0, 0, 1, 0], [], []>} : vector<20x16xbf16>, vector<20x16xbf16>, vector<20x20xf32> -> vector<20x20xf32>
    %cst_116 = arith.constant 2.500000e-01 : f32
    %295 = vector.broadcast %cst_116 : f32 to vector<20x20xf32>
    %296 = arith.mulf %294, %295 : vector<20x20xf32>
    %297 = arith.addf %296, %0 : vector<20x20xf32>
    %cst_117 = arith.constant dense<0xFF800000> : vector<20xf32>
    %298 = vector.multi_reduction <maximumf>, %297, %cst_117 [1] : vector<20x20xf32> to vector<20xf32>
    %299 = vector.shape_cast %298 : vector<20xf32> to vector<20x1xf32>
    %300 = vector.broadcast %299 : vector<20x1xf32> to vector<20x20xf32>
    %301 = arith.subf %297, %300 : vector<20x20xf32>
    %302 = math.exp %301 : vector<20x20xf32>
    %cst_118 = arith.constant dense<0.000000e+00> : vector<20xf32>
    %303 = vector.multi_reduction <add>, %302, %cst_118 [1] : vector<20x20xf32> to vector<20xf32>
    %304 = vector.shape_cast %303 : vector<20xf32> to vector<20x1xf32>
    %305 = tpu.reciprocal %304 {approx = true} : vector<20x1xf32> -> vector<20x1xf32>
    %306 = vector.broadcast %305 : vector<20x1xf32> to vector<20x20xf32>
    %307 = arith.mulf %302, %306 : vector<20x20xf32>
    %308 = arith.truncf %307 : vector<20x20xf32> to vector<20x20xbf16>
    %cst_119 = arith.constant dense<0.000000e+00> : vector<20x16xf32>
    %309 = tpu.matmul %308, %293, %cst_119 {dimension_numbers = #tpu.dot_dimension_numbers<[1], [0], [0], [1], [0, 0, 1, 1], [], []>} : vector<20x20xbf16>, vector<20x16xbf16>, vector<20x16xf32> -> vector<20x16xf32>
    %310 = arith.truncf %309 : vector<20x16xf32> to vector<20x16xbf16>
    %c1_120 = arith.constant 1 : index
    %c2_121 = arith.constant 2 : index
    %c0_122 = arith.constant 0 : index
    %c0_123 = arith.constant 0 : index
    %311 = vector.load %arg6[%c1_120, %c2_121, %c0_122, %c0_123] : memref<2x4x16x64xbf16, #tpu.memory_space<vmem>>, vector<1x1x16x64xbf16>
    %312 = vector.shape_cast %311 : vector<1x1x16x64xbf16> to vector<16x64xbf16>
    %cst_124 = arith.constant dense<0.000000e+00> : vector<20x64xf32>
    %313 = tpu.matmul %310, %312, %cst_124 {dimension_numbers = #tpu.dot_dimension_numbers<[1], [0], [0], [1], [0, 0, 1, 1], [], []>} : vector<20x16xbf16>, vector<16x64xbf16>, vector<20x64xf32> -> vector<20x64xf32>
    %314 = arith.addf %287, %313 : vector<20x64xf32>
    %315 = vector.extract_strided_slice %231 {offsets = [0, 48], sizes = [20, 16], strides = [1, 1]} : vector<20x192xf32> to vector<20x16xf32>
    %316 = arith.truncf %315 : vector<20x16xf32> to vector<20x16xbf16>
    %317 = vector.extract_strided_slice %231 {offsets = [0, 112], sizes = [20, 16], strides = [1, 1]} : vector<20x192xf32> to vector<20x16xf32>
    %318 = arith.truncf %317 : vector<20x16xf32> to vector<20x16xbf16>
    %319 = vector.extract_strided_slice %231 {offsets = [0, 176], sizes = [20, 16], strides = [1, 1]} : vector<20x192xf32> to vector<20x16xf32>
    %320 = arith.truncf %319 : vector<20x16xf32> to vector<20x16xbf16>
    %cst_125 = arith.constant dense<0.000000e+00> : vector<20x20xf32>
    %321 = tpu.matmul %316, %318, %cst_125 {dimension_numbers = #tpu.dot_dimension_numbers<[1], [1], [0], [0], [0, 0, 1, 0], [], []>} : vector<20x16xbf16>, vector<20x16xbf16>, vector<20x20xf32> -> vector<20x20xf32>
    %cst_126 = arith.constant 2.500000e-01 : f32
    %322 = vector.broadcast %cst_126 : f32 to vector<20x20xf32>
    %323 = arith.mulf %321, %322 : vector<20x20xf32>
    %324 = arith.addf %323, %0 : vector<20x20xf32>
    %cst_127 = arith.constant dense<0xFF800000> : vector<20xf32>
    %325 = vector.multi_reduction <maximumf>, %324, %cst_127 [1] : vector<20x20xf32> to vector<20xf32>
    %326 = vector.shape_cast %325 : vector<20xf32> to vector<20x1xf32>
    %327 = vector.broadcast %326 : vector<20x1xf32> to vector<20x20xf32>
    %328 = arith.subf %324, %327 : vector<20x20xf32>
    %329 = math.exp %328 : vector<20x20xf32>
    %cst_128 = arith.constant dense<0.000000e+00> : vector<20xf32>
    %330 = vector.multi_reduction <add>, %329, %cst_128 [1] : vector<20x20xf32> to vector<20xf32>
    %331 = vector.shape_cast %330 : vector<20xf32> to vector<20x1xf32>
    %332 = tpu.reciprocal %331 {approx = true} : vector<20x1xf32> -> vector<20x1xf32>
    %333 = vector.broadcast %332 : vector<20x1xf32> to vector<20x20xf32>
    %334 = arith.mulf %329, %333 : vector<20x20xf32>
    %335 = arith.truncf %334 : vector<20x20xf32> to vector<20x20xbf16>
    %cst_129 = arith.constant dense<0.000000e+00> : vector<20x16xf32>
    %336 = tpu.matmul %335, %320, %cst_129 {dimension_numbers = #tpu.dot_dimension_numbers<[1], [0], [0], [1], [0, 0, 1, 1], [], []>} : vector<20x20xbf16>, vector<20x16xbf16>, vector<20x16xf32> -> vector<20x16xf32>
    %337 = arith.truncf %336 : vector<20x16xf32> to vector<20x16xbf16>
    %c1_130 = arith.constant 1 : index
    %c3_131 = arith.constant 3 : index
    %c0_132 = arith.constant 0 : index
    %c0_133 = arith.constant 0 : index
    %338 = vector.load %arg6[%c1_130, %c3_131, %c0_132, %c0_133] : memref<2x4x16x64xbf16, #tpu.memory_space<vmem>>, vector<1x1x16x64xbf16>
    %339 = vector.shape_cast %338 : vector<1x1x16x64xbf16> to vector<16x64xbf16>
    %cst_134 = arith.constant dense<0.000000e+00> : vector<20x64xf32>
    %340 = tpu.matmul %337, %339, %cst_134 {dimension_numbers = #tpu.dot_dimension_numbers<[1], [0], [0], [1], [0, 0, 1, 1], [], []>} : vector<20x16xbf16>, vector<16x64xbf16>, vector<20x64xf32> -> vector<20x64xf32>
    %341 = arith.addf %314, %340 : vector<20x64xf32>
    %342 = arith.addf %200, %341 : vector<20x64xf32>
    %c12 = arith.constant 12 : index
    %c0_135 = arith.constant 0 : index
    %343 = vector.load %arg3[%c12, %c0_135] : memref<24x192xf32, #tpu.memory_space<vmem>>, vector<1x64xf32>
    %c13 = arith.constant 13 : index
    %c0_136 = arith.constant 0 : index
    %344 = vector.load %arg3[%c13, %c0_136] : memref<24x192xf32, #tpu.memory_space<vmem>>, vector<1x64xf32>
    %cst_137 = arith.constant dense<0.000000e+00> : vector<20xf32>
    %345 = vector.multi_reduction <add>, %342, %cst_137 [1] : vector<20x64xf32> to vector<20xf32>
    %346 = vector.shape_cast %345 : vector<20xf32> to vector<20x1xf32>
    %cst_138 = arith.constant 6.400000e+01 : f32
    %347 = vector.broadcast %cst_138 : f32 to vector<20x1xf32>
    %348 = arith.divf %346, %347 : vector<20x1xf32>
    %349 = vector.broadcast %348 : vector<20x1xf32> to vector<20x64xf32>
    %350 = arith.subf %342, %349 : vector<20x64xf32>
    %351 = arith.mulf %350, %350 : vector<20x64xf32>
    %cst_139 = arith.constant dense<0.000000e+00> : vector<20xf32>
    %352 = vector.multi_reduction <add>, %351, %cst_139 [1] : vector<20x64xf32> to vector<20xf32>
    %353 = vector.shape_cast %352 : vector<20xf32> to vector<20x1xf32>
    %cst_140 = arith.constant 6.400000e+01 : f32
    %354 = vector.broadcast %cst_140 : f32 to vector<20x1xf32>
    %355 = arith.divf %353, %354 : vector<20x1xf32>
    %356 = vector.broadcast %348 : vector<20x1xf32> to vector<20x64xf32>
    %357 = arith.subf %342, %356 : vector<20x64xf32>
    %cst_141 = arith.constant 9.99999997E-7 : f32
    %358 = vector.broadcast %cst_141 : f32 to vector<20x1xf32>
    %359 = arith.addf %355, %358 : vector<20x1xf32>
    %360 = math.rsqrt %359 : vector<20x1xf32>
    %361 = vector.broadcast %360 : vector<20x1xf32> to vector<20x64xf32>
    %362 = arith.mulf %357, %361 : vector<20x64xf32>
    %363 = vector.broadcast %343 : vector<1x64xf32> to vector<20x64xf32>
    %364 = arith.mulf %362, %363 : vector<20x64xf32>
    %365 = vector.broadcast %344 : vector<1x64xf32> to vector<20x64xf32>
    %366 = arith.addf %364, %365 : vector<20x64xf32>
    %367 = arith.truncf %366 : vector<20x64xf32> to vector<20x64xbf16>
    %c1_142 = arith.constant 1 : index
    %c0_143 = arith.constant 0 : index
    %c0_144 = arith.constant 0 : index
    %368 = vector.load %arg7[%c1_142, %c0_143, %c0_144] : memref<2x64x128xbf16, #tpu.memory_space<vmem>>, vector<1x64x128xbf16>
    %369 = vector.shape_cast %368 : vector<1x64x128xbf16> to vector<64x128xbf16>
    %cst_145 = arith.constant dense<0.000000e+00> : vector<20x128xf32>
    %370 = tpu.matmul %367, %369, %cst_145 {dimension_numbers = #tpu.dot_dimension_numbers<[1], [0], [0], [1], [0, 0, 1, 1], [], []>} : vector<20x64xbf16>, vector<64x128xbf16>, vector<20x128xf32> -> vector<20x128xf32>
    %c14 = arith.constant 14 : index
    %c0_146 = arith.constant 0 : index
    %371 = vector.load %arg3[%c14, %c0_146] : memref<24x192xf32, #tpu.memory_space<vmem>>, vector<1x128xf32>
    %372 = vector.broadcast %371 : vector<1x128xf32> to vector<20x128xf32>
    %373 = arith.addf %370, %372 : vector<20x128xf32>
    %cst_147 = arith.constant 5.000000e-01 : f32
    %374 = vector.broadcast %cst_147 : f32 to vector<20x128xf32>
    %375 = arith.mulf %374, %373 : vector<20x128xf32>
    %cst_148 = arith.constant 0.707106769 : f32
    %376 = vector.broadcast %cst_148 : f32 to vector<20x128xf32>
    %377 = arith.mulf %373, %376 : vector<20x128xf32>
    %378 = math.erf %377 : vector<20x128xf32>
    %cst_149 = arith.constant 1.000000e+00 : f32
    %379 = vector.broadcast %cst_149 : f32 to vector<20x128xf32>
    %380 = arith.addf %379, %378 : vector<20x128xf32>
    %381 = arith.mulf %375, %380 : vector<20x128xf32>
    %382 = arith.truncf %381 : vector<20x128xf32> to vector<20x128xbf16>
    %c1_150 = arith.constant 1 : index
    %c0_151 = arith.constant 0 : index
    %c0_152 = arith.constant 0 : index
    %383 = vector.load %arg8[%c1_150, %c0_151, %c0_152] : memref<2x128x64xbf16, #tpu.memory_space<vmem>>, vector<1x128x64xbf16>
    %384 = vector.shape_cast %383 : vector<1x128x64xbf16> to vector<128x64xbf16>
    %cst_153 = arith.constant dense<0.000000e+00> : vector<20x64xf32>
    %385 = tpu.matmul %382, %384, %cst_153 {dimension_numbers = #tpu.dot_dimension_numbers<[1], [0], [0], [1], [0, 0, 1, 1], [], []>} : vector<20x128xbf16>, vector<128x64xbf16>, vector<20x64xf32> -> vector<20x64xf32>
    %c15 = arith.constant 15 : index
    %c0_154 = arith.constant 0 : index
    %386 = vector.load %arg3[%c15, %c0_154] : memref<24x192xf32, #tpu.memory_space<vmem>>, vector<1x64xf32>
    %387 = vector.broadcast %386 : vector<1x64xf32> to vector<20x64xf32>
    %388 = arith.addf %385, %387 : vector<20x64xf32>
    %389 = arith.addf %342, %388 : vector<20x64xf32>
    %390 = vector.extract_strided_slice %389 {offsets = [0, 0], sizes = [4, 64], strides = [1, 1]} : vector<20x64xf32> to vector<4x64xf32>
    %c16 = arith.constant 16 : index
    %c0_155 = arith.constant 0 : index
    %391 = vector.load %arg3[%c16, %c0_155] : memref<24x192xf32, #tpu.memory_space<vmem>>, vector<1x64xf32>
    %c17 = arith.constant 17 : index
    %c0_156 = arith.constant 0 : index
    %392 = vector.load %arg3[%c17, %c0_156] : memref<24x192xf32, #tpu.memory_space<vmem>>, vector<1x64xf32>
    %cst_157 = arith.constant dense<0.000000e+00> : vector<4xf32>
    %393 = vector.multi_reduction <add>, %390, %cst_157 [1] : vector<4x64xf32> to vector<4xf32>
    %394 = vector.shape_cast %393 : vector<4xf32> to vector<4x1xf32>
    %cst_158 = arith.constant 6.400000e+01 : f32
    %395 = vector.broadcast %cst_158 : f32 to vector<4x1xf32>
    %396 = arith.divf %394, %395 : vector<4x1xf32>
    %397 = vector.broadcast %396 : vector<4x1xf32> to vector<4x64xf32>
    %398 = arith.subf %390, %397 : vector<4x64xf32>
    %399 = arith.mulf %398, %398 : vector<4x64xf32>
    %cst_159 = arith.constant dense<0.000000e+00> : vector<4xf32>
    %400 = vector.multi_reduction <add>, %399, %cst_159 [1] : vector<4x64xf32> to vector<4xf32>
    %401 = vector.shape_cast %400 : vector<4xf32> to vector<4x1xf32>
    %cst_160 = arith.constant 6.400000e+01 : f32
    %402 = vector.broadcast %cst_160 : f32 to vector<4x1xf32>
    %403 = arith.divf %401, %402 : vector<4x1xf32>
    %404 = vector.broadcast %396 : vector<4x1xf32> to vector<4x64xf32>
    %405 = arith.subf %390, %404 : vector<4x64xf32>
    %cst_161 = arith.constant 9.99999997E-7 : f32
    %406 = vector.broadcast %cst_161 : f32 to vector<4x1xf32>
    %407 = arith.addf %403, %406 : vector<4x1xf32>
    %408 = math.rsqrt %407 : vector<4x1xf32>
    %409 = vector.broadcast %408 : vector<4x1xf32> to vector<4x64xf32>
    %410 = arith.mulf %405, %409 : vector<4x64xf32>
    %411 = vector.broadcast %391 : vector<1x64xf32> to vector<4x64xf32>
    %412 = arith.mulf %410, %411 : vector<4x64xf32>
    %413 = vector.broadcast %392 : vector<1x64xf32> to vector<4x64xf32>
    %414 = arith.addf %412, %413 : vector<4x64xf32>
    %415 = arith.truncf %414 : vector<4x64xf32> to vector<4x64xbf16>
    %c0_162 = arith.constant 0 : index
    %c0_163 = arith.constant 0 : index
    %416 = vector.load %arg9[%c0_162, %c0_163] : memref<64x128xbf16, #tpu.memory_space<vmem>>, vector<64x128xbf16>
    %cst_164 = arith.constant dense<0.000000e+00> : vector<4x128xf32>
    %417 = tpu.matmul %415, %416, %cst_164 {dimension_numbers = #tpu.dot_dimension_numbers<[1], [0], [0], [1], [0, 0, 1, 1], [], []>} : vector<4x64xbf16>, vector<64x128xbf16>, vector<4x128xf32> -> vector<4x128xf32>
    %c18 = arith.constant 18 : index
    %c0_165 = arith.constant 0 : index
    %418 = vector.load %arg3[%c18, %c0_165] : memref<24x192xf32, #tpu.memory_space<vmem>>, vector<1x128xf32>
    %419 = vector.broadcast %418 : vector<1x128xf32> to vector<4x128xf32>
    %420 = arith.addf %417, %419 : vector<4x128xf32>
    %c0_166 = arith.constant 0 : index
    %c0_167 = arith.constant 0 : index
    %c0_168 = arith.constant 0 : index
    %421 = vector.load %arg10[%c0_166, %c0_167, %c0_168] : memref<1x4x128xf32, #tpu.memory_space<vmem>>, vector<1x4x128xf32>
    %422 = vector.shape_cast %421 : vector<1x4x128xf32> to vector<4x128xf32>
    %423 = vector.shape_cast %420 : vector<4x128xf32> to vector<1x4x128xf32>
    tpu.vector_store %arg10[%c0_166, %c0_167, %c0_168], %423 {strides = array<i32>} : memref<1x4x128xf32, #tpu.memory_space<vmem>>, vector<1x4x128xf32>,
    return
  }
  func.func @transform_0(%arg0: i32) -> (i32, i32, i32) {
    %c0_i32 = arith.constant 0 : i32
    %c0_i32_0 = arith.constant 0 : i32
    %c0_i32_1 = arith.constant 0 : i32
    return %arg0, %c0_i32, %c0_i32_0 : i32, i32, i32
  }
  func.func @transform_1(%arg0: i32) -> (i32, i32) {
    %c0_i32 = arith.constant 0 : i32
    %c0_i32_0 = arith.constant 0 : i32
    %c0_i32_1 = arith.constant 0 : i32
    return %c0_i32, %c0_i32_0 : i32, i32
  }
  func.func @transform_2(%arg0: i32) -> (i32, i32) {
    %c0_i32 = arith.constant 0 : i32
    %c0_i32_0 = arith.constant 0 : i32
    %c0_i32_1 = arith.constant 0 : i32
    return %c0_i32, %c0_i32_0 : i32, i32
  }
  func.func @transform_3(%arg0: i32) -> (i32, i32) {
    %c0_i32 = arith.constant 0 : i32
    %c0_i32_0 = arith.constant 0 : i32
    %c0_i32_1 = arith.constant 0 : i32
    return %c0_i32, %c0_i32_0 : i32, i32
  }
  func.func @transform_4(%arg0: i32) -> (i32, i32, i32) {
    %c0_i32 = arith.constant 0 : i32
    %c0_i32_0 = arith.constant 0 : i32
    %c0_i32_1 = arith.constant 0 : i32
    %c0_i32_2 = arith.constant 0 : i32
    return %c0_i32, %c0_i32_0, %c0_i32_1 : i32, i32, i32
  }
  func.func @transform_5(%arg0: i32) -> (i32, i32, i32, i32) {
    %c0_i32 = arith.constant 0 : i32
    %c0_i32_0 = arith.constant 0 : i32
    %c0_i32_1 = arith.constant 0 : i32
    %c0_i32_2 = arith.constant 0 : i32
    %c0_i32_3 = arith.constant 0 : i32
    return %c0_i32, %c0_i32_0, %c0_i32_1, %c0_i32_2 : i32, i32, i32, i32
  }
  func.func @transform_6(%arg0: i32) -> (i32, i32, i32) {
    %c0_i32 = arith.constant 0 : i32
    %c0_i32_0 = arith.constant 0 : i32
    %c0_i32_1 = arith.constant 0 : i32
    %c0_i32_2 = arith.constant 0 : i32
    return %c0_i32, %c0_i32_0, %c0_i32_1 : i32, i32, i32
  }
  func.func @transform_7(%arg0: i32) -> (i32, i32, i32) {
    %c0_i32 = arith.constant 0 : i32
    %c0_i32_0 = arith.constant 0 : i32
    %c0_i32_1 = arith.constant 0 : i32
    %c0_i32_2 = arith.constant 0 : i32
    return %c0_i32, %c0_i32_0, %c0_i32_1 : i32, i32, i32
  }
  func.func @transform_8(%arg0: i32) -> (i32, i32) {
    %c0_i32 = arith.constant 0 : i32
    %c0_i32_0 = arith.constant 0 : i32
    %c0_i32_1 = arith.constant 0 : i32
    return %c0_i32, %c0_i32_0 : i32, i32
  }
  func.func @transform_9(%arg0: i32) -> (i32, i32, i32) {
    %c0_i32 = arith.constant 0 : i32
    %c0_i32_0 = arith.constant 0 : i32
    %c0_i32_1 = arith.constant 0 : i32
    return %arg0, %c0_i32, %c0_i32_0 : i32, i32, i32
  }
}

</mosaic_0001>

<llo_original>
// kernel: vit_forward.1
$region0: #{vit_forward.1}
  #allocation0 [shape = 'u32[]', space=smem, size = 0x4, offset = 0x4, fixed_abs, tag = 'smem constant byte address 0x4 - core index']
  #allocation1 [shape = 'u32[144,128]{1,0:T(1,128)}', space=vmem, size = 0x12000, scoped, tag = 'internal scratch']
  %s0 = inlined_call_operand.vmem [shape: bf16[2,16,768], index: 0, kind: input, shape index: {}]
  %s1 = inlined_call_operand.vmem [shape: f32[20,20], index: 1, kind: input, shape index: {}]
  %s2 = inlined_call_operand.vmem [shape: f32[24,192], index: 2, kind: input, shape index: {}]
  %s3 = inlined_call_operand.vmem [shape: bf16[768,64], index: 3, kind: input, shape index: {}]
  %s4 = inlined_call_operand.vmem [shape: bf16[2,64,192], index: 4, kind: input, shape index: {}]
  %s5 = inlined_call_operand.vmem [shape: bf16[2,4,16,64], index: 5, kind: input, shape index: {}]
  %s6 = inlined_call_operand.vmem [shape: bf16[2,64,128], index: 6, kind: input, shape index: {}]
  %s7 = inlined_call_operand.vmem [shape: bf16[2,128,64], index: 7, kind: input, shape index: {}]
  %s8 = inlined_call_operand.vmem [shape: bf16[64,128], index: 8, kind: input, shape index: {}]
  %s9 = inlined_call_operand.vmem [shape: f32[2,4,128], index: 9, kind: output, shape index: {}]
  %s10 = sld [smem:[#allocation0]]
  $region69: #{vit_forward.1} parent=0
    _
  %s12 = ssub.s32 1, %s10
  %s13 = scalar_select 0, %s12, %s10
  loop: start=0, step=1, limit=4
  $region2: #{vit_forward.1} parent=0 // loop_pre_header
    _
  $region3: #{vit_forward.1} parent=0 // loop_header
    %s15 = sphi 0, %s19
    %p16 = scmp.ge.s32.totalorder %s15, 4
    %s25 = sphi 0, %s27
    %s28 = sphi 0, %s25
    %s29 = sphi 0, %s28
    %s45 = sphi 0, %s29
    %s49 = sphi 0, %s49
    %s51 = sphi 0, %s49
    %s52 = sphi 0, %s51
    %s66 = sphi 0, %s52
    %s70 = sphi 0, %s70
    %s72 = sphi 0, %s70
    %s73 = sphi 0, %s72
    %s87 = sphi 0, %s73
    %s91 = sphi 0, %s91
    %s93 = sphi 0, %s91
    %s94 = sphi 0, %s93
    %s108 = sphi 0, %s94
    %s112 = sphi 0, %s112
    %s114 = sphi 0, %s112
    %s115 = sphi 0, %s114
    %s129 = sphi 0, %s115
    %s133 = sphi 0, %s133
    %s135 = sphi 0, %s133
    %s136 = sphi 0, %s135
    %s150 = sphi 0, %s136
    %s154 = sphi 0, %s154
    %s156 = sphi 0, %s154
    %s157 = sphi 0, %s156
    %s171 = sphi 0, %s157
    %s175 = sphi 0, %s175
    %s177 = sphi 0, %s175
    %s178 = sphi 0, %s177
    %s192 = sphi 0, %s178
    %s196 = sphi 0, %s196
    %s198 = sphi 0, %s196
    %s199 = sphi 0, %s198
    %s213 = sphi 0, %s199
    %s219 = sphi 0, %s221
    %s222 = sphi 0, %s219
    %s223 = sphi 0, %s222
    %s239 = sphi 0, %s223
  $region4: #{vit_forward.1} parent=0 // loop_header_branch
    %18 = sbr.rel (%p16) target = $region8
  $region5: #{vit_forward.1} parent=0 // loop_body
    %s20 = ssub.s32 %s15, 1
    %s21 = ssub.s32 %s15, 2
    %s22 = sadd.s32 %s15, 1
    %s23 = ssub.s32 %s15, %s22
    %p24 = scmp.eq.s32.totalorder %s23, 0
    %s26 = sadd.s32 %s25, 1
    %s27 = scalar_select %p24, %s25, %s26
    %p30 = pneg %p24
    %p31 = scmp.eq.s32.totalorder %s15, 1
    %p32 = por %p30, %p31
    %p33 = scmp.ne.s32.totalorder %s25, %s28
    %p34 = scmp.eq.s32.totalorder %s15, 0
    %p35 = por %p33, %p34
    %p36 = scmp.ne.s32.totalorder %s25, %s28
    %p37 = scmp.eq.s32.totalorder %s20, 1
    %p38 = por %p36, %p37
    %p39 = scmp.ne.s32.totalorder %s28, %s29
    %p40 = scmp.eq.s32.totalorder %s20, 0
    %p41 = por %p39, %p40
    %p42 = scmp.ne.s32.totalorder %s28, %s29
    %p43 = scmp.eq.s32.totalorder %s21, 1
    %p44 = por %p42, %p43
    %p46 = scmp.ne.s32.totalorder %s29, %s45
    %p47 = scmp.eq.s32.totalorder %s21, 0
    %p48 = por %p46, %p47
    %s50 = sadd.s32 %s49, 1
    %p53 = scmp.eq.s32.totalorder %s15, 1
    %p54 = scmp.ne.s32.totalorder %s49, %s51
    %p55 = scmp.eq.s32.totalorder %s15, 0
    %p56 = por %p54, %p55
    %p57 = scmp.ne.s32.totalorder %s49, %s51
    %p58 = scmp.eq.s32.totalorder %s20, 1
    %p59 = por %p57, %p58
    %p60 = scmp.ne.s32.totalorder %s51, %s52
    %p61 = scmp.eq.s32.totalorder %s20, 0
    %p62 = por %p60, %p61
    %p63 = scmp.ne.s32.totalorder %s51, %s52
    %p64 = scmp.eq.s32.totalorder %s21, 1
    %p65 = por %p63, %p64
    %p67 = scmp.ne.s32.totalorder %s52, %s66
    %p68 = scmp.eq.s32.totalorder %s21, 0
    %p69 = por %p67, %p68
    %s71 = sadd.s32 %s70, 1
    %p74 = scmp.eq.s32.totalorder %s15, 1
    %p75 = scmp.ne.s32.totalorder %s70, %s72
    %p76 = scmp.eq.s32.totalorder %s15, 0
    %p77 = por %p75, %p76
    %p78 = scmp.ne.s32.totalorder %s70, %s72
    %p79 = scmp.eq.s32.totalorder %s20, 1
    %p80 = por %p78, %p79
    %p81 = scmp.ne.s32.totalorder %s72, %s73
    %p82 = scmp.eq.s32.totalorder %s20, 0
    %p83 = por %p81, %p82
    %p84 = scmp.ne.s32.totalorder %s72, %s73
    %p85 = scmp.eq.s32.totalorder %s21, 1
    %p86 = por %p84, %p85
    %p88 = scmp.ne.s32.totalorder %s73, %s87
    %p89 = scmp.eq.s32.totalorder %s21, 0
    %p90 = por %p88, %p89
    %s92 = sadd.s32 %s91, 1
    %p95 = scmp.eq.s32.totalorder %s15, 1
    %p96 = scmp.ne.s32.totalorder %s91, %s93
    %p97 = scmp.eq.s32.totalorder %s15, 0
    %p98 = por %p96, %p97
    %p99 = scmp.ne.s32.totalorder %s91, %s93
    %p100 = scmp.eq.s32.totalorder %s20, 1
    %p101 = por %p99, %p100
    %p102 = scmp.ne.s32.totalorder %s93, %s94
    %p103 = scmp.eq.s32.totalorder %s20, 0
    %p104 = por %p102, %p103
    %p105 = scmp.ne.s32.totalorder %s93, %s94
    %p106 = scmp.eq.s32.totalorder %s21, 1
    %p107 = por %p105, %p106
    %p109 = scmp.ne.s32.totalorder %s94, %s108
    %p110 = scmp.eq.s32.totalorder %s21, 0
    %p111 = por %p109, %p110
    %s113 = sadd.s32 %s112, 1
    %p116 = scmp.eq.s32.totalorder %s15, 1
    %p117 = scmp.ne.s32.totalorder %s112, %s114
    %p118 = scmp.eq.s32.totalorder %s15, 0
    %p119 = por %p117, %p118
    %p120 = scmp.ne.s32.totalorder %s112, %s114
    %p121 = scmp.eq.s32.totalorder %s20, 1
    %p122 = por %p120, %p121
    %p123 = scmp.ne.s32.totalorder %s114, %s115
    %p124 = scmp.eq.s32.totalorder %s20, 0
    %p125 = por %p123, %p124
    %p126 = scmp.ne.s32.totalorder %s114, %s115
    %p127 = scmp.eq.s32.totalorder %s21, 1
    %p128 = por %p126, %p127
    %p130 = scmp.ne.s32.totalorder %s115, %s129
    %p131 = scmp.eq.s32.totalorder %s21, 0
    %p132 = por %p130, %p131
    %s134 = sadd.s32 %s133, 1
    %p137 = scmp.eq.s32.totalorder %s15, 1
    %p138 = scmp.ne.s32.totalorder %s133, %s135
    %p139 = scmp.eq.s32.totalorder %s15, 0
    %p140 = por %p138, %p139
    %p141 = scmp.ne.s32.totalorder %s133, %s135
    %p142 = scmp.eq.s32.totalorder %s20, 1
    %p143 = por %p141, %p142
    %p144 = scmp.ne.s32.totalorder %s135, %s136
    %p145 = scmp.eq.s32.totalorder %s20, 0
    %p146 = por %p144, %p145
    %p147 = scmp.ne.s32.totalorder %s135, %s136
    %p148 = scmp.eq.s32.totalorder %s21, 1
    %p149 = por %p147, %p148
    %p151 = scmp.ne.s32.totalorder %s136, %s150
    %p152 = scmp.eq.s32.totalorder %s21, 0
    %p153 = por %p151, %p152
    %s155 = sadd.s32 %s154, 1
    %p158 = scmp.eq.s32.totalorder %s15, 1
    %p159 = scmp.ne.s32.totalorder %s154, %s156
    %p160 = scmp.eq.s32.totalorder %s15, 0
    %p161 = por %p159, %p160
    %p162 = scmp.ne.s32.totalorder %s154, %s156
    %p163 = scmp.eq.s32.totalorder %s20, 1
    %p164 = por %p162, %p163
    %p165 = scmp.ne.s32.totalorder %s156, %s157
    %p166 = scmp.eq.s32.totalorder %s20, 0
    %p167 = por %p165, %p166
    %p168 = scmp.ne.s32.totalorder %s156, %s157
    %p169 = scmp.eq.s32.totalorder %s21, 1
    %p170 = por %p168, %p169
    %p172 = scmp.ne.s32.totalorder %s157, %s171
    %p173 = scmp.eq.s32.totalorder %s21, 0
    %p174 = por %p172, %p173
    %s176 = sadd.s32 %s175, 1
    %p179 = scmp.eq.s32.totalorder %s15, 1
    %p180 = scmp.ne.s32.totalorder %s175, %s177
    %p181 = scmp.eq.s32.totalorder %s15, 0
    %p182 = por %p180, %p181
    %p183 = scmp.ne.s32.totalorder %s175, %s177
    %p184 = scmp.eq.s32.totalorder %s20, 1
    %p185 = por %p183, %p184
    %p186 = scmp.ne.s32.totalorder %s177, %s178
    %p187 = scmp.eq.s32.totalorder %s20, 0
    %p188 = por %p186, %p187
    %p189 = scmp.ne.s32.totalorder %s177, %s178
    %p190 = scmp.eq.s32.totalorder %s21, 1
    %p191 = por %p189, %p190
    %p193 = scmp.ne.s32.totalorder %s178, %s192
    %p194 = scmp.eq.s32.totalorder %s21, 0
    %p195 = por %p193, %p194
    %s197 = sadd.s32 %s196, 1
    %p200 = scmp.eq.s32.totalorder %s15, 1
    %p201 = scmp.ne.s32.totalorder %s196, %s198
    %p202 = scmp.eq.s32.totalorder %s15, 0
    %p203 = por %p201, %p202
    %p204 = scmp.ne.s32.totalorder %s196, %s198
    %p205 = scmp.eq.s32.totalorder %s20, 1
    %p206 = por %p204, %p205
    %p207 = scmp.ne.s32.totalorder %s198, %s199
    %p208 = scmp.eq.s32.totalorder %s20, 0
    %p209 = por %p207, %p208
    %p210 = scmp.ne.s32.totalorder %s198, %s199
    %p211 = scmp.eq.s32.totalorder %s21, 1
    %p212 = por %p210, %p211
    %p214 = scmp.ne.s32.totalorder %s199, %s213
    %p215 = scmp.eq.s32.totalorder %s21, 0
    %p216 = por %p214, %p215
    %s217 = ssub.s32 %s15, %s22
    %p218 = scmp.eq.s32.totalorder %s217, 0
    %s220 = sadd.s32 %s219, 1
    %s221 = scalar_select %p218, %s219, %s220
    %p224 = pneg %p218
    %p225 = scmp.eq.s32.totalorder %s15, 1
    %p226 = por %p224, %p225
    %p227 = scmp.ne.s32.totalorder %s219, %s222
    %p228 = scmp.eq.s32.totalorder %s15, 0
    %p229 = por %p227, %p228
    %p230 = scmp.ne.s32.totalorder %s219, %s222
    %p231 = scmp.eq.s32.totalorder %s20, 1
    %p232 = por %p230, %p231
    %p233 = scmp.ne.s32.totalorder %s222, %s223
    %p234 = scmp.eq.s32.totalorder %s20, 0
    %p235 = por %p233, %p234
    %p236 = scmp.ne.s32.totalorder %s222, %s223
    %p237 = scmp.eq.s32.totalorder %s21, 1
    %p238 = por %p236, %p237
    %p240 = scmp.ne.s32.totalorder %s223, %s239
    %p241 = scmp.eq.s32.totalorder %s21, 0
    %p242 = por %p240, %p241
    %p243 = scmp.le.s32.totalorder 1, %s15
    %p244 = scmp.lt.s32.totalorder %s15, 3
    %p245 = pnand %p243, %p244
    %p246 = pneg %p245
    // Predicated region
    $region9: #{vit_forward.1} parent=5 // pred_check
      _
    $region10: #{vit_forward.1} parent=5 // pred_check_branch
      %248 = sbr.rel (%p245) target = $region12
    $region11: #{vit_forward.1} parent=5 // pred_region
      %s249 = ssub.s32 %s15, 1
      // Predicated region
      $region13: #{vit_forward.1} parent=11 // pred_check
        %p250 = pneg %p62
      $region14: #{vit_forward.1} parent=11 // pred_check_branch
        %252 = sbr.rel (%p250) target = $region16
      $region15: #{vit_forward.1} parent=11 // pred_region
        _
      $region16: #{vit_forward.1} parent=11 // pred_fallthru
        _
      // Predicated region
      $region17: #{vit_forward.1} parent=11 // pred_check
        %p253 = pneg %p83
      $region18: #{vit_forward.1} parent=11 // pred_check_branch
        %255 = sbr.rel (%p253) target = $region20
      $region19: #{vit_forward.1} parent=11 // pred_region
        _
      $region20: #{vit_forward.1} parent=11 // pred_fallthru
        _
      // Predicated region
      $region21: #{vit_forward.1} parent=11 // pred_check
        %p256 = pneg %p104
      $region22: #{vit_forward.1} parent=11 // pred_check_branch
        %258 = sbr.rel (%p256) target = $region24
      $region23: #{vit_forward.1} parent=11 // pred_region
        _
      $region24: #{vit_forward.1} parent=11 // pred_fallthru
        _
      // Predicated region
      $region25: #{vit_forward.1} parent=11 // pred_check
        %p259 = pneg %p125
      $region26: #{vit_forward.1} parent=11 // pred_check_branch
        %261 = sbr.rel (%p259) target = $region28
      $region27: #{vit_forward.1} parent=11 // pred_region
        _
      $region28: #{vit_forward.1} parent=11 // pred_fallthru
        _
      // Predicated region
      $region29: #{vit_forward.1} parent=11 // pred_check
        %p262 = pneg %p146
      $region30: #{vit_forward.1} parent=11 // pred_check_branch
        %264 = sbr.rel (%p262) target = $region32
      $region31: #{vit_forward.1} parent=11 // pred_region
        _
      $region32: #{vit_forward.1} parent=11 // pred_fallthru
        _
      // Predicated region
      $region33: #{vit_forward.1} parent=11 // pred_check
        %p265 = pneg %p167
      $region34: #{vit_forward.1} parent=11 // pred_check_branch
        %267 = sbr.rel (%p265) target = $region36
      $region35: #{vit_forward.1} parent=11 // pred_region
        _
      $region36: #{vit_forward.1} parent=11 // pred_fallthru
        _
      // Predicated region
      $region37: #{vit_forward.1} parent=11 // pred_check
        %p268 = pneg %p188
      $region38: #{vit_forward.1} parent=11 // pred_check_branch
        %270 = sbr.rel (%p268) target = $region40
      $region39: #{vit_forward.1} parent=11 // pred_region
        _
      $region40: #{vit_forward.1} parent=11 // pred_fallthru
        _
      // Predicated region
      $region41: #{vit_forward.1} parent=11 // pred_check
        %p271 = pneg %p209
      $region42: #{vit_forward.1} parent=11 // pred_check_branch
        %273 = sbr.rel (%p271) target = $region44
      $region43: #{vit_forward.1} parent=11 // pred_region
        _
      $region44: #{vit_forward.1} parent=11 // pred_fallthru
        _
    $region12: #{vit_forward.1} parent=5 // pred_fallthru
      _
    %p274 = scmp.lt.s32.totalorder %s15, 2
    // Predicated region
    $region45: #{vit_forward.1} parent=5 // pred_check
      %p275 = pneg %p274
    $region46: #{vit_forward.1} parent=5 // pred_check_branch
      %277 = sbr.rel (%p275) target = $region48
    $region47: #{vit_forward.1} parent=5 // pred_region
      // Predicated region
      $region49: #{vit_forward.1} parent=47 // pred_check
        %p278 = pneg %p35
      $region50: #{vit_forward.1} parent=47 // pred_check_branch
        %280 = sbr.rel (%p278) target = $region52
      $region51: #{vit_forward.1} parent=47 // pred_region
        %p281 = scmp.lt.s32.totalorder %s15, 1
        %s282 = scalar_select %p281, %s15, 1
        %s283 = smul.addr %s282, 12
        %s284 = smul.addr %s283, 4
        %s285 = scalar_lea.vmem %s0, %s284
      $region52: #{vit_forward.1} parent=47 // pred_fallthru
        _
    $region48: #{vit_forward.1} parent=5 // pred_fallthru
      _
    %p286 = scmp.le.s32.totalorder 1, %s15
    %p287 = scmp.lt.s32.totalorder %s15, 3
    %p288 = pnand %p286, %p287
    %p289 = pneg %p288
    // Predicated region
    $region53: #{vit_forward.1} parent=5 // pred_check
      _
    $region54: #{vit_forward.1} parent=5 // pred_check_branch
      %291 = sbr.rel (%p288) target = $region56
    $region55: #{vit_forward.1} parent=5 // pred_region
      %s292 = ssub.s32 %s15, 1
      %p293 = scmp.lt.s32.totalorder %s20, 1
      %s294 = scalar_select %p293, %s20, 1
      %s295 = smul.addr %s294, 12
      %s296 = smul.addr %s295, 4
      %s297 = scalar_lea.vmem %s0, %s296
      %p298 = pneg %p41
      %p299 = pneg %p38
      %p300 = pneg %p62
      %p301 = pneg %p59
      %p302 = pneg %p83
      %p303 = pneg %p80
      %p304 = pneg %p104
      %p305 = pneg %p101
      %p306 = pneg %p125
      %p307 = pneg %p122
      %p308 = pneg %p146
      %p309 = pneg %p143
      %p310 = pneg %p167
      %p311 = pneg %p164
      %p312 = pneg %p188
      %p313 = pneg %p185
      %p314 = pneg %p209
      %p315 = pneg %p206
      %p316 = pneg %p235
      %p317 = pneg %p232
      %p318 = scmp.lt.s32.totalorder %s20, 1
      %s319 = scalar_select %p318, %s20, 1
      %s320 = smul.addr %s319, 4
      %s321 = scalar_lea.vmem %s9, %s320
      %p322 = scmp.lt.s32.totalorder %s20, 1
      %s323 = scalar_select %p322, %s20, 1
      %s324 = smul.addr %s323, 12
      %s325 = smul.addr %s324, 4
      %s326 = scalar_lea.vmem %s0, %s325
      %p327 = scmp.lt.s32.totalorder %s20, 1
      %s328 = scalar_select %p327, %s20, 1
      %s329 = smul.addr %s328, 4
      %s330 = scalar_lea.vmem %s9, %s329
      %v332 = vld [vmem:[%s1] sm:$0xff]
      %v333 = vld [vmem:[%s1 + $0x8] sm:$0xff]
      %v334 = vld [vmem:[%s1 + $0x10] sm:$0xf]
      %v335 = vld [vmem:[%s326] sm:$0xff]
      %v336 = vld [vmem:[%s326 + $0x8] sm:$0xff]
      %v337 = vld [vmem:[%s326 + $0x10] sm:$0xff]
      %v338 = vld [vmem:[%s326 + $0x18] sm:$0xff]
      %v339 = vld [vmem:[%s326 + $0x20] sm:$0xff]
      %v340 = vld [vmem:[%s326 + $0x28] sm:$0xff]
      %v341 = vld [vmem:[%s3] sm:$0xf]
      %v342 = vld [vmem:[%s3 + $0x4] sm:$0xf]
      %v343 = vld [vmem:[%s3 + $0x8] sm:$0xf]
      %v344 = vld [vmem:[%s3 + $0xc] sm:$0xf]
      %v345 = vld [vmem:[%s3 + $0x10] sm:$0xf]
      %v346 = vld [vmem:[%s3 + $0x14] sm:$0xf]
      %v347 = vld [vmem:[%s3 + $0x18] sm:$0xf]
      %v348 = vld [vmem:[%s3 + $0x1c] sm:$0xf]
      %v349 = vld [vmem:[%s3 + $0x20] sm:$0xf]
      %v350 = vld [vmem:[%s3 + $0x24] sm:$0xf]
      %v351 = vld [vmem:[%s3 + $0x28] sm:$0xf]
      %v352 = vld [vmem:[%s3 + $0x2c] sm:$0xf]
      %v353 = vld [vmem:[%s3 + $0x30] sm:$0xf]
      %v354 = vld [vmem:[%s3 + $0x34] sm:$0xf]
      %v355 = vld [vmem:[%s3 + $0x38] sm:$0xf]
      %v356 = vld [vmem:[%s3 + $0x3c] sm:$0xf]
      %v357 = vld [vmem:[%s3 + $0x40] sm:$0xf]
      %v358 = vld [vmem:[%s3 + $0x44] sm:$0xf]
      %v359 = vld [vmem:[%s3 + $0x48] sm:$0xf]
      %v360 = vld [vmem:[%s3 + $0x4c] sm:$0xf]
      %v361 = vld [vmem:[%s3 + $0x50] sm:$0xf]
      %v362 = vld [vmem:[%s3 + $0x54] sm:$0xf]
      %v363 = vld [vmem:[%s3 + $0x58] sm:$0xf]
      %v364 = vld [vmem:[%s3 + $0x5c] sm:$0xf]
      %v365 = vld [vmem:[%s3 + $0x60] sm:$0xf]
      %v366 = vld [vmem:[%s3 + $0x64] sm:$0xf]
      %v367 = vld [vmem:[%s3 + $0x68] sm:$0xf]
      %v368 = vld [vmem:[%s3 + $0x6c] sm:$0xf]
      %v369 = vld [vmem:[%s3 + $0x70] sm:$0xf]
      %v370 = vld [vmem:[%s3 + $0x74] sm:$0xf]
      %v371 = vld [vmem:[%s3 + $0x78] sm:$0xf]
      %v372 = vld [vmem:[%s3 + $0x7c] sm:$0xf]
      %v373 = vld [vmem:[%s3 + $0x80] sm:$0xf]
      %v374 = vld [vmem:[%s3 + $0x84] sm:$0xf]
      %v375 = vld [vmem:[%s3 + $0x88] sm:$0xf]
      %v376 = vld [vmem:[%s3 + $0x8c] sm:$0xf]
      %v377 = vld [vmem:[%s3 + $0x90] sm:$0xf]
      %v378 = vld [vmem:[%s3 + $0x94] sm:$0xf]
      %v379 = vld [vmem:[%s3 + $0x98] sm:$0xf]
      %v380 = vld [vmem:[%s3 + $0x9c] sm:$0xf]
      %v381 = vld [vmem:[%s3 + $0xa0] sm:$0xf]
      %v382 = vld [vmem:[%s3 + $0xa4] sm:$0xf]
      %v383 = vld [vmem:[%s3 + $0xa8] sm:$0xf]
      %v384 = vld [vmem:[%s3 + $0xac] sm:$0xf]
      %v385 = vld [vmem:[%s3 + $0xb0] sm:$0xf]
      %v386 = vld [vmem:[%s3 + $0xb4] sm:$0xf]
      %v387 = vld [vmem:[%s3 + $0xb8] sm:$0xf]
      %v388 = vld [vmem:[%s3 + $0xbc] sm:$0xf]
      %v389 = vld [vmem:[%s3 + $0xc0] sm:$0xf]
      %v390 = vld [vmem:[%s3 + $0xc4] sm:$0xf]
      %v391 = vld [vmem:[%s3 + $0xc8] sm:$0xf]
      %v392 = vld [vmem:[%s3 + $0xcc] sm:$0xf]
      %v393 = vld [vmem:[%s3 + $0xd0] sm:$0xf]
      %v394 = vld [vmem:[%s3 + $0xd4] sm:$0xf]
      %v395 = vld [vmem:[%s3 + $0xd8] sm:$0xf]
      %v396 = vld [vmem:[%s3 + $0xdc] sm:$0xf]
      %v397 = vld [vmem:[%s3 + $0xe0] sm:$0xf]
      %v398 = vld [vmem:[%s3 + $0xe4] sm:$0xf]
      %v399 = vld [vmem:[%s3 + $0xe8] sm:$0xf]
      %v400 = vld [vmem:[%s3 + $0xec] sm:$0xf]
      %v401 = vld [vmem:[%s3 + $0xf0] sm:$0xf]
      %v402 = vld [vmem:[%s3 + $0xf4] sm:$0xf]
      %v403 = vld [vmem:[%s3 + $0xf8] sm:$0xf]
      %v404 = vld [vmem:[%s3 + $0xfc] sm:$0xf]
      %v405 = vld [vmem:[%s3 + $0x100] sm:$0xf]
      %v406 = vld [vmem:[%s3 + $0x104] sm:$0xf]
      %v407 = vld [vmem:[%s3 + $0x108] sm:$0xf]
      %v408 = vld [vmem:[%s3 + $0x10c] sm:$0xf]
      %v409 = vld [vmem:[%s3 + $0x110] sm:$0xf]
      %v410 = vld [vmem:[%s3 + $0x114] sm:$0xf]
      %v411 = vld [vmem:[%s3 + $0x118] sm:$0xf]
      %v412 = vld [vmem:[%s3 + $0x11c] sm:$0xf]
      %v413 = vld [vmem:[%s3 + $0x120] sm:$0xf]
      %v414 = vld [vmem:[%s3 + $0x124] sm:$0xf]
      %v415 = vld [vmem:[%s3 + $0x128] sm:$0xf]
      %v416 = vld [vmem:[%s3 + $0x12c] sm:$0xf]
      %v417 = vld [vmem:[%s3 + $0x130] sm:$0xf]
      %v418 = vld [vmem:[%s3 + $0x134] sm:$0xf]
      %v419 = vld [vmem:[%s3 + $0x138] sm:$0xf]
      %v420 = vld [vmem:[%s3 + $0x13c] sm:$0xf]
      %v421 = vld [vmem:[%s3 + $0x140] sm:$0xf]
      %v422 = vld [vmem:[%s3 + $0x144] sm:$0xf]
      %v423 = vld [vmem:[%s3 + $0x148] sm:$0xf]
      %v424 = vld [vmem:[%s3 + $0x14c] sm:$0xf]
      %v425 = vld [vmem:[%s3 + $0x150] sm:$0xf]
      %v426 = vld [vmem:[%s3 + $0x154] sm:$0xf]
      %v427 = vld [vmem:[%s3 + $0x158] sm:$0xf]
      %v428 = vld [vmem:[%s3 + $0x15c] sm:$0xf]
      %v429 = vld [vmem:[%s3 + $0x160] sm:$0xf]
      %v430 = vld [vmem:[%s3 + $0x164] sm:$0xf]
      %v431 = vld [vmem:[%s3 + $0x168] sm:$0xf]
      %v432 = vld [vmem:[%s3 + $0x16c] sm:$0xf]
      %v433 = vld [vmem:[%s3 + $0x170] sm:$0xf]
      %v434 = vld [vmem:[%s3 + $0x174] sm:$0xf]
      %v435 = vld [vmem:[%s3 + $0x178] sm:$0xf]
      %v436 = vld [vmem:[%s3 + $0x17c] sm:$0xf]
      %v437 = vld [vmem:[%s2 + $0x20] sm:$0xf0]
      %v439 = vrot.slane %v437, 4
      %vm441 = vcmask 1043456
      %v442 = vsel %vm441, %v439, %v437
      %v443 = vld [vmem:[%s2 + $0x23] ss:$0 sm:$0xff]
      %v450 = vunpack.c.l.b16 %v335
      %v451 = vunpack.c.h.b16 %v335
      %v452 = vunpack.c.l.b16 %v336
      %v453 = vunpack.c.h.b16 %v336
      %v454 = vunpack.c.l.b16 %v337
      %v455 = vunpack.c.h.b16 %v337
      %v456 = vunpack.c.l.b16 %v338
      %v457 = vunpack.c.h.b16 %v338
      %v458 = vunpack.c.l.b16 %v339
      %v459 = vunpack.c.h.b16 %v339
      %v460 = vunpack.c.l.b16 %v340
      %v461 = vunpack.c.h.b16 %v340
      %v462 = vpack.c.b16 %v456, %v450
      %v463 = vpack.c.b16 %v457, %v451
      %v464 = vpack.c.b16 %v458, %v452
      %v465 = vpack.c.b16 %v459, %v453
      %v466 = vpack.c.b16 %v460, %v454
      %v467 = vpack.c.b16 %v461, %v455
      %v570 = vunpack.c.l.b16 %v341
      %v571 = vunpack.c.l.b16 %v342
      %v572 = vunpack.c.l.b16 %v343
      %v573 = vunpack.c.l.b16 %v344
      %v574 = vunpack.c.l.b16 %v345
      %v575 = vunpack.c.l.b16 %v346
      %v576 = vunpack.c.l.b16 %v347
      %v577 = vunpack.c.l.b16 %v348
      %v578 = vunpack.c.l.b16 %v349
      %v579 = vunpack.c.l.b16 %v350
      %v580 = vunpack.c.l.b16 %v351
      %v581 = vunpack.c.l.b16 %v352
      %v582 = vunpack.c.l.b16 %v353
      %v583 = vunpack.c.l.b16 %v354
      %v584 = vunpack.c.l.b16 %v355
      %v585 = vunpack.c.l.b16 %v356
      %v586 = vunpack.c.l.b16 %v357
      %v587 = vunpack.c.l.b16 %v358
      %v588 = vunpack.c.l.b16 %v359
      %v589 = vunpack.c.l.b16 %v360
      %v590 = vunpack.c.l.b16 %v361
      %v591 = vunpack.c.l.b16 %v362
      %v592 = vunpack.c.l.b16 %v363
      %v593 = vunpack.c.l.b16 %v364
      %v594 = vunpack.c.l.b16 %v365
      %v595 = vunpack.c.l.b16 %v366
      %v596 = vunpack.c.l.b16 %v367
      %v597 = vunpack.c.l.b16 %v368
      %v598 = vunpack.c.l.b16 %v369
      %v599 = vunpack.c.l.b16 %v370
      %v600 = vunpack.c.l.b16 %v371
      %v601 = vunpack.c.l.b16 %v372
      %v602 = vunpack.c.l.b16 %v373
      %v603 = vunpack.c.l.b16 %v374
      %v604 = vunpack.c.l.b16 %v375
      %v605 = vunpack.c.l.b16 %v376
      %v606 = vunpack.c.l.b16 %v377
      %v607 = vunpack.c.l.b16 %v378
      %v608 = vunpack.c.l.b16 %v379
      %v609 = vunpack.c.l.b16 %v380
      %v610 = vunpack.c.l.b16 %v381
      %v611 = vunpack.c.l.b16 %v382
      %v612 = vunpack.c.l.b16 %v383
      %v613 = vunpack.c.l.b16 %v384
      %v614 = vunpack.c.l.b16 %v385
      %v615 = vunpack.c.l.b16 %v386
      %v616 = vunpack.c.l.b16 %v387
      %v617 = vunpack.c.l.b16 %v388
      %v618 = vunpack.c.l.b16 %v389
      %v619 = vunpack.c.l.b16 %v390
      %v620 = vunpack.c.l.b16 %v391
      %v621 = vunpack.c.l.b16 %v392
      %v622 = vunpack.c.l.b16 %v393
      %v623 = vunpack.c.l.b16 %v394
      %v624 = vunpack.c.l.b16 %v395
      %v625 = vunpack.c.l.b16 %v396
      %v626 = vunpack.c.l.b16 %v397
      %v627 = vunpack.c.l.b16 %v398
      %v628 = vunpack.c.l.b16 %v399
      %v629 = vunpack.c.l.b16 %v400
      %v630 = vunpack.c.l.b16 %v401
      %v631 = vunpack.c.l.b16 %v402
      %v632 = vunpack.c.l.b16 %v403
      %v633 = vunpack.c.l.b16 %v404
      %v634 = vunpack.c.l.b16 %v405
      %v635 = vunpack.c.l.b16 %v406
      %v636 = vunpack.c.l.b16 %v407
      %v637 = vunpack.c.l.b16 %v408
      %v638 = vunpack.c.l.b16 %v409
      %v639 = vunpack.c.l.b16 %v410
      %v640 = vunpack.c.l.b16 %v411
      %v641 = vunpack.c.l.b16 %v412
      %v642 = vunpack.c.l.b16 %v413
      %v643 = vunpack.c.l.b16 %v414
      %v644 = vunpack.c.l.b16 %v415
      %v645 = vunpack.c.l.b16 %v416
      %v646 = vunpack.c.l.b16 %v417
      %v647 = vunpack.c.l.b16 %v418
      %v648 = vunpack.c.l.b16 %v419
      %v649 = vunpack.c.l.b16 %v420
      %v650 = vunpack.c.l.b16 %v421
      %v651 = vunpack.c.l.b16 %v422
      %v652 = vunpack.c.l.b16 %v423
      %v653 = vunpack.c.l.b16 %v424
      %v654 = vunpack.c.l.b16 %v425
      %v655 = vunpack.c.l.b16 %v426
      %v656 = vunpack.c.l.b16 %v427
      %v657 = vunpack.c.l.b16 %v428
      %v658 = vunpack.c.l.b16 %v429
      %v659 = vunpack.c.l.b16 %v430
      %v660 = vunpack.c.l.b16 %v431
      %v661 = vunpack.c.l.b16 %v432
      %v662 = vunpack.c.l.b16 %v433
      %v663 = vunpack.c.l.b16 %v434
      %v664 = vunpack.c.l.b16 %v435
      %v665 = vunpack.c.l.b16 %v436
      %v666 = vpack.c.b16 %v571, %v570
      %v667 = vpack.c.b16 %v573, %v572
      %v668 = vpack.c.b16 %v575, %v574
      %v669 = vpack.c.b16 %v577, %v576
      %v670 = vpack.c.b16 %v579, %v578
      %v671 = vpack.c.b16 %v581, %v580
      %v672 = vpack.c.b16 %v583, %v582
      %v673 = vpack.c.b16 %v585, %v584
      %v674 = vpack.c.b16 %v587, %v586
      %v675 = vpack.c.b16 %v589, %v588
      %v676 = vpack.c.b16 %v591, %v590
      %v677 = vpack.c.b16 %v593, %v592
      %v678 = vpack.c.b16 %v595, %v594
      %v679 = vpack.c.b16 %v597, %v596
      %v680 = vpack.c.b16 %v599, %v598
      %v681 = vpack.c.b16 %v601, %v600
      %v682 = vpack.c.b16 %v603, %v602
      %v683 = vpack.c.b16 %v605, %v604
      %v684 = vpack.c.b16 %v607, %v606
      %v685 = vpack.c.b16 %v609, %v608
      %v686 = vpack.c.b16 %v611, %v610
      %v687 = vpack.c.b16 %v613, %v612
      %v688 = vpack.c.b16 %v615, %v614
      %v689 = vpack.c.b16 %v617, %v616
      %v690 = vpack.c.b16 %v619, %v618
      %v691 = vpack.c.b16 %v621, %v620
      %v692 = vpack.c.b16 %v623, %v622
      %v693 = vpack.c.b16 %v625, %v624
      %v694 = vpack.c.b16 %v627, %v626
      %v695 = vpack.c.b16 %v629, %v628
      %v696 = vpack.c.b16 %v631, %v630
      %v697 = vpack.c.b16 %v633, %v632
      %v698 = vpack.c.b16 %v635, %v634
      %v699 = vpack.c.b16 %v637, %v636
      %v700 = vpack.c.b16 %v639, %v638
      %v701 = vpack.c.b16 %v641, %v640
      %v702 = vpack.c.b16 %v643, %v642
      %v703 = vpack.c.b16 %v645, %v644
      %v704 = vpack.c.b16 %v647, %v646
      %v705 = vpack.c.b16 %v649, %v648
      %v706 = vpack.c.b16 %v651, %v650
      %v707 = vpack.c.b16 %v653, %v652
      %v708 = vpack.c.b16 %v655, %v654
      %v709 = vpack.c.b16 %v657, %v656
      %v710 = vpack.c.b16 %v659, %v658
      %v711 = vpack.c.b16 %v661, %v660
      %v712 = vpack.c.b16 %v663, %v662
      %v713 = vpack.c.b16 %v665, %v664
      %762 = vmatprep.subr.bf16.mxu0 0
      %763 = vmatpush1.bf16.msra.mxu0 %v666
      %764 = vmatprep.subr.bf16.mxu0 0
      %765 = vmatpush1.bf16.msra.mxu0 %v667
      %766 = vmatprep.subr.bf16.mxu0 0
      %767 = vmatpush1.bf16.msra.mxu0 %v668
      %768 = vmatprep.subr.bf16.mxu0 0
      %769 = vmatpush1.bf16.msra.mxu0 %v669
      %770 = vmatprep.subr.bf16.mxu0 0
      %771 = vmatpush1.bf16.msra.mxu0 %v670
      %772 = vmatprep.subr.bf16.mxu0 0
      %773 = vmatpush1.bf16.msra.mxu0 %v671
      %774 = vmatprep.subr.bf16.mxu0 0
      %775 = vmatpush1.bf16.msra.mxu0 %v672
      %776 = vmatprep.subr.bf16.mxu0 0
      %777 = vmatpush1.bf16.msra.mxu0 %v673
      %778 = vmatprep.subr.bf16.mxu0 0
      %779 = vmatpush1.bf16.msra.mxu0 %v674
      %780 = vmatprep.subr.bf16.mxu0 0
      %781 = vmatpush1.bf16.msra.mxu0 %v675
      %782 = vmatprep.subr.bf16.mxu0 0
      %783 = vmatpush1.bf16.msra.mxu0 %v676
      %784 = vmatprep.subr.bf16.mxu0 0
      %785 = vmatpush1.bf16.msra.mxu0 %v677
      %786 = vmatprep.subr.bf16.mxu0 0
      %787 = vmatpush1.bf16.msra.mxu0 %v678
      %788 = vmatprep.subr.bf16.mxu0 0
      %789 = vmatpush1.bf16.msra.mxu0 %v679
      %790 = vmatprep.subr.bf16.mxu0 0
      %791 = vmatpush1.bf16.msra.mxu0 %v680
      %792 = vmatprep.subr.bf16.mxu0 0
      %793 = vmatpush1.bf16.msra.mxu0 %v681
      %794 = vmatprep.mubr.bf16.mxu0 %v463
      %795 = vmatmul.mubr.bf16.gmra.mrb[0].mxu0 %v462
      %v796 = vpop.f32.mrb[0].mxu0
      %v797 = vadd.f32 %v442, %v796
      %v798 = vpop.f32.mrb[0].mxu0
      %v799 = vpop.f32.mrb[0].mxu0
      %v800 = vadd.f32 %v442, %v799
      %v801 = vpop.f32.mrb[0].mxu0
      %802 = vdwg.mxu0
      %803 = vmatprep.subr.bf16.mxu0 0
      %804 = vmatpush1.bf16.msra.mxu0 %v682
      %805 = vmatprep.subr.bf16.mxu0 0
      %806 = vmatpush1.bf16.msra.mxu0 %v683
      %807 = vmatprep.subr.bf16.mxu0 0
      %808 = vmatpush1.bf16.msra.mxu0 %v684
      %809 = vmatprep.subr.bf16.mxu0 0
      %810 = vmatpush1.bf16.msra.mxu0 %v685
      %811 = vmatprep.subr.bf16.mxu0 0
      %812 = vmatpush1.bf16.msra.mxu0 %v686
      %813 = vmatprep.subr.bf16.mxu0 0
      %814 = vmatpush1.bf16.msra.mxu0 %v687
      %815 = vmatprep.subr.bf16.mxu0 0
      %816 = vmatpush1.bf16.msra.mxu0 %v688
      %817 = vmatprep.subr.bf16.mxu0 0
      %818 = vmatpush1.bf16.msra.mxu0 %v689
      %819 = vmatprep.subr.bf16.mxu0 0
      %820 = vmatpush1.bf16.msra.mxu0 %v690
      %821 = vmatprep.subr.bf16.mxu0 0
      %822 = vmatpush1.bf16.msra.mxu0 %v691
      %823 = vmatprep.subr.bf16.mxu0 0
      %824 = vmatpush1.bf16.msra.mxu0 %v692
      %825 = vmatprep.subr.bf16.mxu0 0
      %826 = vmatpush1.bf16.msra.mxu0 %v693
      %827 = vmatprep.subr.bf16.mxu0 0
      %828 = vmatpush1.bf16.msra.mxu0 %v694
      %829 = vmatprep.subr.bf16.mxu0 0
      %830 = vmatpush1.bf16.msra.mxu0 %v695
      %831 = vmatprep.subr.bf16.mxu0 0
      %832 = vmatpush1.bf16.msra.mxu0 %v696
      %833 = vmatprep.subr.bf16.mxu0 0
      %834 = vmatpush1.bf16.msra.mxu0 %v697
      %835 = vmatprep.mubr.bf16.mxu0 %v465
      %836 = vmatmul.mubr.bf16.gmra.mrb[0].mxu0 %v464
      %v837 = vpop.f32.mrb[0].mxu0
      %v838 = vadd.f32 %v797, %v837
      %v839 = vpop.f32.mrb[0].mxu0
      %v840 = vpop.f32.mrb[0].mxu0
      %v841 = vadd.f32 %v800, %v840
      %v842 = vpop.f32.mrb[0].mxu0
      %843 = vdwg.mxu0
      %844 = vmatprep.subr.bf16.mxu0 0
      %845 = vmatpush1.bf16.msra.mxu0 %v698
      %846 = vmatprep.subr.bf16.mxu0 0
      %847 = vmatpush1.bf16.msra.mxu0 %v699
      %848 = vmatprep.subr.bf16.mxu0 0
      %849 = vmatpush1.bf16.msra.mxu0 %v700
      %850 = vmatprep.subr.bf16.mxu0 0
      %851 = vmatpush1.bf16.msra.mxu0 %v701
      %852 = vmatprep.subr.bf16.mxu0 0
      %853 = vmatpush1.bf16.msra.mxu0 %v702
      %854 = vmatprep.subr.bf16.mxu0 0
      %855 = vmatpush1.bf16.msra.mxu0 %v703
      %856 = vmatprep.subr.bf16.mxu0 0
      %857 = vmatpush1.bf16.msra.mxu0 %v704
      %858 = vmatprep.subr.bf16.mxu0 0
      %859 = vmatpush1.bf16.msra.mxu0 %v705
      %860 = vmatprep.subr.bf16.mxu0 0
      %861 = vmatpush1.bf16.msra.mxu0 %v706
      %862 = vmatprep.subr.bf16.mxu0 0
      %863 = vmatpush1.bf16.msra.mxu0 %v707
      %864 = vmatprep.subr.bf16.mxu0 0
      %865 = vmatpush1.bf16.msra.mxu0 %v708
      %866 = vmatprep.subr.bf16.mxu0 0
      %867 = vmatpush1.bf16.msra.mxu0 %v709
      %868 = vmatprep.subr.bf16.mxu0 0
      %869 = vmatpush1.bf16.msra.mxu0 %v710
      %870 = vmatprep.subr.bf16.mxu0 0
      %871 = vmatpush1.bf16.msra.mxu0 %v711
      %872 = vmatprep.subr.bf16.mxu0 0
      %873 = vmatpush1.bf16.msra.mxu0 %v712
      %874 = vmatprep.subr.bf16.mxu0 0
      %875 = vmatpush1.bf16.msra.mxu0 %v713
      %876 = vmatprep.mubr.bf16.mxu0 %v467
      %877 = vmatmul.mubr.bf16.gmra.mrb[0].mxu0 %v466
      %v878 = vpop.f32.mrb[0].mxu0
      %v879 = vadd.f32 %v838, %v878
      %v880 = vpop.f32.mrb[0].mxu0
      %v881 = vpop.f32.mrb[0].mxu0
      %v882 = vadd.f32 %v841, %v881
      %v883 = vpop.f32.mrb[0].mxu0
      %884 = vdwg.mxu0
      %v887 = vrot.slane %v879, 4
      %v888 = vrot.slane %v882, 4
      %v889 = vsel %vm441, %v887, %v888
      %v893 = vsel %vm441, %v443, %v887
      %v894 = vld [vmem:[%s2] ss:$0 sm:$0xff]
      %v895 = vld [vmem:[%s2 + $0x1] ss:$0 sm:$0xff]
      %vm896 = vcmask 523264
      %v897 = vsel %vm896, %v893, 0.0
      %898 = vadd.xlane.f32.xlu0 %v897
      %v899 = vpop.xlane.xlu0 %898
      %v900 = vsel %vm896, %v889, 0.0
      %901 = vadd.xlane.f32.xlu0 %v900
      %v902 = vpop.xlane.xlu0 %901
      %vm903 = vcmask 519168
      %v904 = vsel %vm903, %v888, 0.0
      %905 = vadd.xlane.f32.xlu0 %v904
      %v906 = vpop.xlane.xlu0 %905
      %v907 = vrcp.pop 64.0
      %v908 = vmul.f32 %v899, %v907
      %v909 = vmul.f32 %v902, %v907
      %v910 = vmul.f32 %v906, %v907
      %v911 = vsub.f32 %v893, %v908
      %v912 = vsub.f32 %v889, %v909
      %v913 = vsub.f32 %v888, %v910
      %v914 = vmul.f32 %v911, %v911
      %v915 = vmul.f32 %v912, %v912
      %v916 = vmul.f32 %v913, %v913
      %v917 = vsel %vm896, %v914, 0.0
      %918 = vadd.xlane.f32.xlu0 %v917
      %v919 = vpop.xlane.xlu0 %918
      %v920 = vsel %vm896, %v915, 0.0
      %921 = vadd.xlane.f32.xlu0 %v920
      %v922 = vpop.xlane.xlu0 %921
      %v923 = vsel %vm903, %v916, 0.0
      %924 = vadd.xlane.f32.xlu0 %v923
      %v925 = vpop.xlane.xlu0 %924
      %v926 = vmul.f32 %v919, %v907
      %v927 = vmul.f32 %v922, %v907
      %v928 = vmul.f32 %v925, %v907
      %v929 = vadd.f32 %v926, 1e-06
      %v930 = vadd.f32 %v927, 1e-06
      %v931 = vadd.f32 %v928, 1e-06
      %v932 = vrsqrt.pop %v929
      %v933 = vrsqrt.pop %v930
      %v934 = vrsqrt.pop %v931
      %v935 = vmul.f32 %v911, %v932
      %v936 = vmul.f32 %v912, %v933
      %v937 = vmul.f32 %v913, %v934
      %v938 = vmul.f32 %v935, %v894
      %v939 = vmul.f32 %v936, %v894
      %v940 = vmul.f32 %v937, %v894
      %v941 = vadd.f32 %v938, %v895
      %v942 = vadd.f32 %v939, %v895
      %v943 = vadd.f32 %v940, %v895
      %v944 = vpack.c.bf16 %v942, %v941
      %v945 = vpack.c.bf16 %v943, %v943
      %v946 = vld [vmem:[%s4] sm:$0xff]
      %v947 = vld [vmem:[%s4 + $0x8] sm:$0xff]
      %v948 = vld [vmem:[%s4 + $0x10] sm:$0xff]
      %v949 = vld [vmem:[%s4 + $0x18] sm:$0xff]
      %v950 = vld [vmem:[%s4 + $0x20] sm:$0xff]
      %v951 = vld [vmem:[%s4 + $0x28] sm:$0xff]
      %v952 = vld [vmem:[%s4 + $0x30] sm:$0xff]
      %v953 = vld [vmem:[%s4 + $0x38] sm:$0xff]
      %s954 = scalar_lea.vmem %s2, 2
      %v955 = vld [vmem:[%s954] ss:$8 sm:$0x3]
      %v957 = vlaneseq
      %v958 = vshrl.u32 %v957, 7
      %v959 = vsub.s32 0, %v958
      %v960 = vrot.slane %v955, %v959
      %v961 = vlaneseq
      %v962 = vshrl.u32 %v961, 7
      %v963 = vsub.s32 1, %v962
      %v964 = vrot.slane %v955, %v963
      %v975 = vunpack.c.l.b16 %v946
      %v976 = vunpack.c.h.b16 %v946
      %v977 = vunpack.c.l.b16 %v947
      %v978 = vunpack.c.h.b16 %v947
      %v979 = vunpack.c.l.b16 %v948
      %v980 = vunpack.c.h.b16 %v948
      %v981 = vunpack.c.l.b16 %v949
      %v982 = vunpack.c.h.b16 %v949
      %v983 = vunpack.c.l.b16 %v950
      %v984 = vunpack.c.h.b16 %v950
      %v985 = vunpack.c.l.b16 %v951
      %v986 = vunpack.c.h.b16 %v951
      %v987 = vunpack.c.l.b16 %v952
      %v988 = vunpack.c.h.b16 %v952
      %v989 = vunpack.c.l.b16 %v953
      %v990 = vunpack.c.h.b16 %v953
      %v991 = vpack.c.b16 %v977, %v975
      %v992 = vpack.c.b16 %v978, %v976
      %v993 = vpack.c.b16 %v981, %v979
      %v994 = vpack.c.b16 %v982, %v980
      %v995 = vpack.c.b16 %v985, %v983
      %v996 = vpack.c.b16 %v986, %v984
      %v997 = vpack.c.b16 %v989, %v987
      %v998 = vpack.c.b16 %v990, %v988
      %v1008 = vsel %vm896, %v944, 0
      %v1011 = vsel %vm896, %v945, 0
      %1013 = vmatprep.subr.bf16.mxu0 %v992
      %1014 = vmatpush1.bf16.msra.mxu0 %v991
      %1015 = vmatprep.subr.bf16.mxu0 %v994
      %1016 = vmatpush1.bf16.msra.mxu0 %v993
      %1017 = vmatprep.subr.bf16.mxu0 %v996
      %1018 = vmatpush1.bf16.msra.mxu0 %v995
      %1019 = vmatprep.subr.bf16.mxu0 %v998
      %1020 = vmatpush1.bf16.msra.mxu0 %v997
      %1021 = vmatprep.subr.bf16.mxu0 0
      %1022 = vmatpush1.bf16.msra.mxu0 0
      %1023 = vmatprep.subr.bf16.mxu0 0
      %1024 = vmatpush1.bf16.msra.mxu0 0
      %1025 = vmatprep.subr.bf16.mxu0 0
      %1026 = vmatpush1.bf16.msra.mxu0 0
      %1027 = vmatprep.subr.bf16.mxu0 0
      %1028 = vmatpush1.bf16.msra.mxu0 0
      %1029 = vmatprep.subr.bf16.mxu0 0
      %1030 = vmatpush1.bf16.msra.mxu0 0
      %1031 = vmatprep.subr.bf16.mxu0 0
      %1032 = vmatpush1.bf16.msra.mxu0 0
      %1033 = vmatprep.subr.bf16.mxu0 0
      %1034 = vmatpush1.bf16.msra.mxu0 0
      %1035 = vmatprep.subr.bf16.mxu0 0
      %1036 = vmatpush1.bf16.msra.mxu0 0
      %1037 = vmatprep.subr.bf16.mxu0 0
      %1038 = vmatpush1.bf16.msra.mxu0 0
      %1039 = vmatprep.subr.bf16.mxu0 0
      %1040 = vmatpush1.bf16.msra.mxu0 0
      %1041 = vmatprep.subr.bf16.mxu0 0
      %1042 = vmatpush1.bf16.msra.mxu0 0
      %1043 = vmatprep.subr.bf16.mxu0 0
      %1044 = vmatpush1.bf16.msra.mxu0 0
      %1045 = vmatprep.mubr.bf16.mxu0 0
      %1046 = vmatmul.mubr.bf16.gmra.mrb[0].mxu0 %v1008
      %v1047 = vpop.f32.mrb[0].mxu0
      %v1048 = vadd.f32 %v960, %v1047
      %v1049 = vpop.f32.mrb[0].mxu0
      %v1050 = vadd.f32 %v964, %v1049
      %v1051 = vpop.f32.mrb[0].mxu0
      %v1052 = vadd.f32 %v960, %v1051
      %v1053 = vpop.f32.mrb[0].mxu0
      %v1054 = vadd.f32 %v964, %v1053
      %1055 = vmatprep.mubr.bf16.mxu0 0
      %1056 = vmatmul.mubr.bf16.gmra.mrb[0].mxu0 %v1011
      %v1057 = vpop.f32.mrb[0].mxu0
      %v1058 = vadd.f32 %v960, %v1057
      %v1059 = vpop.f32.mrb[0].mxu0
      %v1060 = vadd.f32 %v964, %v1059
      %v1061 = vpop.f32.mrb[0].mxu0
      %v1062 = vpop.f32.mrb[0].mxu0
      %1063 = vdwg.mxu0
      %v1064 = vld [vmem:[%s2 + $0x3] ss:$0 sm:$0xff]
      %v1065 = vpack.c.bf16 %v1052, %v1048
      %v1066 = vpack.c.bf16 %v1058, %v1058
      %v1067 = vpack.c.bf16 %v1054, %v1050
      %v1068 = vpack.c.bf16 %v1060, %v1060
      %1071 = vrot.lane.b32.xlu0 %v1065, 64
      %v1072 = vpop.permute.xlu0 %1071
      %1073 = vrot.lane.b32.xlu0 %v1066, 64
      %v1074 = vpop.permute.xlu0 %1073
      %vm1075 = vcmask 130048
      %v1077 = vsel %vm1075, %v1065, 0
      %v1080 = vsel %vm1075, %v1066, 0
      %v1083 = vsel %vm1075, %v1072, 0
      %v1086 = vsel %vm1075, %v1074, 0
      %1088 = vmatprep.subr.bf16.mxu0 0
      %1089 = vmatpush1.bf16.xpose.msra.mxu0 %v1083
      %1090 = vmatprep.subr.bf16.mxu0 0
      %1091 = vmatpush1.bf16.xpose.msra.mxu0 %v1086
      %1092 = vmatprep.subr.bf16.mxu0 0
      %1093 = vmatpush1.bf16.xpose.msra.mxu0 0
      %1094 = vmatprep.subr.bf16.mxu0 0
      %1095 = vmatpush1.bf16.xpose.msra.mxu0 0
      %1096 = vmatprep.subr.bf16.mxu0 0
      %1097 = vmatpush1.bf16.xpose.msra.mxu0 0
      %1098 = vmatprep.subr.bf16.mxu0 0
      %1099 = vmatpush1.bf16.xpose.msra.mxu0 0
      %1100 = vmatprep.subr.bf16.mxu0 0
      %1101 = vmatpush1.bf16.xpose.msra.mxu0 0
      %1102 = vmatprep.subr.bf16.mxu0 0
      %1103 = vmatpush1.bf16.xpose.msra.mxu0 0
      %1104 = vmatprep.subr.bf16.mxu0 0
      %1105 = vmatpush1.bf16.xpose.msra.mxu0 0
      %1106 = vmatprep.subr.bf16.mxu0 0
      %1107 = vmatpush1.bf16.xpose.msra.mxu0 0
      %1108 = vmatprep.subr.bf16.mxu0 0
      %1109 = vmatpush1.bf16.xpose.msra.mxu0 0
      %1110 = vmatprep.subr.bf16.mxu0 0
      %1111 = vmatpush1.bf16.xpose.msra.mxu0 0
      %1112 = vmatprep.subr.bf16.mxu0 0
      %1113 = vmatpush1.bf16.xpose.msra.mxu0 0
      %1114 = vmatprep.subr.bf16.mxu0 0
      %1115 = vmatpush1.bf16.xpose.msra.mxu0 0
      %1116 = vmatprep.subr.bf16.mxu0 0
      %1117 = vmatpush1.bf16.xpose.msra.mxu0 0
      %1118 = vmatprep.subr.bf16.mxu0 0
      %1119 = vmatpush1.bf16.xpose.msra.mxu0 0
      %1120 = vmatprep.mubr.bf16.mxu0 0
      %1121 = vmatmul.mubr.bf16.gmra.mrb[0].mxu0 %v1077
      %v1122 = vpop.f32.mrb[0].mxu0
      %v1123 = vadd.f32 0.0, %v1122
      %v1124 = vpop.f32.mrb[0].mxu0
      %v1125 = vpop.f32.mrb[0].mxu0
      %v1126 = vadd.f32 0.0, %v1125
      %v1127 = vpop.f32.mrb[0].mxu0
      %1128 = vmatprep.mubr.bf16.mxu0 0
      %1129 = vmatmul.mubr.bf16.gmra.mrb[0].mxu0 %v1080
      %v1130 = vpop.f32.mrb[0].mxu0
      %v1131 = vadd.f32 0.0, %v1130
      %v1132 = vpop.f32.mrb[0].mxu0
      %v1133 = vpop.f32.mrb[0].mxu0
      %v1134 = vpop.f32.mrb[0].mxu0
      %1135 = vdwg.mxu0
      %v1136 = vmul.f32 %v1123, 0.25
      %v1137 = vmul.f32 %v1126, 0.25
      %v1138 = vmul.f32 %v1131, 0.25
      %v1139 = vadd.f32 %v1136, %v332
      %v1140 = vadd.f32 %v1137, %v333
      %v1141 = vadd.f32 %v1138, %v334
      %vm1142 = vcmask 162816
      %v1143 = vsel %vm1142, %v1139, -inf
      %1144 = vmax.xlane.f32.xlu0 %v1143
      %v1145 = vpop.xlane.xlu0 %1144
      %v1146 = vsel %vm1142, %v1140, -inf
      %1147 = vmax.xlane.f32.xlu0 %v1146
      %v1148 = vpop.xlane.xlu0 %1147
      %vm1149 = vcmask 158720
      %v1150 = vsel %vm1149, %v1141, -inf
      %1151 = vmax.xlane.f32.xlu0 %v1150
      %v1152 = vpop.xlane.xlu0 %1151
      %v1153 = vsub.f32 %v1139, %v1145
      %v1154 = vsub.f32 %v1140, %v1148
      %v1155 = vsub.f32 %v1141, %v1152
      %v1156 = vmul.f32 %v1153, 1.442695
      %v1157 = vpow.pop %v1156
      %v1158 = vmul.f32 %v1154, 1.442695
      %v1159 = vpow.pop %v1158
      %v1160 = vmul.f32 %v1155, 1.442695
      %v1161 = vpow.pop %v1160
      %v1162 = vsel %vm1142, %v1157, 0.0
      %1163 = vadd.xlane.f32.xlu0 %v1162
      %v1164 = vpop.xlane.xlu0 %1163
      %v1165 = vsel %vm1142, %v1159, 0.0
      %1166 = vadd.xlane.f32.xlu0 %v1165
      %v1167 = vpop.xlane.xlu0 %1166
      %v1168 = vsel %vm1149, %v1161, 0.0
      %1169 = vadd.xlane.f32.xlu0 %v1168
      %v1170 = vpop.xlane.xlu0 %1169
      %v1171 = vrcp.pop %v1164
      %v1172 = vrcp.pop %v1167
      %v1173 = vrcp.pop %v1170
      %v1174 = vmul.f32 %v1157, %v1171
      %v1175 = vmul.f32 %v1159, %v1172
      %v1176 = vmul.f32 %v1161, %v1173
      %v1177 = vpack.c.bf16 %v1175, %v1174
      %v1178 = vpack.c.bf16 %v1176, %v1176
      %v1180 = vsel %vm1142, %v1177, 0
      %v1183 = vsel %vm1142, %v1178, 0
      %vm1185 = vcmask 1041408
      %v1187 = vsel %vm1185, %v1068, 0
      %1189 = vmatprep.subr.bf16.mxu0 0
      %1190 = vmatpush1.bf16.msra.mxu0 %v1067
      %1191 = vmatprep.subr.bf16.mxu0 0
      %1192 = vmatpush1.bf16.msra.mxu0 %v1187
      %1193 = vmatprep.subr.bf16.mxu0 0
      %1194 = vmatpush1.bf16.msra.mxu0 0
      %1195 = vmatprep.subr.bf16.mxu0 0
      %1196 = vmatpush1.bf16.msra.mxu0 0
      %1197 = vmatprep.subr.bf16.mxu0 0
      %1198 = vmatpush1.bf16.msra.mxu0 0
      %1199 = vmatprep.subr.bf16.mxu0 0
      %1200 = vmatpush1.bf16.msra.mxu0 0
      %1201 = vmatprep.subr.bf16.mxu0 0
      %1202 = vmatpush1.bf16.msra.mxu0 0
      %1203 = vmatprep.subr.bf16.mxu0 0
      %1204 = vmatpush1.bf16.msra.mxu0 0
      %1205 = vmatprep.subr.bf16.mxu0 0
      %1206 = vmatpush1.bf16.msra.mxu0 0
      %1207 = vmatprep.subr.bf16.mxu0 0
      %1208 = vmatpush1.bf16.msra.mxu0 0
      %1209 = vmatprep.subr.bf16.mxu0 0
      %1210 = vmatpush1.bf16.msra.mxu0 0
      %1211 = vmatprep.subr.bf16.mxu0 0
      %1212 = vmatpush1.bf16.msra.mxu0 0
      %1213 = vmatprep.subr.bf16.mxu0 0
      %1214 = vmatpush1.bf16.msra.mxu0 0
      %1215 = vmatprep.subr.bf16.mxu0 0
      %1216 = vmatpush1.bf16.msra.mxu0 0
      %1217 = vmatprep.subr.bf16.mxu0 0
      %1218 = vmatpush1.bf16.msra.mxu0 0
      %1219 = vmatprep.subr.bf16.mxu0 0
      %1220 = vmatpush1.bf16.msra.mxu0 0
      %1221 = vmatprep.mubr.bf16.mxu0 0
      %1222 = vmatmul.mubr.bf16.gmra.mrb[0].mxu0 %v1180
      %v1223 = vpop.f32.mrb[0].mxu0
      %v1224 = vadd.f32 0.0, %v1223
      %v1225 = vpop.f32.mrb[0].mxu0
      %v1226 = vpop.f32.mrb[0].mxu0
      %v1227 = vadd.f32 0.0, %v1226
      %v1228 = vpop.f32.mrb[0].mxu0
      %1229 = vmatprep.mubr.bf16.mxu0 0
      %1230 = vmatmul.mubr.bf16.gmra.mrb[0].mxu0 %v1183
      %v1231 = vpop.f32.mrb[0].mxu0
      %v1232 = vadd.f32 0.0, %v1231
      %v1233 = vpop.f32.mrb[0].mxu0
      %v1234 = vpop.f32.mrb[0].mxu0
      %v1235 = vpop.f32.mrb[0].mxu0
      %1236 = vdwg.mxu0
      %v1237 = vpack.c.bf16 %v1227, %v1224
      %v1238 = vpack.c.bf16 %v1232, %v1232
      %v1239 = vld [vmem:[%s5] sm:$0xf]
      %v1240 = vld [vmem:[%s5 + $0x4] sm:$0xf]
      %v1243 = vunpack.c.l.b16 %v1239
      %v1244 = vunpack.c.l.b16 %v1240
      %v1245 = vpack.c.b16 %v1244, %v1243
      %v1248 = vsel %vm1075, %v1237, 0
      %v1251 = vsel %vm1075, %v1238, 0
      %1253 = vmatprep.subr.bf16.mxu0 0
      %1254 = vmatpush1.bf16.msra.mxu0 %v1245
      %1255 = vmatprep.subr.bf16.mxu0 0
      %1256 = vmatpush1.bf16.msra.mxu0 0
      %1257 = vmatprep.subr.bf16.mxu0 0
      %1258 = vmatpush1.bf16.msra.mxu0 0
      %1259 = vmatprep.subr.bf16.mxu0 0
      %1260 = vmatpush1.bf16.msra.mxu0 0
      %1261 = vmatprep.subr.bf16.mxu0 0
      %1262 = vmatpush1.bf16.msra.mxu0 0
      %1263 = vmatprep.subr.bf16.mxu0 0
      %1264 = vmatpush1.bf16.msra.mxu0 0
      %1265 = vmatprep.subr.bf16.mxu0 0
      %1266 = vmatpush1.bf16.msra.mxu0 0
      %1267 = vmatprep.subr.bf16.mxu0 0
      %1268 = vmatpush1.bf16.msra.mxu0 0
      %1269 = vmatprep.subr.bf16.mxu0 0
      %1270 = vmatpush1.bf16.msra.mxu0 0
      %1271 = vmatprep.subr.bf16.mxu0 0
      %1272 = vmatpush1.bf16.msra.mxu0 0
      %1273 = vmatprep.subr.bf16.mxu0 0
      %1274 = vmatpush1.bf16.msra.mxu0 0
      %1275 = vmatprep.subr.bf16.mxu0 0
      %1276 = vmatpush1.bf16.msra.mxu0 0
      %1277 = vmatprep.subr.bf16.mxu0 0
      %1278 = vmatpush1.bf16.msra.mxu0 0
      %1279 = vmatprep.subr.bf16.mxu0 0
      %1280 = vmatpush1.bf16.msra.mxu0 0
      %1281 = vmatprep.subr.bf16.mxu0 0
      %1282 = vmatpush1.bf16.msra.mxu0 0
      %1283 = vmatprep.subr.bf16.mxu0 0
      %1284 = vmatpush1.bf16.msra.mxu0 0
      %1285 = vmatprep.mubr.bf16.mxu0 0
      %1286 = vmatmul.mubr.bf16.gmra.mrb[0].mxu0 %v1248
      %v1287 = vpop.f32.mrb[0].mxu0
      %v1288 = vadd.f32 0.0, %v1287
      %v1289 = vpop.f32.mrb[0].mxu0
      %v1290 = vpop.f32.mrb[0].mxu0
      %v1291 = vadd.f32 0.0, %v1290
      %v1292 = vpop.f32.mrb[0].mxu0
      %1293 = vmatprep.mubr.bf16.mxu0 0
      %1294 = vmatmul.mubr.bf16.gmra.mrb[0].mxu0 %v1251
      %v1295 = vpop.f32.mrb[0].mxu0
      %v1296 = vadd.f32 0.0, %v1295
      %v1297 = vpop.f32.mrb[0].mxu0
      %v1298 = vpop.f32.mrb[0].mxu0
      %v1299 = vpop.f32.mrb[0].mxu0
      %1300 = vdwg.mxu0
      %v1301 = vadd.f32 %v1064, %v1288
      %v1302 = vadd.f32 %v1064, %v1291
      %v1303 = vadd.f32 %v1064, %v1296
      %1304 = vrot.lane.b32.xlu0 %v1065, 112
      %v1305 = vpop.permute.xlu0 %1304
      %1306 = vrot.lane.b32.xlu0 %v1066, 112
      %v1307 = vpop.permute.xlu0 %1306
      %1308 = vrot.lane.b32.xlu0 %v1065, 48
      %v1309 = vpop.permute.xlu0 %1308
      %1310 = vrot.lane.b32.xlu0 %v1066, 48
      %v1311 = vpop.permute.xlu0 %1310
      %v1313 = vsel %vm1075, %v1305, 0
      %v1316 = vsel %vm1075, %v1307, 0
      %v1319 = vsel %vm1075, %v1309, 0
      %v1322 = vsel %vm1075, %v1311, 0
      %1324 = vmatprep.subr.bf16.mxu0 0
      %1325 = vmatpush1.bf16.xpose.msra.mxu0 %v1319
      %1326 = vmatprep.subr.bf16.mxu0 0
      %1327 = vmatpush1.bf16.xpose.msra.mxu0 %v1322
      %1328 = vmatprep.subr.bf16.mxu0 0
      %1329 = vmatpush1.bf16.xpose.msra.mxu0 0
      %1330 = vmatprep.subr.bf16.mxu0 0
      %1331 = vmatpush1.bf16.xpose.msra.mxu0 0
      %1332 = vmatprep.subr.bf16.mxu0 0
      %1333 = vmatpush1.bf16.xpose.msra.mxu0 0
      %1334 = vmatprep.subr.bf16.mxu0 0
      %1335 = vmatpush1.bf16.xpose.msra.mxu0 0
      %1336 = vmatprep.subr.bf16.mxu0 0
      %1337 = vmatpush1.bf16.xpose.msra.mxu0 0
      %1338 = vmatprep.subr.bf16.mxu0 0
      %1339 = vmatpush1.bf16.xpose.msra.mxu0 0
      %1340 = vmatprep.subr.bf16.mxu0 0
      %1341 = vmatpush1.bf16.xpose.msra.mxu0 0
      %1342 = vmatprep.subr.bf16.mxu0 0
      %1343 = vmatpush1.bf16.xpose.msra.mxu0 0
      %1344 = vmatprep.subr.bf16.mxu0 0
      %1345 = vmatpush1.bf16.xpose.msra.mxu0 0
      %1346 = vmatprep.subr.bf16.mxu0 0
      %1347 = vmatpush1.bf16.xpose.msra.mxu0 0
      %1348 = vmatprep.subr.bf16.mxu0 0
      %1349 = vmatpush1.bf16.xpose.msra.mxu0 0
      %1350 = vmatprep.subr.bf16.mxu0 0
      %1351 = vmatpush1.bf16.xpose.msra.mxu0 0
      %1352 = vmatprep.subr.bf16.mxu0 0
      %1353 = vmatpush1.bf16.xpose.msra.mxu0 0
      %1354 = vmatprep.subr.bf16.mxu0 0
      %1355 = vmatpush1.bf16.xpose.msra.mxu0 0
      %1356 = vmatprep.mubr.bf16.mxu0 0
      %1357 = vmatmul.mubr.bf16.gmra.mrb[0].mxu0 %v1313
      %v1358 = vpop.f32.mrb[0].mxu0
      %v1359 = vadd.f32 0.0, %v1358
      %v1360 = vpop.f32.mrb[0].mxu0
      %v1361 = vpop.f32.mrb[0].mxu0
      %v1362 = vadd.f32 0.0, %v1361
      %v1363 = vpop.f32.mrb[0].mxu0
      %1364 = vmatprep.mubr.bf16.mxu0 0
      %1365 = vmatmul.mubr.bf16.gmra.mrb[0].mxu0 %v1316
      %v1366 = vpop.f32.mrb[0].mxu0
      %v1367 = vadd.f32 0.0, %v1366
      %v1368 = vpop.f32.mrb[0].mxu0
      %v1369 = vpop.f32.mrb[0].mxu0
      %v1370 = vpop.f32.mrb[0].mxu0
      %1371 = vdwg.mxu0
      %v1372 = vmul.f32 %v1359, 0.25
      %v1373 = vmul.f32 %v1362, 0.25
      %v1374 = vmul.f32 %v1367, 0.25
      %v1375 = vadd.f32 %v1372, %v332
      %v1376 = vadd.f32 %v1373, %v333
      %v1377 = vadd.f32 %v1374, %v334
      %v1378 = vsel %vm1142, %v1375, -inf
      %1379 = vmax.xlane.f32.xlu0 %v1378
      %v1380 = vpop.xlane.xlu0 %1379
      %v1381 = vsel %vm1142, %v1376, -inf
      %1382 = vmax.xlane.f32.xlu0 %v1381
      %v1383 = vpop.xlane.xlu0 %1382
      %v1384 = vsel %vm1149, %v1377, -inf
      %1385 = vmax.xlane.f32.xlu0 %v1384
      %v1386 = vpop.xlane.xlu0 %1385
      %v1387 = vsub.f32 %v1375, %v1380
      %v1388 = vsub.f32 %v1376, %v1383
      %v1389 = vsub.f32 %v1377, %v1386
      %v1390 = vmul.f32 %v1387, 1.442695
      %v1391 = vpow.pop %v1390
      %v1392 = vmul.f32 %v1388, 1.442695
      %v1393 = vpow.pop %v1392
      %v1394 = vmul.f32 %v1389, 1.442695
      %v1395 = vpow.pop %v1394
      %v1396 = vsel %vm1142, %v1391, 0.0
      %1397 = vadd.xlane.f32.xlu0 %v1396
      %v1398 = vpop.xlane.xlu0 %1397
      %v1399 = vsel %vm1142, %v1393, 0.0
      %1400 = vadd.xlane.f32.xlu0 %v1399
      %v1401 = vpop.xlane.xlu0 %1400
      %v1402 = vsel %vm1149, %v1395, 0.0
      %1403 = vadd.xlane.f32.xlu0 %v1402
      %v1404 = vpop.xlane.xlu0 %1403
      %v1405 = vrcp.pop %v1398
      %v1406 = vrcp.pop %v1401
      %v1407 = vrcp.pop %v1404
      %v1408 = vmul.f32 %v1391, %v1405
      %v1409 = vmul.f32 %v1393, %v1406
      %v1410 = vmul.f32 %v1395, %v1407
      %v1411 = vpack.c.bf16 %v1409, %v1408
      %v1412 = vpack.c.bf16 %v1410, %v1410
      %1415 = vrot.lane.b32.xlu0 %v1067, 112
      %v1416 = vpop.permute.xlu0 %1415
      %1417 = vrot.lane.b32.xlu0 %v1068, 112
      %v1418 = vpop.permute.xlu0 %1417
      %v1421 = vsel %vm1142, %v1411, 0
      %v1424 = vsel %vm1142, %v1412, 0
      %v1427 = vsel %vm1185, %v1418, 0
      %1429 = vmatprep.subr.bf16.mxu0 0
      %1430 = vmatpush1.bf16.msra.mxu0 %v1416
      %1431 = vmatprep.subr.bf16.mxu0 0
      %1432 = vmatpush1.bf16.msra.mxu0 %v1427
      %1433 = vmatprep.subr.bf16.mxu0 0
      %1434 = vmatpush1.bf16.msra.mxu0 0
      %1435 = vmatprep.subr.bf16.mxu0 0
      %1436 = vmatpush1.bf16.msra.mxu0 0
      %1437 = vmatprep.subr.bf16.mxu0 0
      %1438 = vmatpush1.bf16.msra.mxu0 0
      %1439 = vmatprep.subr.bf16.mxu0 0
      %1440 = vmatpush1.bf16.msra.mxu0 0
      %1441 = vmatprep.subr.bf16.mxu0 0
      %1442 = vmatpush1.bf16.msra.mxu0 0
      %1443 = vmatprep.subr.bf16.mxu0 0
      %1444 = vmatpush1.bf16.msra.mxu0 0
      %1445 = vmatprep.subr.bf16.mxu0 0
      %1446 = vmatpush1.bf16.msra.mxu0 0
      %1447 = vmatprep.subr.bf16.mxu0 0
      %1448 = vmatpush1.bf16.msra.mxu0 0
      %1449 = vmatprep.subr.bf16.mxu0 0
      %1450 = vmatpush1.bf16.msra.mxu0 0
      %1451 = vmatprep.subr.bf16.mxu0 0
      %1452 = vmatpush1.bf16.msra.mxu0 0
      %1453 = vmatprep.subr.bf16.mxu0 0
      %1454 = vmatpush1.bf16.msra.mxu0 0
      %1455 = vmatprep.subr.bf16.mxu0 0
      %1456 = vmatpush1.bf16.msra.mxu0 0
      %1457 = vmatprep.subr.bf16.mxu0 0
      %1458 = vmatpush1.bf16.msra.mxu0 0
      %1459 = vmatprep.subr.bf16.mxu0 0
      %1460 = vmatpush1.bf16.msra.mxu0 0
      %1461 = vmatprep.mubr.bf16.mxu0 0
      %1462 = vmatmul.mubr.bf16.gmra.mrb[0].mxu0 %v1421
      %v1463 = vpop.f32.mrb[0].mxu0
      %v1464 = vadd.f32 0.0, %v1463
      %v1465 = vpop.f32.mrb[0].mxu0
      %v1466 = vpop.f32.mrb[0].mxu0
      %v1467 = vadd.f32 0.0, %v1466
      %v1468 = vpop.f32.mrb[0].mxu0
      %1469 = vmatprep.mubr.bf16.mxu0 0
      %1470 = vmatmul.mubr.bf16.gmra.mrb[0].mxu0 %v1424
      %v1471 = vpop.f32.mrb[0].mxu0
      %v1472 = vadd.f32 0.0, %v1471
      %v1473 = vpop.f32.mrb[0].mxu0
      %v1474 = vpop.f32.mrb[0].mxu0
      %v1475 = vpop.f32.mrb[0].mxu0
      %1476 = vdwg.mxu0
      %v1477 = vpack.c.bf16 %v1467, %v1464
      %v1478 = vpack.c.bf16 %v1472, %v1472
      %s1479 = scalar_lea.vmem %s5, 8
      %v1480 = vld [vmem:[%s1479] sm:$0xf]
      %v1481 = vld [vmem:[%s1479 + $0x4] sm:$0xf]
      %v1484 = vunpack.c.l.b16 %v1480
      %v1485 = vunpack.c.l.b16 %v1481
      %v1486 = vpack.c.b16 %v1485, %v1484
      %v1489 = vsel %vm1075, %v1477, 0
      %v1492 = vsel %vm1075, %v1478, 0
      %1494 = vmatprep.subr.bf16.mxu0 0
      %1495 = vmatpush1.bf16.msra.mxu0 %v1486
      %1496 = vmatprep.subr.bf16.mxu0 0
      %1497 = vmatpush1.bf16.msra.mxu0 0
      %1498 = vmatprep.subr.bf16.mxu0 0
      %1499 = vmatpush1.bf16.msra.mxu0 0
      %1500 = vmatprep.subr.bf16.mxu0 0
      %1501 = vmatpush1.bf16.msra.mxu0 0
      %1502 = vmatprep.subr.bf16.mxu0 0
      %1503 = vmatpush1.bf16.msra.mxu0 0
      %1504 = vmatprep.subr.bf16.mxu0 0
      %1505 = vmatpush1.bf16.msra.mxu0 0
      %1506 = vmatprep.subr.bf16.mxu0 0
      %1507 = vmatpush1.bf16.msra.mxu0 0
      %1508 = vmatprep.subr.bf16.mxu0 0
      %1509 = vmatpush1.bf16.msra.mxu0 0
      %1510 = vmatprep.subr.bf16.mxu0 0
      %1511 = vmatpush1.bf16.msra.mxu0 0
      %1512 = vmatprep.subr.bf16.mxu0 0
      %1513 = vmatpush1.bf16.msra.mxu0 0
      %1514 = vmatprep.subr.bf16.mxu0 0
      %1515 = vmatpush1.bf16.msra.mxu0 0
      %1516 = vmatprep.subr.bf16.mxu0 0
      %1517 = vmatpush1.bf16.msra.mxu0 0
      %1518 = vmatprep.subr.bf16.mxu0 0
      %1519 = vmatpush1.bf16.msra.mxu0 0
      %1520 = vmatprep.subr.bf16.mxu0 0
      %1521 = vmatpush1.bf16.msra.mxu0 0
      %1522 = vmatprep.subr.bf16.mxu0 0
      %1523 = vmatpush1.bf16.msra.mxu0 0
      %1524 = vmatprep.subr.bf16.mxu0 0
      %1525 = vmatpush1.bf16.msra.mxu0 0
      %1526 = vmatprep.mubr.bf16.mxu0 0
      %1527 = vmatmul.mubr.bf16.gmra.mrb[0].mxu0 %v1489
      %v1528 = vpop.f32.mrb[0].mxu0
      %v1529 = vadd.f32 0.0, %v1528
      %v1530 = vpop.f32.mrb[0].mxu0
      %v1531 = vpop.f32.mrb[0].mxu0
      %v1532 = vadd.f32 0.0, %v1531
      %v1533 = vpop.f32.mrb[0].mxu0
      %1534 = vmatprep.mubr.bf16.mxu0 0
      %1535 = vmatmul.mubr.bf16.gmra.mrb[0].mxu0 %v1492
      %v1536 = vpop.f32.mrb[0].mxu0
      %v1537 = vadd.f32 0.0, %v1536
      %v1538 = vpop.f32.mrb[0].mxu0
      %v1539 = vpop.f32.mrb[0].mxu0
      %v1540 = vpop.f32.mrb[0].mxu0
      %1541 = vdwg.mxu0
      %v1542 = vadd.f32 %v1301, %v1529
      %v1543 = vadd.f32 %v1302, %v1532
      %v1544 = vadd.f32 %v1303, %v1537
      %1545 = vrot.lane.b32.xlu0 %v1065, 96
      %v1546 = vpop.permute.xlu0 %1545
      %1547 = vrot.lane.b32.xlu0 %v1066, 96
      %v1548 = vpop.permute.xlu0 %1547
      %1549 = vrot.lane.b32.xlu0 %v1065, 32
      %v1550 = vpop.permute.xlu0 %1549
      %1551 = vrot.lane.b32.xlu0 %v1066, 32
      %v1552 = vpop.permute.xlu0 %1551
      %v1554 = vsel %vm1075, %v1546, 0
      %v1557 = vsel %vm1075, %v1548, 0
      %v1560 = vsel %vm1075, %v1550, 0
      %v1563 = vsel %vm1075, %v1552, 0
      %1565 = vmatprep.subr.bf16.mxu0 0
      %1566 = vmatpush1.bf16.xpose.msra.mxu0 %v1560
      %1567 = vmatprep.subr.bf16.mxu0 0
      %1568 = vmatpush1.bf16.xpose.msra.mxu0 %v1563
      %1569 = vmatprep.subr.bf16.mxu0 0
      %1570 = vmatpush1.bf16.xpose.msra.mxu0 0
      %1571 = vmatprep.subr.bf16.mxu0 0
      %1572 = vmatpush1.bf16.xpose.msra.mxu0 0
      %1573 = vmatprep.subr.bf16.mxu0 0
      %1574 = vmatpush1.bf16.xpose.msra.mxu0 0
      %1575 = vmatprep.subr.bf16.mxu0 0
      %1576 = vmatpush1.bf16.xpose.msra.mxu0 0
      %1577 = vmatprep.subr.bf16.mxu0 0
      %1578 = vmatpush1.bf16.xpose.msra.mxu0 0
      %1579 = vmatprep.subr.bf16.mxu0 0
      %1580 = vmatpush1.bf16.xpose.msra.mxu0 0
      %1581 = vmatprep.subr.bf16.mxu0 0
      %1582 = vmatpush1.bf16.xpose.msra.mxu0 0
      %1583 = vmatprep.subr.bf16.mxu0 0
      %1584 = vmatpush1.bf16.xpose.msra.mxu0 0
      %1585 = vmatprep.subr.bf16.mxu0 0
      %1586 = vmatpush1.bf16.xpose.msra.mxu0 0
      %1587 = vmatprep.subr.bf16.mxu0 0
      %1588 = vmatpush1.bf16.xpose.msra.mxu0 0
      %1589 = vmatprep.subr.bf16.mxu0 0
      %1590 = vmatpush1.bf16.xpose.msra.mxu0 0
      %1591 = vmatprep.subr.bf16.mxu0 0
      %1592 = vmatpush1.bf16.xpose.msra.mxu0 0
      %1593 = vmatprep.subr.bf16.mxu0 0
      %1594 = vmatpush1.bf16.xpose.msra.mxu0 0
      %1595 = vmatprep.subr.bf16.mxu0 0
      %1596 = vmatpush1.bf16.xpose.msra.mxu0 0
      %1597 = vmatprep.mubr.bf16.mxu0 0
      %1598 = vmatmul.mubr.bf16.gmra.mrb[0].mxu0 %v1554
      %v1599 = vpop.f32.mrb[0].mxu0
      %v1600 = vadd.f32 0.0, %v1599
      %v1601 = vpop.f32.mrb[0].mxu0
      %v1602 = vpop.f32.mrb[0].mxu0
      %v1603 = vadd.f32 0.0, %v1602
      %v1604 = vpop.f32.mrb[0].mxu0
      %1605 = vmatprep.mubr.bf16.mxu0 0
      %1606 = vmatmul.mubr.bf16.gmra.mrb[0].mxu0 %v1557
      %v1607 = vpop.f32.mrb[0].mxu0
      %v1608 = vadd.f32 0.0, %v1607
      %v1609 = vpop.f32.mrb[0].mxu0
      %v1610 = vpop.f32.mrb[0].mxu0
      %v1611 = vpop.f32.mrb[0].mxu0
      %1612 = vdwg.mxu0
      %v1613 = vmul.f32 %v1600, 0.25
      %v1614 = vmul.f32 %v1603, 0.25
      %v1615 = vmul.f32 %v1608, 0.25
      %v1616 = vadd.f32 %v1613, %v332
      %v1617 = vadd.f32 %v1614, %v333
      %v1618 = vadd.f32 %v1615, %v334
      %v1619 = vsel %vm1142, %v1616, -inf
      %1620 = vmax.xlane.f32.xlu0 %v1619
      %v1621 = vpop.xlane.xlu0 %1620
      %v1622 = vsel %vm1142, %v1617, -inf
      %1623 = vmax.xlane.f32.xlu0 %v1622
      %v1624 = vpop.xlane.xlu0 %1623
      %v1625 = vsel %vm1149, %v1618, -inf
      %1626 = vmax.xlane.f32.xlu0 %v1625
      %v1627 = vpop.xlane.xlu0 %1626
      %v1628 = vsub.f32 %v1616, %v1621
      %v1629 = vsub.f32 %v1617, %v1624
      %v1630 = vsub.f32 %v1618, %v1627
      %v1631 = vmul.f32 %v1628, 1.442695
      %v1632 = vpow.pop %v1631
      %v1633 = vmul.f32 %v1629, 1.442695
      %v1634 = vpow.pop %v1633
      %v1635 = vmul.f32 %v1630, 1.442695
      %v1636 = vpow.pop %v1635
      %v1637 = vsel %vm1142, %v1632, 0.0
      %1638 = vadd.xlane.f32.xlu0 %v1637
      %v1639 = vpop.xlane.xlu0 %1638
      %v1640 = vsel %vm1142, %v1634, 0.0
      %1641 = vadd.xlane.f32.xlu0 %v1640
      %v1642 = vpop.xlane.xlu0 %1641
      %v1643 = vsel %vm1149, %v1636, 0.0
      %1644 = vadd.xlane.f32.xlu0 %v1643
      %v1645 = vpop.xlane.xlu0 %1644
      %v1646 = vrcp.pop %v1639
      %v1647 = vrcp.pop %v1642
      %v1648 = vrcp.pop %v1645
      %v1649 = vmul.f32 %v1632, %v1646
      %v1650 = vmul.f32 %v1634, %v1647
      %v1651 = vmul.f32 %v1636, %v1648
      %v1652 = vpack.c.bf16 %v1650, %v1649
      %v1653 = vpack.c.bf16 %v1651, %v1651
      %1654 = vrot.lane.b32.xlu0 %v1067, 96
      %v1655 = vpop.permute.xlu0 %1654
      %1656 = vrot.lane.b32.xlu0 %v1068, 96
      %v1657 = vpop.permute.xlu0 %1656
      %v1660 = vsel %vm1142, %v1652, 0
      %v1663 = vsel %vm1142, %v1653, 0
      %v1666 = vsel %vm1185, %v1657, 0
      %1668 = vmatprep.subr.bf16.mxu0 0
      %1669 = vmatpush1.bf16.msra.mxu0 %v1655
      %1670 = vmatprep.subr.bf16.mxu0 0
      %1671 = vmatpush1.bf16.msra.mxu0 %v1666
      %1672 = vmatprep.subr.bf16.mxu0 0
      %1673 = vmatpush1.bf16.msra.mxu0 0
      %1674 = vmatprep.subr.bf16.mxu0 0
      %1675 = vmatpush1.bf16.msra.mxu0 0
      %1676 = vmatprep.subr.bf16.mxu0 0
      %1677 = vmatpush1.bf16.msra.mxu0 0
      %1678 = vmatprep.subr.bf16.mxu0 0
      %1679 = vmatpush1.bf16.msra.mxu0 0
      %1680 = vmatprep.subr.bf16.mxu0 0
      %1681 = vmatpush1.bf16.msra.mxu0 0
      %1682 = vmatprep.subr.bf16.mxu0 0
      %1683 = vmatpush1.bf16.msra.mxu0 0
      %1684 = vmatprep.subr.bf16.mxu0 0
      %1685 = vmatpush1.bf16.msra.mxu0 0
      %1686 = vmatprep.subr.bf16.mxu0 0
      %1687 = vmatpush1.bf16.msra.mxu0 0
      %1688 = vmatprep.subr.bf16.mxu0 0
      %1689 = vmatpush1.bf16.msra.mxu0 0
      %1690 = vmatprep.subr.bf16.mxu0 0
      %1691 = vmatpush1.bf16.msra.mxu0 0
      %1692 = vmatprep.subr.bf16.mxu0 0
      %1693 = vmatpush1.bf16.msra.mxu0 0
      %1694 = vmatprep.subr.bf16.mxu0 0
      %1695 = vmatpush1.bf16.msra.mxu0 0
      %1696 = vmatprep.subr.bf16.mxu0 0
      %1697 = vmatpush1.bf16.msra.mxu0 0
      %1698 = vmatprep.subr.bf16.mxu0 0
      %1699 = vmatpush1.bf16.msra.mxu0 0
      %1700 = vmatprep.mubr.bf16.mxu0 0
      %1701 = vmatmul.mubr.bf16.gmra.mrb[0].mxu0 %v1660
      %v1702 = vpop.f32.mrb[0].mxu0
      %v1703 = vadd.f32 0.0, %v1702
      %v1704 = vpop.f32.mrb[0].mxu0
      %v1705 = vpop.f32.mrb[0].mxu0
      %v1706 = vadd.f32 0.0, %v1705
      %v1707 = vpop.f32.mrb[0].mxu0
      %1708 = vmatprep.mubr.bf16.mxu0 0
      %1709 = vmatmul.mubr.bf16.gmra.mrb[0].mxu0 %v1663
      %v1710 = vpop.f32.mrb[0].mxu0
      %v1711 = vadd.f32 0.0, %v1710
      %v1712 = vpop.f32.mrb[0].mxu0
      %v1713 = vpop.f32.mrb[0].mxu0
      %v1714 = vpop.f32.mrb[0].mxu0
      %1715 = vdwg.mxu0
      %v1716 = vpack.c.bf16 %v1706, %v1703
      %v1717 = vpack.c.bf16 %v1711, %v1711
      %s1718 = scalar_lea.vmem %s5, 16
      %v1719 = vld [vmem:[%s1718] sm:$0xf]
      %v1720 = vld [vmem:[%s1718 + $0x4] sm:$0xf]
      %v1723 = vunpack.c.l.b16 %v1719
      %v1724 = vunpack.c.l.b16 %v1720
      %v1725 = vpack.c.b16 %v1724, %v1723
      %v1728 = vsel %vm1075, %v1716, 0
      %v1731 = vsel %vm1075, %v1717, 0
      %1733 = vmatprep.subr.bf16.mxu0 0
      %1734 = vmatpush1.bf16.msra.mxu0 %v1725
      %1735 = vmatprep.subr.bf16.mxu0 0
      %1736 = vmatpush1.bf16.msra.mxu0 0
      %1737 = vmatprep.subr.bf16.mxu0 0
      %1738 = vmatpush1.bf16.msra.mxu0 0
      %1739 = vmatprep.subr.bf16.mxu0 0
      %1740 = vmatpush1.bf16.msra.mxu0 0
      %1741 = vmatprep.subr.bf16.mxu0 0
      %1742 = vmatpush1.bf16.msra.mxu0 0
      %1743 = vmatprep.subr.bf16.mxu0 0
      %1744 = vmatpush1.bf16.msra.mxu0 0
      %1745 = vmatprep.subr.bf16.mxu0 0
      %1746 = vmatpush1.bf16.msra.mxu0 0
      %1747 = vmatprep.subr.bf16.mxu0 0
      %1748 = vmatpush1.bf16.msra.mxu0 0
      %1749 = vmatprep.subr.bf16.mxu0 0
      %1750 = vmatpush1.bf16.msra.mxu0 0
      %1751 = vmatprep.subr.bf16.mxu0 0
      %1752 = vmatpush1.bf16.msra.mxu0 0
      %1753 = vmatprep.subr.bf16.mxu0 0
      %1754 = vmatpush1.bf16.msra.mxu0 0
      %1755 = vmatprep.subr.bf16.mxu0 0
      %1756 = vmatpush1.bf16.msra.mxu0 0
      %1757 = vmatprep.subr.bf16.mxu0 0
      %1758 = vmatpush1.bf16.msra.mxu0 0
      %1759 = vmatprep.subr.bf16.mxu0 0
      %1760 = vmatpush1.bf16.msra.mxu0 0
      %1761 = vmatprep.subr.bf16.mxu0 0
      %1762 = vmatpush1.bf16.msra.mxu0 0
      %1763 = vmatprep.subr.bf16.mxu0 0
      %1764 = vmatpush1.bf16.msra.mxu0 0
      %1765 = vmatprep.mubr.bf16.mxu0 0
      %1766 = vmatmul.mubr.bf16.gmra.mrb[0].mxu0 %v1728
      %v1767 = vpop.f32.mrb[0].mxu0
      %v1768 = vadd.f32 0.0, %v1767
      %v1769 = vpop.f32.mrb[0].mxu0
      %v1770 = vpop.f32.mrb[0].mxu0
      %v1771 = vadd.f32 0.0, %v1770
      %v1772 = vpop.f32.mrb[0].mxu0
      %1773 = vmatprep.mubr.bf16.mxu0 0
      %1774 = vmatmul.mubr.bf16.gmra.mrb[0].mxu0 %v1731
      %v1775 = vpop.f32.mrb[0].mxu0
      %v1776 = vadd.f32 0.0, %v1775
      %v1777 = vpop.f32.mrb[0].mxu0
      %v1778 = vpop.f32.mrb[0].mxu0
      %v1779 = vpop.f32.mrb[0].mxu0
      %1780 = vdwg.mxu0
      %v1781 = vadd.f32 %v1542, %v1768
      %v1782 = vadd.f32 %v1543, %v1771
      %v1783 = vadd.f32 %v1544, %v1776
      %1784 = vrot.lane.b32.xlu0 %v1065, 80
      %v1785 = vpop.permute.xlu0 %1784
      %1786 = vrot.lane.b32.xlu0 %v1066, 80
      %v1787 = vpop.permute.xlu0 %1786
      %1788 = vrot.lane.b32.xlu0 %v1065, 16
      %v1789 = vpop.permute.xlu0 %1788
      %1790 = vrot.lane.b32.xlu0 %v1066, 16
      %v1791 = vpop.permute.xlu0 %1790
      %v1793 = vsel %vm1075, %v1785, 0
      %v1796 = vsel %vm1075, %v1787, 0
      %v1799 = vsel %vm1075, %v1789, 0
      %v1802 = vsel %vm1075, %v1791, 0
      %1804 = vmatprep.subr.bf16.mxu0 0
      %1805 = vmatpush1.bf16.xpose.msra.mxu0 %v1799
      %1806 = vmatprep.subr.bf16.mxu0 0
      %1807 = vmatpush1.bf16.xpose.msra.mxu0 %v1802
      %1808 = vmatprep.subr.bf16.mxu0 0
      %1809 = vmatpush1.bf16.xpose.msra.mxu0 0
      %1810 = vmatprep.subr.bf16.mxu0 0
      %1811 = vmatpush1.bf16.xpose.msra.mxu0 0
      %1812 = vmatprep.subr.bf16.mxu0 0
      %1813 = vmatpush1.bf16.xpose.msra.mxu0 0
      %1814 = vmatprep.subr.bf16.mxu0 0
      %1815 = vmatpush1.bf16.xpose.msra.mxu0 0
      %1816 = vmatprep.subr.bf16.mxu0 0
      %1817 = vmatpush1.bf16.xpose.msra.mxu0 0
      %1818 = vmatprep.subr.bf16.mxu0 0
      %1819 = vmatpush1.bf16.xpose.msra.mxu0 0
      %1820 = vmatprep.subr.bf16.mxu0 0
      %1821 = vmatpush1.bf16.xpose.msra.mxu0 0
      %1822 = vmatprep.subr.bf16.mxu0 0
      %1823 = vmatpush1.bf16.xpose.msra.mxu0 0
      %1824 = vmatprep.subr.bf16.mxu0 0
      %1825 = vmatpush1.bf16.xpose.msra.mxu0 0
      %1826 = vmatprep.subr.bf16.mxu0 0
      %1827 = vmatpush1.bf16.xpose.msra.mxu0 0
      %1828 = vmatprep.subr.bf16.mxu0 0
      %1829 = vmatpush1.bf16.xpose.msra.mxu0 0
      %1830 = vmatprep.subr.bf16.mxu0 0
      %1831 = vmatpush1.bf16.xpose.msra.mxu0 0
      %1832 = vmatprep.subr.bf16.mxu0 0
      %1833 = vmatpush1.bf16.xpose.msra.mxu0 0
      %1834 = vmatprep.subr.bf16.mxu0 0
      %1835 = vmatpush1.bf16.xpose.msra.mxu0 0
      %1836 = vmatprep.mubr.bf16.mxu0 0
      %1837 = vmatmul.mubr.bf16.gmra.mrb[0].mxu0 %v1793
      %v1838 = vpop.f32.mrb[0].mxu0
      %v1839 = vadd.f32 0.0, %v1838
      %v1840 = vpop.f32.mrb[0].mxu0
      %v1841 = vpop.f32.mrb[0].mxu0
      %v1842 = vadd.f32 0.0, %v1841
      %v1843 = vpop.f32.mrb[0].mxu0
      %1844 = vmatprep.mubr.bf16.mxu0 0
      %1845 = vmatmul.mubr.bf16.gmra.mrb[0].mxu0 %v1796
      %v1846 = vpop.f32.mrb[0].mxu0
      %v1847 = vadd.f32 0.0, %v1846
      %v1848 = vpop.f32.mrb[0].mxu0
      %v1849 = vpop.f32.mrb[0].mxu0
      %v1850 = vpop.f32.mrb[0].mxu0
      %1851 = vdwg.mxu0
      %v1852 = vmul.f32 %v1839, 0.25
      %v1853 = vmul.f32 %v1842, 0.25
      %v1854 = vmul.f32 %v1847, 0.25
      %v1855 = vadd.f32 %v1852, %v332
      %v1856 = vadd.f32 %v1853, %v333
      %v1857 = vadd.f32 %v1854, %v334
      %v1858 = vsel %vm1142, %v1855, -inf
      %1859 = vmax.xlane.f32.xlu0 %v1858
      %v1860 = vpop.xlane.xlu0 %1859
      %v1861 = vsel %vm1142, %v1856, -inf
      %1862 = vmax.xlane.f32.xlu0 %v1861
      %v1863 = vpop.xlane.xlu0 %1862
      %v1864 = vsel %vm1149, %v1857, -inf
      %1865 = vmax.xlane.f32.xlu0 %v1864
      %v1866 = vpop.xlane.xlu0 %1865
      %v1867 = vsub.f32 %v1855, %v1860
      %v1868 = vsub.f32 %v1856, %v1863
      %v1869 = vsub.f32 %v1857, %v1866
      %v1870 = vmul.f32 %v1867, 1.442695
      %v1871 = vpow.pop %v1870
      %v1872 = vmul.f32 %v1868, 1.442695
      %v1873 = vpow.pop %v1872
      %v1874 = vmul.f32 %v1869, 1.442695
      %v1875 = vpow.pop %v1874
      %v1876 = vsel %vm1142, %v1871, 0.0
      %1877 = vadd.xlane.f32.xlu0 %v1876
      %v1878 = vpop.xlane.xlu0 %1877
      %v1879 = vsel %vm1142, %v1873, 0.0
      %1880 = vadd.xlane.f32.xlu0 %v1879
      %v1881 = vpop.xlane.xlu0 %1880
      %v1882 = vsel %vm1149, %v1875, 0.0
      %1883 = vadd.xlane.f32.xlu0 %v1882
      %v1884 = vpop.xlane.xlu0 %1883
      %v1885 = vrcp.pop %v1878
      %v1886 = vrcp.pop %v1881
      %v1887 = vrcp.pop %v1884
      %v1888 = vmul.f32 %v1871, %v1885
      %v1889 = vmul.f32 %v1873, %v1886
      %v1890 = vmul.f32 %v1875, %v1887
      %v1891 = vpack.c.bf16 %v1889, %v1888
      %v1892 = vpack.c.bf16 %v1890, %v1890
      %1893 = vrot.lane.b32.xlu0 %v1067, 80
      %v1894 = vpop.permute.xlu0 %1893
      %1895 = vrot.lane.b32.xlu0 %v1068, 80
      %v1896 = vpop.permute.xlu0 %1895
      %v1899 = vsel %vm1142, %v1891, 0
      %v1902 = vsel %vm1142, %v1892, 0
      %v1905 = vsel %vm1185, %v1896, 0
      %1907 = vmatprep.subr.bf16.mxu0 0
      %1908 = vmatpush1.bf16.msra.mxu0 %v1894
      %1909 = vmatprep.subr.bf16.mxu0 0
      %1910 = vmatpush1.bf16.msra.mxu0 %v1905
      %1911 = vmatprep.subr.bf16.mxu0 0
      %1912 = vmatpush1.bf16.msra.mxu0 0
      %1913 = vmatprep.subr.bf16.mxu0 0
      %1914 = vmatpush1.bf16.msra.mxu0 0
      %1915 = vmatprep.subr.bf16.mxu0 0
      %1916 = vmatpush1.bf16.msra.mxu0 0
      %1917 = vmatprep.subr.bf16.mxu0 0
      %1918 = vmatpush1.bf16.msra.mxu0 0
      %1919 = vmatprep.subr.bf16.mxu0 0
      %1920 = vmatpush1.bf16.msra.mxu0 0
      %1921 = vmatprep.subr.bf16.mxu0 0
      %1922 = vmatpush1.bf16.msra.mxu0 0
      %1923 = vmatprep.subr.bf16.mxu0 0
      %1924 = vmatpush1.bf16.msra.mxu0 0
      %1925 = vmatprep.subr.bf16.mxu0 0
      %1926 = vmatpush1.bf16.msra.mxu0 0
      %1927 = vmatprep.subr.bf16.mxu0 0
      %1928 = vmatpush1.bf16.msra.mxu0 0
      %1929 = vmatprep.subr.bf16.mxu0 0
      %1930 = vmatpush1.bf16.msra.mxu0 0
      %1931 = vmatprep.subr.bf16.mxu0 0
      %1932 = vmatpush1.bf16.msra.mxu0 0
      %1933 = vmatprep.subr.bf16.mxu0 0
      %1934 = vmatpush1.bf16.msra.mxu0 0
      %1935 = vmatprep.subr.bf16.mxu0 0
      %1936 = vmatpush1.bf16.msra.mxu0 0
      %1937 = vmatprep.subr.bf16.mxu0 0
      %1938 = vmatpush1.bf16.msra.mxu0 0
      %1939 = vmatprep.mubr.bf16.mxu0 0
      %1940 = vmatmul.mubr.bf16.gmra.mrb[0].mxu0 %v1899
      %v1941 = vpop.f32.mrb[0].mxu0
      %v1942 = vadd.f32 0.0, %v1941
      %v1943 = vpop.f32.mrb[0].mxu0
      %v1944 = vpop.f32.mrb[0].mxu0
      %v1945 = vadd.f32 0.0, %v1944
      %v1946 = vpop.f32.mrb[0].mxu0
      %1947 = vmatprep.mubr.bf16.mxu0 0
      %1948 = vmatmul.mubr.bf16.gmra.mrb[0].mxu0 %v1902
      %v1949 = vpop.f32.mrb[0].mxu0
      %v1950 = vadd.f32 0.0, %v1949
      %v1951 = vpop.f32.mrb[0].mxu0
      %v1952 = vpop.f32.mrb[0].mxu0
      %v1953 = vpop.f32.mrb[0].mxu0
      %1954 = vdwg.mxu0
      %v1955 = vpack.c.bf16 %v1945, %v1942
      %v1956 = vpack.c.bf16 %v1950, %v1950
      %s1957 = scalar_lea.vmem %s5, 24
      %v1958 = vld [vmem:[%s1957] sm:$0xf]
      %v1959 = vld [vmem:[%s1957 + $0x4] sm:$0xf]
      %v1962 = vunpack.c.l.b16 %v1958
      %v1963 = vunpack.c.l.b16 %v1959
      %v1964 = vpack.c.b16 %v1963, %v1962
      %v1967 = vsel %vm1075, %v1955, 0
      %v1970 = vsel %vm1075, %v1956, 0
      %1972 = vmatprep.subr.bf16.mxu0 0
      %1973 = vmatpush1.bf16.msra.mxu0 %v1964
      %1974 = vmatprep.subr.bf16.mxu0 0
      %1975 = vmatpush1.bf16.msra.mxu0 0
      %1976 = vmatprep.subr.bf16.mxu0 0
      %1977 = vmatpush1.bf16.msra.mxu0 0
      %1978 = vmatprep.subr.bf16.mxu0 0
      %1979 = vmatpush1.bf16.msra.mxu0 0
      %1980 = vmatprep.subr.bf16.mxu0 0
      %1981 = vmatpush1.bf16.msra.mxu0 0
      %1982 = vmatprep.subr.bf16.mxu0 0
      %1983 = vmatpush1.bf16.msra.mxu0 0
      %1984 = vmatprep.subr.bf16.mxu0 0
      %1985 = vmatpush1.bf16.msra.mxu0 0
      %1986 = vmatprep.subr.bf16.mxu0 0
      %1987 = vmatpush1.bf16.msra.mxu0 0
      %1988 = vmatprep.subr.bf16.mxu0 0
      %1989 = vmatpush1.bf16.msra.mxu0 0
      %1990 = vmatprep.subr.bf16.mxu0 0
      %1991 = vmatpush1.bf16.msra.mxu0 0
      %1992 = vmatprep.subr.bf16.mxu0 0
      %1993 = vmatpush1.bf16.msra.mxu0 0
      %1994 = vmatprep.subr.bf16.mxu0 0
      %1995 = vmatpush1.bf16.msra.mxu0 0
      %1996 = vmatprep.subr.bf16.mxu0 0
      %1997 = vmatpush1.bf16.msra.mxu0 0
      %1998 = vmatprep.subr.bf16.mxu0 0
      %1999 = vmatpush1.bf16.msra.mxu0 0
      %2000 = vmatprep.subr.bf16.mxu0 0
      %2001 = vmatpush1.bf16.msra.mxu0 0
      %2002 = vmatprep.subr.bf16.mxu0 0
      %2003 = vmatpush1.bf16.msra.mxu0 0
      %2004 = vmatprep.mubr.bf16.mxu0 0
      %2005 = vmatmul.mubr.bf16.gmra.mrb[0].mxu0 %v1967
      %v2006 = vpop.f32.mrb[0].mxu0
      %v2007 = vadd.f32 0.0, %v2006
      %v2008 = vpop.f32.mrb[0].mxu0
      %v2009 = vpop.f32.mrb[0].mxu0
      %v2010 = vadd.f32 0.0, %v2009
      %v2011 = vpop.f32.mrb[0].mxu0
      %2012 = vmatprep.mubr.bf16.mxu0 0
      %2013 = vmatmul.mubr.bf16.gmra.mrb[0].mxu0 %v1970
      %v2014 = vpop.f32.mrb[0].mxu0
      %v2015 = vadd.f32 0.0, %v2014
      %v2016 = vpop.f32.mrb[0].mxu0
      %v2017 = vpop.f32.mrb[0].mxu0
      %v2018 = vpop.f32.mrb[0].mxu0
      %2019 = vdwg.mxu0
      %v2020 = vadd.f32 %v1781, %v2007
      %v2021 = vadd.f32 %v1782, %v2010
      %v2022 = vadd.f32 %v1783, %v2015
      %v2023 = vadd.f32 %v893, %v2020
      %v2024 = vadd.f32 %v889, %v2021
      %v2025 = vadd.f32 %v888, %v2022
      %v2026 = vld [vmem:[%s2 + $0x4] ss:$0 sm:$0xff]
      %v2027 = vld [vmem:[%s2 + $0x5] ss:$0 sm:$0xff]
      %v2028 = vsel %vm896, %v2023, 0.0
      %2029 = vadd.xlane.f32.xlu0 %v2028
      %v2030 = vpop.xlane.xlu0 %2029
      %v2031 = vsel %vm896, %v2024, 0.0
      %2032 = vadd.xlane.f32.xlu0 %v2031
      %v2033 = vpop.xlane.xlu0 %2032
      %v2034 = vsel %vm903, %v2025, 0.0
      %2035 = vadd.xlane.f32.xlu0 %v2034
      %v2036 = vpop.xlane.xlu0 %2035
      %v2037 = vmul.f32 %v2030, %v907
      %v2038 = vmul.f32 %v2033, %v907
      %v2039 = vmul.f32 %v2036, %v907
      %v2040 = vsub.f32 %v2023, %v2037
      %v2041 = vsub.f32 %v2024, %v2038
      %v2042 = vsub.f32 %v2025, %v2039
      %v2043 = vmul.f32 %v2040, %v2040
      %v2044 = vmul.f32 %v2041, %v2041
      %v2045 = vmul.f32 %v2042, %v2042
      %v2046 = vsel %vm896, %v2043, 0.0
      %2047 = vadd.xlane.f32.xlu0 %v2046
      %v2048 = vpop.xlane.xlu0 %2047
      %v2049 = vsel %vm896, %v2044, 0.0
      %2050 = vadd.xlane.f32.xlu0 %v2049
      %v2051 = vpop.xlane.xlu0 %2050
      %v2052 = vsel %vm903, %v2045, 0.0
      %2053 = vadd.xlane.f32.xlu0 %v2052
      %v2054 = vpop.xlane.xlu0 %2053
      %v2055 = vmul.f32 %v2048, %v907
      %v2056 = vmul.f32 %v2051, %v907
      %v2057 = vmul.f32 %v2054, %v907
      %v2058 = vadd.f32 %v2055, 1e-06
      %v2059 = vadd.f32 %v2056, 1e-06
      %v2060 = vadd.f32 %v2057, 1e-06
      %v2061 = vrsqrt.pop %v2058
      %v2062 = vrsqrt.pop %v2059
      %v2063 = vrsqrt.pop %v2060
      %v2064 = vmul.f32 %v2040, %v2061
      %v2065 = vmul.f32 %v2041, %v2062
      %v2066 = vmul.f32 %v2042, %v2063
      %v2067 = vmul.f32 %v2064, %v2026
      %v2068 = vmul.f32 %v2065, %v2026
      %v2069 = vmul.f32 %v2066, %v2026
      %v2070 = vadd.f32 %v2067, %v2027
      %v2071 = vadd.f32 %v2068, %v2027
      %v2072 = vadd.f32 %v2069, %v2027
      %v2073 = vpack.c.bf16 %v2071, %v2070
      %v2074 = vpack.c.bf16 %v2072, %v2072
      %v2075 = vld [vmem:[%s6] sm:$0xf]
      %v2076 = vld [vmem:[%s6 + $0x4] sm:$0xf]
      %v2077 = vld [vmem:[%s6 + $0x8] sm:$0xf]
      %v2078 = vld [vmem:[%s6 + $0xc] sm:$0xf]
      %v2079 = vld [vmem:[%s6 + $0x10] sm:$0xf]
      %v2080 = vld [vmem:[%s6 + $0x14] sm:$0xf]
      %v2081 = vld [vmem:[%s6 + $0x18] sm:$0xf]
      %v2082 = vld [vmem:[%s6 + $0x1c] sm:$0xf]
      %v2083 = vld [vmem:[%s2 + $0x6] ss:$0 sm:$0xff]
      %v2092 = vunpack.c.l.b16 %v2075
      %v2093 = vunpack.c.l.b16 %v2076
      %v2094 = vunpack.c.l.b16 %v2077
      %v2095 = vunpack.c.l.b16 %v2078
      %v2096 = vunpack.c.l.b16 %v2079
      %v2097 = vunpack.c.l.b16 %v2080
      %v2098 = vunpack.c.l.b16 %v2081
      %v2099 = vunpack.c.l.b16 %v2082
      %v2100 = vpack.c.b16 %v2093, %v2092
      %v2101 = vpack.c.b16 %v2095, %v2094
      %v2102 = vpack.c.b16 %v2097, %v2096
      %v2103 = vpack.c.b16 %v2099, %v2098
      %v2109 = vsel %vm896, %v2073, 0
      %v2112 = vsel %vm896, %v2074, 0
      %2114 = vmatprep.subr.bf16.mxu0 0
      %2115 = vmatpush1.bf16.msra.mxu0 %v2100
      %2116 = vmatprep.subr.bf16.mxu0 0
      %2117 = vmatpush1.bf16.msra.mxu0 %v2101
      %2118 = vmatprep.subr.bf16.mxu0 0
      %2119 = vmatpush1.bf16.msra.mxu0 %v2102
      %2120 = vmatprep.subr.bf16.mxu0 0
      %2121 = vmatpush1.bf16.msra.mxu0 %v2103
      %2122 = vmatprep.subr.bf16.mxu0 0
      %2123 = vmatpush1.bf16.msra.mxu0 0
      %2124 = vmatprep.subr.bf16.mxu0 0
      %2125 = vmatpush1.bf16.msra.mxu0 0
      %2126 = vmatprep.subr.bf16.mxu0 0
      %2127 = vmatpush1.bf16.msra.mxu0 0
      %2128 = vmatprep.subr.bf16.mxu0 0
      %2129 = vmatpush1.bf16.msra.mxu0 0
      %2130 = vmatprep.subr.bf16.mxu0 0
      %2131 = vmatpush1.bf16.msra.mxu0 0
      %2132 = vmatprep.subr.bf16.mxu0 0
      %2133 = vmatpush1.bf16.msra.mxu0 0
      %2134 = vmatprep.subr.bf16.mxu0 0
      %2135 = vmatpush1.bf16.msra.mxu0 0
      %2136 = vmatprep.subr.bf16.mxu0 0
      %2137 = vmatpush1.bf16.msra.mxu0 0
      %2138 = vmatprep.subr.bf16.mxu0 0
      %2139 = vmatpush1.bf16.msra.mxu0 0
      %2140 = vmatprep.subr.bf16.mxu0 0
      %2141 = vmatpush1.bf16.msra.mxu0 0
      %2142 = vmatprep.subr.bf16.mxu0 0
      %2143 = vmatpush1.bf16.msra.mxu0 0
      %2144 = vmatprep.subr.bf16.mxu0 0
      %2145 = vmatpush1.bf16.msra.mxu0 0
      %2146 = vmatprep.mubr.bf16.mxu0 0
      %2147 = vmatmul.mubr.bf16.gmra.mrb[0].mxu0 %v2109
      %v2148 = vpop.f32.mrb[0].mxu0
      %v2149 = vadd.f32 %v2083, %v2148
      %v2150 = vpop.f32.mrb[0].mxu0
      %v2151 = vpop.f32.mrb[0].mxu0
      %v2152 = vadd.f32 %v2083, %v2151
      %v2153 = vpop.f32.mrb[0].mxu0
      %2154 = vmatprep.mubr.bf16.mxu0 0
      %2155 = vmatmul.mubr.bf16.gmra.mrb[0].mxu0 %v2112
      %v2156 = vpop.f32.mrb[0].mxu0
      %v2157 = vadd.f32 %v2083, %v2156
      %v2158 = vpop.f32.mrb[0].mxu0
      %v2159 = vpop.f32.mrb[0].mxu0
      %v2160 = vpop.f32.mrb[0].mxu0
      %2161 = vdwg.mxu0
      %v2162 = vmul.f32 %v2149, 0.5
      %v2163 = vmul.f32 %v2152, 0.5
      %v2164 = vmul.f32 %v2157, 0.5
      %v2165 = vmul.f32 %v2149, 0.70710677
      %v2166 = vmul.f32 %v2152, 0.70710677
      %v2167 = vmul.f32 %v2157, 0.70710677
      %v2168 = verf.f32.pop %v2165
      %v2169 = verf.f32.pop %v2166
      %v2170 = verf.f32.pop %v2167
      %v2171 = vadd.f32 %v2168, 1.0
      %v2172 = vadd.f32 %v2169, 1.0
      %v2173 = vadd.f32 %v2170, 1.0
      %v2174 = vmul.f32 %v2162, %v2171
      %v2175 = vmul.f32 %v2163, %v2172
      %v2176 = vmul.f32 %v2164, %v2173
      %v2177 = vpack.c.bf16 %v2175, %v2174
      %v2178 = vpack.c.bf16 %v2176, %v2176
      %v2179 = vld [vmem:[%s7] sm:$0xf]
      %v2180 = vld [vmem:[%s7 + $0x4] sm:$0xf]
      %v2181 = vld [vmem:[%s7 + $0x8] sm:$0xf]
      %v2182 = vld [vmem:[%s7 + $0xc] sm:$0xf]
      %v2183 = vld [vmem:[%s7 + $0x10] sm:$0xf]
      %v2184 = vld [vmem:[%s7 + $0x14] sm:$0xf]
      %v2185 = vld [vmem:[%s7 + $0x18] sm:$0xf]
      %v2186 = vld [vmem:[%s7 + $0x1c] sm:$0xf]
      %v2187 = vld [vmem:[%s7 + $0x20] sm:$0xf]
      %v2188 = vld [vmem:[%s7 + $0x24] sm:$0xf]
      %v2189 = vld [vmem:[%s7 + $0x28] sm:$0xf]
      %v2190 = vld [vmem:[%s7 + $0x2c] sm:$0xf]
      %v2191 = vld [vmem:[%s7 + $0x30] sm:$0xf]
      %v2192 = vld [vmem:[%s7 + $0x34] sm:$0xf]
      %v2193 = vld [vmem:[%s7 + $0x38] sm:$0xf]
      %v2194 = vld [vmem:[%s7 + $0x3c] sm:$0xf]
      %v2195 = vld [vmem:[%s2 + $0x7] ss:$0 sm:$0xff]
      %v2212 = vunpack.c.l.b16 %v2179
      %v2213 = vunpack.c.l.b16 %v2180
      %v2214 = vunpack.c.l.b16 %v2181
      %v2215 = vunpack.c.l.b16 %v2182
      %v2216 = vunpack.c.l.b16 %v2183
      %v2217 = vunpack.c.l.b16 %v2184
      %v2218 = vunpack.c.l.b16 %v2185
      %v2219 = vunpack.c.l.b16 %v2186
      %v2220 = vunpack.c.l.b16 %v2187
      %v2221 = vunpack.c.l.b16 %v2188
      %v2222 = vunpack.c.l.b16 %v2189
      %v2223 = vunpack.c.l.b16 %v2190
      %v2224 = vunpack.c.l.b16 %v2191
      %v2225 = vunpack.c.l.b16 %v2192
      %v2226 = vunpack.c.l.b16 %v2193
      %v2227 = vunpack.c.l.b16 %v2194
      %v2228 = vpack.c.b16 %v2213, %v2212
      %v2229 = vpack.c.b16 %v2215, %v2214
      %v2230 = vpack.c.b16 %v2217, %v2216
      %v2231 = vpack.c.b16 %v2219, %v2218
      %v2232 = vpack.c.b16 %v2221, %v2220
      %v2233 = vpack.c.b16 %v2223, %v2222
      %v2234 = vpack.c.b16 %v2225, %v2224
      %v2235 = vpack.c.b16 %v2227, %v2226
      %2244 = vmatprep.subr.bf16.mxu0 0
      %2245 = vmatpush1.bf16.msra.mxu0 %v2228
      %2246 = vmatprep.subr.bf16.mxu0 0
      %2247 = vmatpush1.bf16.msra.mxu0 %v2229
      %2248 = vmatprep.subr.bf16.mxu0 0
      %2249 = vmatpush1.bf16.msra.mxu0 %v2230
      %2250 = vmatprep.subr.bf16.mxu0 0
      %2251 = vmatpush1.bf16.msra.mxu0 %v2231
      %2252 = vmatprep.subr.bf16.mxu0 0
      %2253 = vmatpush1.bf16.msra.mxu0 %v2232
      %2254 = vmatprep.subr.bf16.mxu0 0
      %2255 = vmatpush1.bf16.msra.mxu0 %v2233
      %2256 = vmatprep.subr.bf16.mxu0 0
      %2257 = vmatpush1.bf16.msra.mxu0 %v2234
      %2258 = vmatprep.subr.bf16.mxu0 0
      %2259 = vmatpush1.bf16.msra.mxu0 %v2235
      %2260 = vmatprep.subr.bf16.mxu0 0
      %2261 = vmatpush1.bf16.msra.mxu0 0
      %2262 = vmatprep.subr.bf16.mxu0 0
      %2263 = vmatpush1.bf16.msra.mxu0 0
      %2264 = vmatprep.subr.bf16.mxu0 0
      %2265 = vmatpush1.bf16.msra.mxu0 0
      %2266 = vmatprep.subr.bf16.mxu0 0
      %2267 = vmatpush1.bf16.msra.mxu0 0
      %2268 = vmatprep.subr.bf16.mxu0 0
      %2269 = vmatpush1.bf16.msra.mxu0 0
      %2270 = vmatprep.subr.bf16.mxu0 0
      %2271 = vmatpush1.bf16.msra.mxu0 0
      %2272 = vmatprep.subr.bf16.mxu0 0
      %2273 = vmatpush1.bf16.msra.mxu0 0
      %2274 = vmatprep.subr.bf16.mxu0 0
      %2275 = vmatpush1.bf16.msra.mxu0 0
      %2276 = vmatprep.mubr.bf16.mxu0 0
      %2277 = vmatmul.mubr.bf16.gmra.mrb[0].mxu0 %v2177
      %v2278 = vpop.f32.mrb[0].mxu0
      %v2279 = vadd.f32 %v2195, %v2278
      %v2280 = vpop.f32.mrb[0].mxu0
      %v2281 = vpop.f32.mrb[0].mxu0
      %v2282 = vadd.f32 %v2195, %v2281
      %v2283 = vpop.f32.mrb[0].mxu0
      %2284 = vmatprep.mubr.bf16.mxu0 0
      %2285 = vmatmul.mubr.bf16.gmra.mrb[0].mxu0 %v2178
      %v2286 = vpop.f32.mrb[0].mxu0
      %v2287 = vadd.f32 %v2195, %v2286
      %v2288 = vpop.f32.mrb[0].mxu0
      %v2289 = vpop.f32.mrb[0].mxu0
      %v2290 = vpop.f32.mrb[0].mxu0
      %2291 = vdwg.mxu0
      %v2292 = vadd.f32 %v2023, %v2279
      %v2293 = vadd.f32 %v2024, %v2282
      %v2294 = vadd.f32 %v2025, %v2287
      %v2295 = vld [vmem:[%s2 + $0x10] ss:$0 sm:$0xff]
      %v2296 = vld [vmem:[%s2 + $0x11] ss:$0 sm:$0xff]
      %v2297 = vsel %vm896, %v2292, 0.0
      %2298 = vadd.xlane.f32.xlu0 %v2297
      %v2299 = vpop.xlane.xlu0 %2298
      %v2300 = vsel %vm896, %v2293, 0.0
      %2301 = vadd.xlane.f32.xlu0 %v2300
      %v2302 = vpop.xlane.xlu0 %2301
      %v2303 = vsel %vm903, %v2294, 0.0
      %2304 = vadd.xlane.f32.xlu0 %v2303
      %v2305 = vpop.xlane.xlu0 %2304
      %v2306 = vmul.f32 %v2299, %v907
      %v2307 = vmul.f32 %v2302, %v907
      %v2308 = vmul.f32 %v2305, %v907
      %v2309 = vsub.f32 %v2292, %v2306
      %v2310 = vsub.f32 %v2293, %v2307
      %v2311 = vsub.f32 %v2294, %v2308
      %v2312 = vmul.f32 %v2309, %v2309
      %v2313 = vmul.f32 %v2310, %v2310
      %v2314 = vmul.f32 %v2311, %v2311
      %v2315 = vsel %vm896, %v2312, 0.0
      %2316 = vadd.xlane.f32.xlu0 %v2315
      %v2317 = vpop.xlane.xlu0 %2316
      %v2318 = vsel %vm896, %v2313, 0.0
      %2319 = vadd.xlane.f32.xlu0 %v2318
      %v2320 = vpop.xlane.xlu0 %2319
      %v2321 = vsel %vm903, %v2314, 0.0
      %2322 = vadd.xlane.f32.xlu0 %v2321
      %v2323 = vpop.xlane.xlu0 %2322
      %v2324 = vmul.f32 %v2317, %v907
      %v2325 = vmul.f32 %v2320, %v907
      %v2326 = vmul.f32 %v2323, %v907
      %v2327 = vadd.f32 %v2324, 1e-06
      %v2328 = vadd.f32 %v2325, 1e-06
      %v2329 = vadd.f32 %v2326, 1e-06
      %v2330 = vrsqrt.pop %v2327
      %v2331 = vrsqrt.pop %v2328
      %v2332 = vrsqrt.pop %v2329
      %v2333 = vmul.f32 %v2309, %v2330
      %v2334 = vmul.f32 %v2310, %v2331
      %v2335 = vmul.f32 %v2311, %v2332
      %v2336 = vmul.f32 %v2333, %v2295
      %v2337 = vmul.f32 %v2334, %v2295
      %v2338 = vmul.f32 %v2335, %v2295
      %v2339 = vadd.f32 %v2336, %v2296
      %v2340 = vadd.f32 %v2337, %v2296
      %v2341 = vadd.f32 %v2338, %v2296
      %v2342 = vpack.c.bf16 %v2340, %v2339
      %v2343 = vpack.c.bf16 %v2341, %v2341
      %s2344 = scalar_lea.vmem %s4, 64
      %v2345 = vld [vmem:[%s2344] sm:$0xff]
      %v2346 = vld [vmem:[%s2344 + $0x8] sm:$0xff]
      %v2347 = vld [vmem:[%s2344 + $0x10] sm:$0xff]
      %v2348 = vld [vmem:[%s2344 + $0x18] sm:$0xff]
      %v2349 = vld [vmem:[%s2344 + $0x20] sm:$0xff]
      %v2350 = vld [vmem:[%s2344 + $0x28] sm:$0xff]
      %v2351 = vld [vmem:[%s2344 + $0x30] sm:$0xff]
      %v2352 = vld [vmem:[%s2344 + $0x38] sm:$0xff]
      %s2353 = scalar_lea.vmem %s2, 18
      %v2354 = vld [vmem:[%s2353] ss:$8 sm:$0x3]
      %v2356 = vlaneseq
      %v2357 = vshrl.u32 %v2356, 7
      %v2358 = vsub.s32 0, %v2357
      %v2359 = vrot.slane %v2354, %v2358
      %v2360 = vlaneseq
      %v2361 = vshrl.u32 %v2360, 7
      %v2362 = vsub.s32 1, %v2361
      %v2363 = vrot.slane %v2354, %v2362
      %v2374 = vunpack.c.l.b16 %v2345
      %v2375 = vunpack.c.h.b16 %v2345
      %v2376 = vunpack.c.l.b16 %v2346
      %v2377 = vunpack.c.h.b16 %v2346
      %v2378 = vunpack.c.l.b16 %v2347
      %v2379 = vunpack.c.h.b16 %v2347
      %v2380 = vunpack.c.l.b16 %v2348
      %v2381 = vunpack.c.h.b16 %v2348
      %v2382 = vunpack.c.l.b16 %v2349
      %v2383 = vunpack.c.h.b16 %v2349
      %v2384 = vunpack.c.l.b16 %v2350
      %v2385 = vunpack.c.h.b16 %v2350
      %v2386 = vunpack.c.l.b16 %v2351
      %v2387 = vunpack.c.h.b16 %v2351
      %v2388 = vunpack.c.l.b16 %v2352
      %v2389 = vunpack.c.h.b16 %v2352
      %v2390 = vpack.c.b16 %v2376, %v2374
      %v2391 = vpack.c.b16 %v2377, %v2375
      %v2392 = vpack.c.b16 %v2380, %v2378
      %v2393 = vpack.c.b16 %v2381, %v2379
      %v2394 = vpack.c.b16 %v2384, %v2382
      %v2395 = vpack.c.b16 %v2385, %v2383
      %v2396 = vpack.c.b16 %v2388, %v2386
      %v2397 = vpack.c.b16 %v2389, %v2387
      %v2407 = vsel %vm896, %v2342, 0
      %v2410 = vsel %vm896, %v2343, 0
      %2412 = vmatprep.subr.bf16.mxu0 %v2391
      %2413 = vmatpush1.bf16.msra.mxu0 %v2390
      %2414 = vmatprep.subr.bf16.mxu0 %v2393
      %2415 = vmatpush1.bf16.msra.mxu0 %v2392
      %2416 = vmatprep.subr.bf16.mxu0 %v2395
      %2417 = vmatpush1.bf16.msra.mxu0 %v2394
      %2418 = vmatprep.subr.bf16.mxu0 %v2397
      %2419 = vmatpush1.bf16.msra.mxu0 %v2396
      %2420 = vmatprep.subr.bf16.mxu0 0
      %2421 = vmatpush1.bf16.msra.mxu0 0
      %2422 = vmatprep.subr.bf16.mxu0 0
      %2423 = vmatpush1.bf16.msra.mxu0 0
      %2424 = vmatprep.subr.bf16.mxu0 0
      %2425 = vmatpush1.bf16.msra.mxu0 0
      %2426 = vmatprep.subr.bf16.mxu0 0
      %2427 = vmatpush1.bf16.msra.mxu0 0
      %2428 = vmatprep.subr.bf16.mxu0 0
      %2429 = vmatpush1.bf16.msra.mxu0 0
      %2430 = vmatprep.subr.bf16.mxu0 0
      %2431 = vmatpush1.bf16.msra.mxu0 0
      %2432 = vmatprep.subr.bf16.mxu0 0
      %2433 = vmatpush1.bf16.msra.mxu0 0
      %2434 = vmatprep.subr.bf16.mxu0 0
      %2435 = vmatpush1.bf16.msra.mxu0 0
      %2436 = vmatprep.subr.bf16.mxu0 0
      %2437 = vmatpush1.bf16.msra.mxu0 0
      %2438 = vmatprep.subr.bf16.mxu0 0
      %2439 = vmatpush1.bf16.msra.mxu0 0
      %2440 = vmatprep.subr.bf16.mxu0 0
      %2441 = vmatpush1.bf16.msra.mxu0 0
      %2442 = vmatprep.subr.bf16.mxu0 0
      %2443 = vmatpush1.bf16.msra.mxu0 0
      %2444 = vmatprep.mubr.bf16.mxu0 0
      %2445 = vmatmul.mubr.bf16.gmra.mrb[0].mxu0 %v2407
      %v2446 = vpop.f32.mrb[0].mxu0
      %v2447 = vadd.f32 %v2359, %v2446
      %v2448 = vpop.f32.mrb[0].mxu0
      %v2449 = vadd.f32 %v2363, %v2448
      %v2450 = vpop.f32.mrb[0].mxu0
      %v2451 = vadd.f32 %v2359, %v2450
      %v2452 = vpop.f32.mrb[0].mxu0
      %v2453 = vadd.f32 %v2363, %v2452
      %2454 = vmatprep.mubr.bf16.mxu0 0
      %2455 = vmatmul.mubr.bf16.gmra.mrb[0].mxu0 %v2410
      %v2456 = vpop.f32.mrb[0].mxu0
      %v2457 = vadd.f32 %v2359, %v2456
      %v2458 = vpop.f32.mrb[0].mxu0
      %v2459 = vadd.f32 %v2363, %v2458
      %v2460 = vpop.f32.mrb[0].mxu0
      %v2461 = vpop.f32.mrb[0].mxu0
      %2462 = vdwg.mxu0
      %v2463 = vld [vmem:[%s2 + $0x13] ss:$0 sm:$0xff]
      %v2464 = vpack.c.bf16 %v2451, %v2447
      %v2465 = vpack.c.bf16 %v2457, %v2457
      %v2466 = vpack.c.bf16 %v2453, %v2449
      %v2467 = vpack.c.bf16 %v2459, %v2459
      %2470 = vrot.lane.b32.xlu0 %v2464, 64
      %v2471 = vpop.permute.xlu0 %2470
      %2472 = vrot.lane.b32.xlu0 %v2465, 64
      %v2473 = vpop.permute.xlu0 %2472
      %v2475 = vsel %vm1075, %v2464, 0
      %v2478 = vsel %vm1075, %v2465, 0
      %v2481 = vsel %vm1075, %v2471, 0
      %v2484 = vsel %vm1075, %v2473, 0
      %2486 = vmatprep.subr.bf16.mxu0 0
      %2487 = vmatpush1.bf16.xpose.msra.mxu0 %v2481
      %2488 = vmatprep.subr.bf16.mxu0 0
      %2489 = vmatpush1.bf16.xpose.msra.mxu0 %v2484
      %2490 = vmatprep.subr.bf16.mxu0 0
      %2491 = vmatpush1.bf16.xpose.msra.mxu0 0
      %2492 = vmatprep.subr.bf16.mxu0 0
      %2493 = vmatpush1.bf16.xpose.msra.mxu0 0
      %2494 = vmatprep.subr.bf16.mxu0 0
      %2495 = vmatpush1.bf16.xpose.msra.mxu0 0
      %2496 = vmatprep.subr.bf16.mxu0 0
      %2497 = vmatpush1.bf16.xpose.msra.mxu0 0
      %2498 = vmatprep.subr.bf16.mxu0 0
      %2499 = vmatpush1.bf16.xpose.msra.mxu0 0
      %2500 = vmatprep.subr.bf16.mxu0 0
      %2501 = vmatpush1.bf16.xpose.msra.mxu0 0
      %2502 = vmatprep.subr.bf16.mxu0 0
      %2503 = vmatpush1.bf16.xpose.msra.mxu0 0
      %2504 = vmatprep.subr.bf16.mxu0 0
      %2505 = vmatpush1.bf16.xpose.msra.mxu0 0
      %2506 = vmatprep.subr.bf16.mxu0 0
      %2507 = vmatpush1.bf16.xpose.msra.mxu0 0
      %2508 = vmatprep.subr.bf16.mxu0 0
      %2509 = vmatpush1.bf16.xpose.msra.mxu0 0
      %2510 = vmatprep.subr.bf16.mxu0 0
      %2511 = vmatpush1.bf16.xpose.msra.mxu0 0
      %2512 = vmatprep.subr.bf16.mxu0 0
      %2513 = vmatpush1.bf16.xpose.msra.mxu0 0
      %2514 = vmatprep.subr.bf16.mxu0 0
      %2515 = vmatpush1.bf16.xpose.msra.mxu0 0
      %2516 = vmatprep.subr.bf16.mxu0 0
      %2517 = vmatpush1.bf16.xpose.msra.mxu0 0
      %2518 = vmatprep.mubr.bf16.mxu0 0
      %2519 = vmatmul.mubr.bf16.gmra.mrb[0].mxu0 %v2475
      %v2520 = vpop.f32.mrb[0].mxu0
      %v2521 = vadd.f32 0.0, %v2520
      %v2522 = vpop.f32.mrb[0].mxu0
      %v2523 = vpop.f32.mrb[0].mxu0
      %v2524 = vadd.f32 0.0, %v2523
      %v2525 = vpop.f32.mrb[0].mxu0
      %2526 = vmatprep.mubr.bf16.mxu0 0
      %2527 = vmatmul.mubr.bf16.gmra.mrb[0].mxu0 %v2478
      %v2528 = vpop.f32.mrb[0].mxu0
      %v2529 = vadd.f32 0.0, %v2528
      %v2530 = vpop.f32.mrb[0].mxu0
      %v2531 = vpop.f32.mrb[0].mxu0
      %v2532 = vpop.f32.mrb[0].mxu0
      %2533 = vdwg.mxu0
      %v2534 = vmul.f32 %v2521, 0.25
      %v2535 = vmul.f32 %v2524, 0.25
      %v2536 = vmul.f32 %v2529, 0.25
      %v2537 = vadd.f32 %v2534, %v332
      %v2538 = vadd.f32 %v2535, %v333
      %v2539 = vadd.f32 %v2536, %v334
      %v2540 = vsel %vm1142, %v2537, -inf
      %2541 = vmax.xlane.f32.xlu0 %v2540
      %v2542 = vpop.xlane.xlu0 %2541
      %v2543 = vsel %vm1142, %v2538, -inf
      %2544 = vmax.xlane.f32.xlu0 %v2543
      %v2545 = vpop.xlane.xlu0 %2544
      %v2546 = vsel %vm1149, %v2539, -inf
      %2547 = vmax.xlane.f32.xlu0 %v2546
      %v2548 = vpop.xlane.xlu0 %2547
      %v2549 = vsub.f32 %v2537, %v2542
      %v2550 = vsub.f32 %v2538, %v2545
      %v2551 = vsub.f32 %v2539, %v2548
      %v2552 = vmul.f32 %v2549, 1.442695
      %v2553 = vpow.pop %v2552
      %v2554 = vmul.f32 %v2550, 1.442695
      %v2555 = vpow.pop %v2554
      %v2556 = vmul.f32 %v2551, 1.442695
      %v2557 = vpow.pop %v2556
      %v2558 = vsel %vm1142, %v2553, 0.0
      %2559 = vadd.xlane.f32.xlu0 %v2558
      %v2560 = vpop.xlane.xlu0 %2559
      %v2561 = vsel %vm1142, %v2555, 0.0
      %2562 = vadd.xlane.f32.xlu0 %v2561
      %v2563 = vpop.xlane.xlu0 %2562
      %v2564 = vsel %vm1149, %v2557, 0.0
      %2565 = vadd.xlane.f32.xlu0 %v2564
      %v2566 = vpop.xlane.xlu0 %2565
      %v2567 = vrcp.pop %v2560
      %v2568 = vrcp.pop %v2563
      %v2569 = vrcp.pop %v2566
      %v2570 = vmul.f32 %v2553, %v2567
      %v2571 = vmul.f32 %v2555, %v2568
      %v2572 = vmul.f32 %v2557, %v2569
      %v2573 = vpack.c.bf16 %v2571, %v2570
      %v2574 = vpack.c.bf16 %v2572, %v2572
      %v2576 = vsel %vm1142, %v2573, 0
      %v2579 = vsel %vm1142, %v2574, 0
      %v2582 = vsel %vm1185, %v2467, 0
      %2584 = vmatprep.subr.bf16.mxu0 0
      %2585 = vmatpush1.bf16.msra.mxu0 %v2466
      %2586 = vmatprep.subr.bf16.mxu0 0
      %2587 = vmatpush1.bf16.msra.mxu0 %v2582
      %2588 = vmatprep.subr.bf16.mxu0 0
      %2589 = vmatpush1.bf16.msra.mxu0 0
      %2590 = vmatprep.subr.bf16.mxu0 0
      %2591 = vmatpush1.bf16.msra.mxu0 0
      %2592 = vmatprep.subr.bf16.mxu0 0
      %2593 = vmatpush1.bf16.msra.mxu0 0
      %2594 = vmatprep.subr.bf16.mxu0 0
      %2595 = vmatpush1.bf16.msra.mxu0 0
      %2596 = vmatprep.subr.bf16.mxu0 0
      %2597 = vmatpush1.bf16.msra.mxu0 0
      %2598 = vmatprep.subr.bf16.mxu0 0
      %2599 = vmatpush1.bf16.msra.mxu0 0
      %2600 = vmatprep.subr.bf16.mxu0 0
      %2601 = vmatpush1.bf16.msra.mxu0 0
      %2602 = vmatprep.subr.bf16.mxu0 0
      %2603 = vmatpush1.bf16.msra.mxu0 0
      %2604 = vmatprep.subr.bf16.mxu0 0
      %2605 = vmatpush1.bf16.msra.mxu0 0
      %2606 = vmatprep.subr.bf16.mxu0 0
      %2607 = vmatpush1.bf16.msra.mxu0 0
      %2608 = vmatprep.subr.bf16.mxu0 0
      %2609 = vmatpush1.bf16.msra.mxu0 0
      %2610 = vmatprep.subr.bf16.mxu0 0
      %2611 = vmatpush1.bf16.msra.mxu0 0
      %2612 = vmatprep.subr.bf16.mxu0 0
      %2613 = vmatpush1.bf16.msra.mxu0 0
      %2614 = vmatprep.subr.bf16.mxu0 0
      %2615 = vmatpush1.bf16.msra.mxu0 0
      %2616 = vmatprep.mubr.bf16.mxu0 0
      %2617 = vmatmul.mubr.bf16.gmra.mrb[0].mxu0 %v2576
      %v2618 = vpop.f32.mrb[0].mxu0
      %v2619 = vadd.f32 0.0, %v2618
      %v2620 = vpop.f32.mrb[0].mxu0
      %v2621 = vpop.f32.mrb[0].mxu0
      %v2622 = vadd.f32 0.0, %v2621
      %v2623 = vpop.f32.mrb[0].mxu0
      %2624 = vmatprep.mubr.bf16.mxu0 0
      %2625 = vmatmul.mubr.bf16.gmra.mrb[0].mxu0 %v2579
      %v2626 = vpop.f32.mrb[0].mxu0
      %v2627 = vadd.f32 0.0, %v2626
      %v2628 = vpop.f32.mrb[0].mxu0
      %v2629 = vpop.f32.mrb[0].mxu0
      %v2630 = vpop.f32.mrb[0].mxu0
      %2631 = vdwg.mxu0
      %v2632 = vpack.c.bf16 %v2622, %v2619
      %v2633 = vpack.c.bf16 %v2627, %v2627
      %s2634 = scalar_lea.vmem %s5, 32
      %v2635 = vld [vmem:[%s2634] sm:$0xf]
      %v2636 = vld [vmem:[%s2634 + $0x4] sm:$0xf]
      %v2639 = vunpack.c.l.b16 %v2635
      %v2640 = vunpack.c.l.b16 %v2636
      %v2641 = vpack.c.b16 %v2640, %v2639
      %v2644 = vsel %vm1075, %v2632, 0
      %v2647 = vsel %vm1075, %v2633, 0
      %2649 = vmatprep.subr.bf16.mxu0 0
      %2650 = vmatpush1.bf16.msra.mxu0 %v2641
      %2651 = vmatprep.subr.bf16.mxu0 0
      %2652 = vmatpush1.bf16.msra.mxu0 0
      %2653 = vmatprep.subr.bf16.mxu0 0
      %2654 = vmatpush1.bf16.msra.mxu0 0
      %2655 = vmatprep.subr.bf16.mxu0 0
      %2656 = vmatpush1.bf16.msra.mxu0 0
      %2657 = vmatprep.subr.bf16.mxu0 0
      %2658 = vmatpush1.bf16.msra.mxu0 0
      %2659 = vmatprep.subr.bf16.mxu0 0
      %2660 = vmatpush1.bf16.msra.mxu0 0
      %2661 = vmatprep.subr.bf16.mxu0 0
      %2662 = vmatpush1.bf16.msra.mxu0 0
      %2663 = vmatprep.subr.bf16.mxu0 0
      %2664 = vmatpush1.bf16.msra.mxu0 0
      %2665 = vmatprep.subr.bf16.mxu0 0
      %2666 = vmatpush1.bf16.msra.mxu0 0
      %2667 = vmatprep.subr.bf16.mxu0 0
      %2668 = vmatpush1.bf16.msra.mxu0 0
      %2669 = vmatprep.subr.bf16.mxu0 0
      %2670 = vmatpush1.bf16.msra.mxu0 0
      %2671 = vmatprep.subr.bf16.mxu0 0
      %2672 = vmatpush1.bf16.msra.mxu0 0
      %2673 = vmatprep.subr.bf16.mxu0 0
      %2674 = vmatpush1.bf16.msra.mxu0 0
      %2675 = vmatprep.subr.bf16.mxu0 0
      %2676 = vmatpush1.bf16.msra.mxu0 0
      %2677 = vmatprep.subr.bf16.mxu0 0
      %2678 = vmatpush1.bf16.msra.mxu0 0
      %2679 = vmatprep.subr.bf16.mxu0 0
      %2680 = vmatpush1.bf16.msra.mxu0 0
      %2681 = vmatprep.mubr.bf16.mxu0 0
      %2682 = vmatmul.mubr.bf16.gmra.mrb[0].mxu0 %v2644
      %v2683 = vpop.f32.mrb[0].mxu0
      %v2684 = vadd.f32 0.0, %v2683
      %v2685 = vpop.f32.mrb[0].mxu0
      %v2686 = vpop.f32.mrb[0].mxu0
      %v2687 = vadd.f32 0.0, %v2686
      %v2688 = vpop.f32.mrb[0].mxu0
      %2689 = vmatprep.mubr.bf16.mxu0 0
      %2690 = vmatmul.mubr.bf16.gmra.mrb[0].mxu0 %v2647
      %v2691 = vpop.f32.mrb[0].mxu0
      %v2692 = vadd.f32 0.0, %v2691
      %v2693 = vpop.f32.mrb[0].mxu0
      %v2694 = vpop.f32.mrb[0].mxu0
      %v2695 = vpop.f32.mrb[0].mxu0
      %2696 = vdwg.mxu0
      %v2697 = vadd.f32 %v2463, %v2684
      %v2698 = vadd.f32 %v2463, %v2687
      %v2699 = vadd.f32 %v2463, %v2692
      %2700 = vrot.lane.b32.xlu0 %v2464, 112
      %v2701 = vpop.permute.xlu0 %2700
      %2702 = vrot.lane.b32.xlu0 %v2465, 112
      %v2703 = vpop.permute.xlu0 %2702
      %2704 = vrot.lane.b32.xlu0 %v2464, 48
      %v2705 = vpop.permute.xlu0 %2704
      %2706 = vrot.lane.b32.xlu0 %v2465, 48
      %v2707 = vpop.permute.xlu0 %2706
      %v2709 = vsel %vm1075, %v2701, 0
      %v2712 = vsel %vm1075, %v2703, 0
      %v2715 = vsel %vm1075, %v2705, 0
      %v2718 = vsel %vm1075, %v2707, 0
      %2720 = vmatprep.subr.bf16.mxu0 0
      %2721 = vmatpush1.bf16.xpose.msra.mxu0 %v2715
      %2722 = vmatprep.subr.bf16.mxu0 0
      %2723 = vmatpush1.bf16.xpose.msra.mxu0 %v2718
      %2724 = vmatprep.subr.bf16.mxu0 0
      %2725 = vmatpush1.bf16.xpose.msra.mxu0 0
      %2726 = vmatprep.subr.bf16.mxu0 0
      %2727 = vmatpush1.bf16.xpose.msra.mxu0 0
      %2728 = vmatprep.subr.bf16.mxu0 0
      %2729 = vmatpush1.bf16.xpose.msra.mxu0 0
      %2730 = vmatprep.subr.bf16.mxu0 0
      %2731 = vmatpush1.bf16.xpose.msra.mxu0 0
      %2732 = vmatprep.subr.bf16.mxu0 0
      %2733 = vmatpush1.bf16.xpose.msra.mxu0 0
      %2734 = vmatprep.subr.bf16.mxu0 0
      %2735 = vmatpush1.bf16.xpose.msra.mxu0 0
      %2736 = vmatprep.subr.bf16.mxu0 0
      %2737 = vmatpush1.bf16.xpose.msra.mxu0 0
      %2738 = vmatprep.subr.bf16.mxu0 0
      %2739 = vmatpush1.bf16.xpose.msra.mxu0 0
      %2740 = vmatprep.subr.bf16.mxu0 0
      %2741 = vmatpush1.bf16.xpose.msra.mxu0 0
      %2742 = vmatprep.subr.bf16.mxu0 0
      %2743 = vmatpush1.bf16.xpose.msra.mxu0 0
      %2744 = vmatprep.subr.bf16.mxu0 0
      %2745 = vmatpush1.bf16.xpose.msra.mxu0 0
      %2746 = vmatprep.subr.bf16.mxu0 0
      %2747 = vmatpush1.bf16.xpose.msra.mxu0 0
      %2748 = vmatprep.subr.bf16.mxu0 0
      %2749 = vmatpush1.bf16.xpose.msra.mxu0 0
      %2750 = vmatprep.subr.bf16.mxu0 0
      %2751 = vmatpush1.bf16.xpose.msra.mxu0 0
      %2752 = vmatprep.mubr.bf16.mxu0 0
      %2753 = vmatmul.mubr.bf16.gmra.mrb[0].mxu0 %v2709
      %v2754 = vpop.f32.mrb[0].mxu0
      %v2755 = vadd.f32 0.0, %v2754
      %v2756 = vpop.f32.mrb[0].mxu0
      %v2757 = vpop.f32.mrb[0].mxu0
      %v2758 = vadd.f32 0.0, %v2757
      %v2759 = vpop.f32.mrb[0].mxu0
      %2760 = vmatprep.mubr.bf16.mxu0 0
      %2761 = vmatmul.mubr.bf16.gmra.mrb[0].mxu0 %v2712
      %v2762 = vpop.f32.mrb[0].mxu0
      %v2763 = vadd.f32 0.0, %v2762
      %v2764 = vpop.f32.mrb[0].mxu0
      %v2765 = vpop.f32.mrb[0].mxu0
      %v2766 = vpop.f32.mrb[0].mxu0
      %2767 = vdwg.mxu0
      %v2768 = vmul.f32 %v2755, 0.25
      %v2769 = vmul.f32 %v2758, 0.25
      %v2770 = vmul.f32 %v2763, 0.25
      %v2771 = vadd.f32 %v2768, %v332
      %v2772 = vadd.f32 %v2769, %v333
      %v2773 = vadd.f32 %v2770, %v334
      %v2774 = vsel %vm1142, %v2771, -inf
      %2775 = vmax.xlane.f32.xlu0 %v2774
      %v2776 = vpop.xlane.xlu0 %2775
      %v2777 = vsel %vm1142, %v2772, -inf
      %2778 = vmax.xlane.f32.xlu0 %v2777
      %v2779 = vpop.xlane.xlu0 %2778
      %v2780 = vsel %vm1149, %v2773, -inf
      %2781 = vmax.xlane.f32.xlu0 %v2780
      %v2782 = vpop.xlane.xlu0 %2781
      %v2783 = vsub.f32 %v2771, %v2776
      %v2784 = vsub.f32 %v2772, %v2779
      %v2785 = vsub.f32 %v2773, %v2782
      %v2786 = vmul.f32 %v2783, 1.442695
      %v2787 = vpow.pop %v2786
      %v2788 = vmul.f32 %v2784, 1.442695
      %v2789 = vpow.pop %v2788
      %v2790 = vmul.f32 %v2785, 1.442695
      %v2791 = vpow.pop %v2790
      %v2792 = vsel %vm1142, %v2787, 0.0
      %2793 = vadd.xlane.f32.xlu0 %v2792
      %v2794 = vpop.xlane.xlu0 %2793
      %v2795 = vsel %vm1142, %v2789, 0.0
      %2796 = vadd.xlane.f32.xlu0 %v2795
      %v2797 = vpop.xlane.xlu0 %2796
      %v2798 = vsel %vm1149, %v2791, 0.0
      %2799 = vadd.xlane.f32.xlu0 %v2798
      %v2800 = vpop.xlane.xlu0 %2799
      %v2801 = vrcp.pop %v2794
      %v2802 = vrcp.pop %v2797
      %v2803 = vrcp.pop %v2800
      %v2804 = vmul.f32 %v2787, %v2801
      %v2805 = vmul.f32 %v2789, %v2802
      %v2806 = vmul.f32 %v2791, %v2803
      %v2807 = vpack.c.bf16 %v2805, %v2804
      %v2808 = vpack.c.bf16 %v2806, %v2806
      %2811 = vrot.lane.b32.xlu0 %v2466, 112
      %v2812 = vpop.permute.xlu0 %2811
      %2813 = vrot.lane.b32.xlu0 %v2467, 112
      %v2814 = vpop.permute.xlu0 %2813
      %v2817 = vsel %vm1142, %v2807, 0
      %v2820 = vsel %vm1142, %v2808, 0
      %v2823 = vsel %vm1185, %v2814, 0
      %2825 = vmatprep.subr.bf16.mxu0 0
      %2826 = vmatpush1.bf16.msra.mxu0 %v2812
      %2827 = vmatprep.subr.bf16.mxu0 0
      %2828 = vmatpush1.bf16.msra.mxu0 %v2823
      %2829 = vmatprep.subr.bf16.mxu0 0
      %2830 = vmatpush1.bf16.msra.mxu0 0
      %2831 = vmatprep.subr.bf16.mxu0 0
      %2832 = vmatpush1.bf16.msra.mxu0 0
      %2833 = vmatprep.subr.bf16.mxu0 0
      %2834 = vmatpush1.bf16.msra.mxu0 0
      %2835 = vmatprep.subr.bf16.mxu0 0
      %2836 = vmatpush1.bf16.msra.mxu0 0
      %2837 = vmatprep.subr.bf16.mxu0 0
      %2838 = vmatpush1.bf16.msra.mxu0 0
      %2839 = vmatprep.subr.bf16.mxu0 0
      %2840 = vmatpush1.bf16.msra.mxu0 0
      %2841 = vmatprep.subr.bf16.mxu0 0
      %2842 = vmatpush1.bf16.msra.mxu0 0
      %2843 = vmatprep.subr.bf16.mxu0 0
      %2844 = vmatpush1.bf16.msra.mxu0 0
      %2845 = vmatprep.subr.bf16.mxu0 0
      %2846 = vmatpush1.bf16.msra.mxu0 0
      %2847 = vmatprep.subr.bf16.mxu0 0
      %2848 = vmatpush1.bf16.msra.mxu0 0
      %2849 = vmatprep.subr.bf16.mxu0 0
      %2850 = vmatpush1.bf16.msra.mxu0 0
      %2851 = vmatprep.subr.bf16.mxu0 0
      %2852 = vmatpush1.bf16.msra.mxu0 0
      %2853 = vmatprep.subr.bf16.mxu0 0
      %2854 = vmatpush1.bf16.msra.mxu0 0
      %2855 = vmatprep.subr.bf16.mxu0 0
      %2856 = vmatpush1.bf16.msra.mxu0 0
      %2857 = vmatprep.mubr.bf16.mxu0 0
      %2858 = vmatmul.mubr.bf16.gmra.mrb[0].mxu0 %v2817
      %v2859 = vpop.f32.mrb[0].mxu0
      %v2860 = vadd.f32 0.0, %v2859
      %v2861 = vpop.f32.mrb[0].mxu0
      %v2862 = vpop.f32.mrb[0].mxu0
      %v2863 = vadd.f32 0.0, %v2862
      %v2864 = vpop.f32.mrb[0].mxu0
      %2865 = vmatprep.mubr.bf16.mxu0 0
      %2866 = vmatmul.mubr.bf16.gmra.mrb[0].mxu0 %v2820
      %v2867 = vpop.f32.mrb[0].mxu0
      %v2868 = vadd.f32 0.0, %v2867
      %v2869 = vpop.f32.mrb[0].mxu0
      %v2870 = vpop.f32.mrb[0].mxu0
      %v2871 = vpop.f32.mrb[0].mxu0
      %2872 = vdwg.mxu0
      %v2873 = vpack.c.bf16 %v2863, %v2860
      %v2874 = vpack.c.bf16 %v2868, %v2868
      %s2875 = scalar_lea.vmem %s5, 40
      %v2876 = vld [vmem:[%s2875] sm:$0xf]
      %v2877 = vld [vmem:[%s2875 + $0x4] sm:$0xf]
      %v2880 = vunpack.c.l.b16 %v2876
      %v2881 = vunpack.c.l.b16 %v2877
      %v2882 = vpack.c.b16 %v2881, %v2880
      %v2885 = vsel %vm1075, %v2873, 0
      %v2888 = vsel %vm1075, %v2874, 0
      %2890 = vmatprep.subr.bf16.mxu0 0
      %2891 = vmatpush1.bf16.msra.mxu0 %v2882
      %2892 = vmatprep.subr.bf16.mxu0 0
      %2893 = vmatpush1.bf16.msra.mxu0 0
      %2894 = vmatprep.subr.bf16.mxu0 0
      %2895 = vmatpush1.bf16.msra.mxu0 0
      %2896 = vmatprep.subr.bf16.mxu0 0
      %2897 = vmatpush1.bf16.msra.mxu0 0
      %2898 = vmatprep.subr.bf16.mxu0 0
      %2899 = vmatpush1.bf16.msra.mxu0 0
      %2900 = vmatprep.subr.bf16.mxu0 0
      %2901 = vmatpush1.bf16.msra.mxu0 0
      %2902 = vmatprep.subr.bf16.mxu0 0
      %2903 = vmatpush1.bf16.msra.mxu0 0
      %2904 = vmatprep.subr.bf16.mxu0 0
      %2905 = vmatpush1.bf16.msra.mxu0 0
      %2906 = vmatprep.subr.bf16.mxu0 0
      %2907 = vmatpush1.bf16.msra.mxu0 0
      %2908 = vmatprep.subr.bf16.mxu0 0
      %2909 = vmatpush1.bf16.msra.mxu0 0
      %2910 = vmatprep.subr.bf16.mxu0 0
      %2911 = vmatpush1.bf16.msra.mxu0 0
      %2912 = vmatprep.subr.bf16.mxu0 0
      %2913 = vmatpush1.bf16.msra.mxu0 0
      %2914 = vmatprep.subr.bf16.mxu0 0
      %2915 = vmatpush1.bf16.msra.mxu0 0
      %2916 = vmatprep.subr.bf16.mxu0 0
      %2917 = vmatpush1.bf16.msra.mxu0 0
      %2918 = vmatprep.subr.bf16.mxu0 0
      %2919 = vmatpush1.bf16.msra.mxu0 0
      %2920 = vmatprep.subr.bf16.mxu0 0
      %2921 = vmatpush1.bf16.msra.mxu0 0
      %2922 = vmatprep.mubr.bf16.mxu0 0
      %2923 = vmatmul.mubr.bf16.gmra.mrb[0].mxu0 %v2885
      %v2924 = vpop.f32.mrb[0].mxu0
      %v2925 = vadd.f32 0.0, %v2924
      %v2926 = vpop.f32.mrb[0].mxu0
      %v2927 = vpop.f32.mrb[0].mxu0
      %v2928 = vadd.f32 0.0, %v2927
      %v2929 = vpop.f32.mrb[0].mxu0
      %2930 = vmatprep.mubr.bf16.mxu0 0
      %2931 = vmatmul.mubr.bf16.gmra.mrb[0].mxu0 %v2888
      %v2932 = vpop.f32.mrb[0].mxu0
      %v2933 = vadd.f32 0.0, %v2932
      %v2934 = vpop.f32.mrb[0].mxu0
      %v2935 = vpop.f32.mrb[0].mxu0
      %v2936 = vpop.f32.mrb[0].mxu0
      %2937 = vdwg.mxu0
      %v2938 = vadd.f32 %v2697, %v2925
      %v2939 = vadd.f32 %v2698, %v2928
      %v2940 = vadd.f32 %v2699, %v2933
      %2941 = vrot.lane.b32.xlu0 %v2464, 96
      %v2942 = vpop.permute.xlu0 %2941
      %2943 = vrot.lane.b32.xlu0 %v2465, 96
      %v2944 = vpop.permute.xlu0 %2943
      %2945 = vrot.lane.b32.xlu0 %v2464, 32
      %v2946 = vpop.permute.xlu0 %2945
      %2947 = vrot.lane.b32.xlu0 %v2465, 32
      %v2948 = vpop.permute.xlu0 %2947
      %v2950 = vsel %vm1075, %v2942, 0
      %v2953 = vsel %vm1075, %v2944, 0
      %v2956 = vsel %vm1075, %v2946, 0
      %v2959 = vsel %vm1075, %v2948, 0
      %2961 = vmatprep.subr.bf16.mxu0 0
      %2962 = vmatpush1.bf16.xpose.msra.mxu0 %v2956
      %2963 = vmatprep.subr.bf16.mxu0 0
      %2964 = vmatpush1.bf16.xpose.msra.mxu0 %v2959
      %2965 = vmatprep.subr.bf16.mxu0 0
      %2966 = vmatpush1.bf16.xpose.msra.mxu0 0
      %2967 = vmatprep.subr.bf16.mxu0 0
      %2968 = vmatpush1.bf16.xpose.msra.mxu0 0
      %2969 = vmatprep.subr.bf16.mxu0 0
      %2970 = vmatpush1.bf16.xpose.msra.mxu0 0
      %2971 = vmatprep.subr.bf16.mxu0 0
      %2972 = vmatpush1.bf16.xpose.msra.mxu0 0
      %2973 = vmatprep.subr.bf16.mxu0 0
      %2974 = vmatpush1.bf16.xpose.msra.mxu0 0
      %2975 = vmatprep.subr.bf16.mxu0 0
      %2976 = vmatpush1.bf16.xpose.msra.mxu0 0
      %2977 = vmatprep.subr.bf16.mxu0 0
      %2978 = vmatpush1.bf16.xpose.msra.mxu0 0
      %2979 = vmatprep.subr.bf16.mxu0 0
      %2980 = vmatpush1.bf16.xpose.msra.mxu0 0
      %2981 = vmatprep.subr.bf16.mxu0 0
      %2982 = vmatpush1.bf16.xpose.msra.mxu0 0
      %2983 = vmatprep.subr.bf16.mxu0 0
      %2984 = vmatpush1.bf16.xpose.msra.mxu0 0
      %2985 = vmatprep.subr.bf16.mxu0 0
      %2986 = vmatpush1.bf16.xpose.msra.mxu0 0
      %2987 = vmatprep.subr.bf16.mxu0 0
      %2988 = vmatpush1.bf16.xpose.msra.mxu0 0
      %2989 = vmatprep.subr.bf16.mxu0 0
      %2990 = vmatpush1.bf16.xpose.msra.mxu0 0
      %2991 = vmatprep.subr.bf16.mxu0 0
      %2992 = vmatpush1.bf16.xpose.msra.mxu0 0
      %2993 = vmatprep.mubr.bf16.mxu0 0
      %2994 = vmatmul.mubr.bf16.gmra.mrb[0].mxu0 %v2950
      %v2995 = vpop.f32.mrb[0].mxu0
      %v2996 = vadd.f32 0.0, %v2995
      %v2997 = vpop.f32.mrb[0].mxu0
      %v2998 = vpop.f32.mrb[0].mxu0
      %v2999 = vadd.f32 0.0, %v2998
      %v3000 = vpop.f32.mrb[0].mxu0
      %3001 = vmatprep.mubr.bf16.mxu0 0
      %3002 = vmatmul.mubr.bf16.gmra.mrb[0].mxu0 %v2953
      %v3003 = vpop.f32.mrb[0].mxu0
      %v3004 = vadd.f32 0.0, %v3003
      %v3005 = vpop.f32.mrb[0].mxu0
      %v3006 = vpop.f32.mrb[0].mxu0
      %v3007 = vpop.f32.mrb[0].mxu0
      %3008 = vdwg.mxu0
      %v3009 = vmul.f32 %v2996, 0.25
      %v3010 = vmul.f32 %v2999, 0.25
      %v3011 = vmul.f32 %v3004, 0.25
      %v3012 = vadd.f32 %v3009, %v332
      %v3013 = vadd.f32 %v3010, %v333
      %v3014 = vadd.f32 %v3011, %v334
      %v3015 = vsel %vm1142, %v3012, -inf
      %3016 = vmax.xlane.f32.xlu0 %v3015
      %v3017 = vpop.xlane.xlu0 %3016
      %v3018 = vsel %vm1142, %v3013, -inf
      %3019 = vmax.xlane.f32.xlu0 %v3018
      %v3020 = vpop.xlane.xlu0 %3019
      %v3021 = vsel %vm1149, %v3014, -inf
      %3022 = vmax.xlane.f32.xlu0 %v3021
      %v3023 = vpop.xlane.xlu0 %3022
      %v3024 = vsub.f32 %v3012, %v3017
      %v3025 = vsub.f32 %v3013, %v3020
      %v3026 = vsub.f32 %v3014, %v3023
      %v3027 = vmul.f32 %v3024, 1.442695
      %v3028 = vpow.pop %v3027
      %v3029 = vmul.f32 %v3025, 1.442695
      %v3030 = vpow.pop %v3029
      %v3031 = vmul.f32 %v3026, 1.442695
      %v3032 = vpow.pop %v3031
      %v3033 = vsel %vm1142, %v3028, 0.0
      %3034 = vadd.xlane.f32.xlu0 %v3033
      %v3035 = vpop.xlane.xlu0 %3034
      %v3036 = vsel %vm1142, %v3030, 0.0
      %3037 = vadd.xlane.f32.xlu0 %v3036
      %v3038 = vpop.xlane.xlu0 %3037
      %v3039 = vsel %vm1149, %v3032, 0.0
      %3040 = vadd.xlane.f32.xlu0 %v3039
      %v3041 = vpop.xlane.xlu0 %3040
      %v3042 = vrcp.pop %v3035
      %v3043 = vrcp.pop %v3038
      %v3044 = vrcp.pop %v3041
      %v3045 = vmul.f32 %v3028, %v3042
      %v3046 = vmul.f32 %v3030, %v3043
      %v3047 = vmul.f32 %v3032, %v3044
      %v3048 = vpack.c.bf16 %v3046, %v3045
      %v3049 = vpack.c.bf16 %v3047, %v3047
      %3050 = vrot.lane.b32.xlu0 %v2466, 96
      %v3051 = vpop.permute.xlu0 %3050
      %3052 = vrot.lane.b32.xlu0 %v2467, 96
      %v3053 = vpop.permute.xlu0 %3052
      %v3056 = vsel %vm1142, %v3048, 0
      %v3059 = vsel %vm1142, %v3049, 0
      %v3062 = vsel %vm1185, %v3053, 0
      %3064 = vmatprep.subr.bf16.mxu0 0
      %3065 = vmatpush1.bf16.msra.mxu0 %v3051
      %3066 = vmatprep.subr.bf16.mxu0 0
      %3067 = vmatpush1.bf16.msra.mxu0 %v3062
      %3068 = vmatprep.subr.bf16.mxu0 0
      %3069 = vmatpush1.bf16.msra.mxu0 0
      %3070 = vmatprep.subr.bf16.mxu0 0
      %3071 = vmatpush1.bf16.msra.mxu0 0
      %3072 = vmatprep.subr.bf16.mxu0 0
      %3073 = vmatpush1.bf16.msra.mxu0 0
      %3074 = vmatprep.subr.bf16.mxu0 0
      %3075 = vmatpush1.bf16.msra.mxu0 0
      %3076 = vmatprep.subr.bf16.mxu0 0
      %3077 = vmatpush1.bf16.msra.mxu0 0
      %3078 = vmatprep.subr.bf16.mxu0 0
      %3079 = vmatpush1.bf16.msra.mxu0 0
      %3080 = vmatprep.subr.bf16.mxu0 0
      %3081 = vmatpush1.bf16.msra.mxu0 0
      %3082 = vmatprep.subr.bf16.mxu0 0
      %3083 = vmatpush1.bf16.msra.mxu0 0
      %3084 = vmatprep.subr.bf16.mxu0 0
      %3085 = vmatpush1.bf16.msra.mxu0 0
      %3086 = vmatprep.subr.bf16.mxu0 0
      %3087 = vmatpush1.bf16.msra.mxu0 0
      %3088 = vmatprep.subr.bf16.mxu0 0
      %3089 = vmatpush1.bf16.msra.mxu0 0
      %3090 = vmatprep.subr.bf16.mxu0 0
      %3091 = vmatpush1.bf16.msra.mxu0 0
      %3092 = vmatprep.subr.bf16.mxu0 0
      %3093 = vmatpush1.bf16.msra.mxu0 0
      %3094 = vmatprep.subr.bf16.mxu0 0
      %3095 = vmatpush1.bf16.msra.mxu0 0
      %3096 = vmatprep.mubr.bf16.mxu0 0
      %3097 = vmatmul.mubr.bf16.gmra.mrb[0].mxu0 %v3056
      %v3098 = vpop.f32.mrb[0].mxu0
      %v3099 = vadd.f32 0.0, %v3098
      %v3100 = vpop.f32.mrb[0].mxu0
      %v3101 = vpop.f32.mrb[0].mxu0
      %v3102 = vadd.f32 0.0, %v3101
      %v3103 = vpop.f32.mrb[0].mxu0
      %3104 = vmatprep.mubr.bf16.mxu0 0
      %3105 = vmatmul.mubr.bf16.gmra.mrb[0].mxu0 %v3059
      %v3106 = vpop.f32.mrb[0].mxu0
      %v3107 = vadd.f32 0.0, %v3106
      %v3108 = vpop.f32.mrb[0].mxu0
      %v3109 = vpop.f32.mrb[0].mxu0
      %v3110 = vpop.f32.mrb[0].mxu0
      %3111 = vdwg.mxu0
      %v3112 = vpack.c.bf16 %v3102, %v3099
      %v3113 = vpack.c.bf16 %v3107, %v3107
      %s3114 = scalar_lea.vmem %s5, 48
      %v3115 = vld [vmem:[%s3114] sm:$0xf]
      %v3116 = vld [vmem:[%s3114 + $0x4] sm:$0xf]
      %v3119 = vunpack.c.l.b16 %v3115
      %v3120 = vunpack.c.l.b16 %v3116
      %v3121 = vpack.c.b16 %v3120, %v3119
      %v3124 = vsel %vm1075, %v3112, 0
      %v3127 = vsel %vm1075, %v3113, 0
      %3129 = vmatprep.subr.bf16.mxu0 0
      %3130 = vmatpush1.bf16.msra.mxu0 %v3121
      %3131 = vmatprep.subr.bf16.mxu0 0
      %3132 = vmatpush1.bf16.msra.mxu0 0
      %3133 = vmatprep.subr.bf16.mxu0 0
      %3134 = vmatpush1.bf16.msra.mxu0 0
      %3135 = vmatprep.subr.bf16.mxu0 0
      %3136 = vmatpush1.bf16.msra.mxu0 0
      %3137 = vmatprep.subr.bf16.mxu0 0
      %3138 = vmatpush1.bf16.msra.mxu0 0
      %3139 = vmatprep.subr.bf16.mxu0 0
      %3140 = vmatpush1.bf16.msra.mxu0 0
      %3141 = vmatprep.subr.bf16.mxu0 0
      %3142 = vmatpush1.bf16.msra.mxu0 0
      %3143 = vmatprep.subr.bf16.mxu0 0
      %3144 = vmatpush1.bf16.msra.mxu0 0
      %3145 = vmatprep.subr.bf16.mxu0 0
      %3146 = vmatpush1.bf16.msra.mxu0 0
      %3147 = vmatprep.subr.bf16.mxu0 0
      %3148 = vmatpush1.bf16.msra.mxu0 0
      %3149 = vmatprep.subr.bf16.mxu0 0
      %3150 = vmatpush1.bf16.msra.mxu0 0
      %3151 = vmatprep.subr.bf16.mxu0 0
      %3152 = vmatpush1.bf16.msra.mxu0 0
      %3153 = vmatprep.subr.bf16.mxu0 0
      %3154 = vmatpush1.bf16.msra.mxu0 0
      %3155 = vmatprep.subr.bf16.mxu0 0
      %3156 = vmatpush1.bf16.msra.mxu0 0
      %3157 = vmatprep.subr.bf16.mxu0 0
      %3158 = vmatpush1.bf16.msra.mxu0 0
      %3159 = vmatprep.subr.bf16.mxu0 0
      %3160 = vmatpush1.bf16.msra.mxu0 0
      %3161 = vmatprep.mubr.bf16.mxu0 0
      %3162 = vmatmul.mubr.bf16.gmra.mrb[0].mxu0 %v3124
      %v3163 = vpop.f32.mrb[0].mxu0
      %v3164 = vadd.f32 0.0, %v3163
      %v3165 = vpop.f32.mrb[0].mxu0
      %v3166 = vpop.f32.mrb[0].mxu0
      %v3167 = vadd.f32 0.0, %v3166
      %v3168 = vpop.f32.mrb[0].mxu0
      %3169 = vmatprep.mubr.bf16.mxu0 0
      %3170 = vmatmul.mubr.bf16.gmra.mrb[0].mxu0 %v3127
      %v3171 = vpop.f32.mrb[0].mxu0
      %v3172 = vadd.f32 0.0, %v3171
      %v3173 = vpop.f32.mrb[0].mxu0
      %v3174 = vpop.f32.mrb[0].mxu0
      %v3175 = vpop.f32.mrb[0].mxu0
      %3176 = vdwg.mxu0
      %v3177 = vadd.f32 %v2938, %v3164
      %v3178 = vadd.f32 %v2939, %v3167
      %v3179 = vadd.f32 %v2940, %v3172
      %3180 = vrot.lane.b32.xlu0 %v2464, 80
      %v3181 = vpop.permute.xlu0 %3180
      %3182 = vrot.lane.b32.xlu0 %v2465, 80
      %v3183 = vpop.permute.xlu0 %3182
      %3184 = vrot.lane.b32.xlu0 %v2464, 16
      %v3185 = vpop.permute.xlu0 %3184
      %3186 = vrot.lane.b32.xlu0 %v2465, 16
      %v3187 = vpop.permute.xlu0 %3186
      %v3189 = vsel %vm1075, %v3181, 0
      %v3192 = vsel %vm1075, %v3183, 0
      %v3195 = vsel %vm1075, %v3185, 0
      %v3198 = vsel %vm1075, %v3187, 0
      %3200 = vmatprep.subr.bf16.mxu0 0
      %3201 = vmatpush1.bf16.xpose.msra.mxu0 %v3195
      %3202 = vmatprep.subr.bf16.mxu0 0
      %3203 = vmatpush1.bf16.xpose.msra.mxu0 %v3198
      %3204 = vmatprep.subr.bf16.mxu0 0
      %3205 = vmatpush1.bf16.xpose.msra.mxu0 0
      %3206 = vmatprep.subr.bf16.mxu0 0
      %3207 = vmatpush1.bf16.xpose.msra.mxu0 0
      %3208 = vmatprep.subr.bf16.mxu0 0
      %3209 = vmatpush1.bf16.xpose.msra.mxu0 0
      %3210 = vmatprep.subr.bf16.mxu0 0
      %3211 = vmatpush1.bf16.xpose.msra.mxu0 0
      %3212 = vmatprep.subr.bf16.mxu0 0
      %3213 = vmatpush1.bf16.xpose.msra.mxu0 0
      %3214 = vmatprep.subr.bf16.mxu0 0
      %3215 = vmatpush1.bf16.xpose.msra.mxu0 0
      %3216 = vmatprep.subr.bf16.mxu0 0
      %3217 = vmatpush1.bf16.xpose.msra.mxu0 0
      %3218 = vmatprep.subr.bf16.mxu0 0
      %3219 = vmatpush1.bf16.xpose.msra.mxu0 0
      %3220 = vmatprep.subr.bf16.mxu0 0
      %3221 = vmatpush1.bf16.xpose.msra.mxu0 0
      %3222 = vmatprep.subr.bf16.mxu0 0
      %3223 = vmatpush1.bf16.xpose.msra.mxu0 0
      %3224 = vmatprep.subr.bf16.mxu0 0
      %3225 = vmatpush1.bf16.xpose.msra.mxu0 0
      %3226 = vmatprep.subr.bf16.mxu0 0
      %3227 = vmatpush1.bf16.xpose.msra.mxu0 0
      %3228 = vmatprep.subr.bf16.mxu0 0
      %3229 = vmatpush1.bf16.xpose.msra.mxu0 0
      %3230 = vmatprep.subr.bf16.mxu0 0
      %3231 = vmatpush1.bf16.xpose.msra.mxu0 0
      %3232 = vmatprep.mubr.bf16.mxu0 0
      %3233 = vmatmul.mubr.bf16.gmra.mrb[0].mxu0 %v3189
      %v3234 = vpop.f32.mrb[0].mxu0
      %v3235 = vadd.f32 0.0, %v3234
      %v3236 = vpop.f32.mrb[0].mxu0
      %v3237 = vpop.f32.mrb[0].mxu0
      %v3238 = vadd.f32 0.0, %v3237
      %v3239 = vpop.f32.mrb[0].mxu0
      %3240 = vmatprep.mubr.bf16.mxu0 0
      %3241 = vmatmul.mubr.bf16.gmra.mrb[0].mxu0 %v3192
      %v3242 = vpop.f32.mrb[0].mxu0
      %v3243 = vadd.f32 0.0, %v3242
      %v3244 = vpop.f32.mrb[0].mxu0
      %v3245 = vpop.f32.mrb[0].mxu0
      %v3246 = vpop.f32.mrb[0].mxu0
      %3247 = vdwg.mxu0
      %v3248 = vmul.f32 %v3235, 0.25
      %v3249 = vmul.f32 %v3238, 0.25
      %v3250 = vmul.f32 %v3243, 0.25
      %v3251 = vadd.f32 %v3248, %v332
      %v3252 = vadd.f32 %v3249, %v333
      %v3253 = vadd.f32 %v3250, %v334
      %v3254 = vsel %vm1142, %v3251, -inf
      %3255 = vmax.xlane.f32.xlu0 %v3254
      %v3256 = vpop.xlane.xlu0 %3255
      %v3257 = vsel %vm1142, %v3252, -inf
      %3258 = vmax.xlane.f32.xlu0 %v3257
      %v3259 = vpop.xlane.xlu0 %3258
      %v3260 = vsel %vm1149, %v3253, -inf
      %3261 = vmax.xlane.f32.xlu0 %v3260
      %v3262 = vpop.xlane.xlu0 %3261
      %v3263 = vsub.f32 %v3251, %v3256
      %v3264 = vsub.f32 %v3252, %v3259
      %v3265 = vsub.f32 %v3253, %v3262
      %v3266 = vmul.f32 %v3263, 1.442695
      %v3267 = vpow.pop %v3266
      %v3268 = vmul.f32 %v3264, 1.442695
      %v3269 = vpow.pop %v3268
      %v3270 = vmul.f32 %v3265, 1.442695
      %v3271 = vpow.pop %v3270
      %v3272 = vsel %vm1142, %v3267, 0.0
      %3273 = vadd.xlane.f32.xlu0 %v3272
      %v3274 = vpop.xlane.xlu0 %3273
      %v3275 = vsel %vm1142, %v3269, 0.0
      %3276 = vadd.xlane.f32.xlu0 %v3275
      %v3277 = vpop.xlane.xlu0 %3276
      %v3278 = vsel %vm1149, %v3271, 0.0
      %3279 = vadd.xlane.f32.xlu0 %v3278
      %v3280 = vpop.xlane.xlu0 %3279
      %v3281 = vrcp.pop %v3274
      %v3282 = vrcp.pop %v3277
      %v3283 = vrcp.pop %v3280
      %v3284 = vmul.f32 %v3267, %v3281
      %v3285 = vmul.f32 %v3269, %v3282
      %v3286 = vmul.f32 %v3271, %v3283
      %v3287 = vpack.c.bf16 %v3285, %v3284
      %v3288 = vpack.c.bf16 %v3286, %v3286
      %3289 = vrot.lane.b32.xlu0 %v2466, 80
      %v3290 = vpop.permute.xlu0 %3289
      %3291 = vrot.lane.b32.xlu0 %v2467, 80
      %v3292 = vpop.permute.xlu0 %3291
      %v3295 = vsel %vm1142, %v3287, 0
      %v3298 = vsel %vm1142, %v3288, 0
      %v3301 = vsel %vm1185, %v3292, 0
      %3303 = vmatprep.subr.bf16.mxu0 0
      %3304 = vmatpush1.bf16.msra.mxu0 %v3290
      %3305 = vmatprep.subr.bf16.mxu0 0
      %3306 = vmatpush1.bf16.msra.mxu0 %v3301
      %3307 = vmatprep.subr.bf16.mxu0 0
      %3308 = vmatpush1.bf16.msra.mxu0 0
      %3309 = vmatprep.subr.bf16.mxu0 0
      %3310 = vmatpush1.bf16.msra.mxu0 0
      %3311 = vmatprep.subr.bf16.mxu0 0
      %3312 = vmatpush1.bf16.msra.mxu0 0
      %3313 = vmatprep.subr.bf16.mxu0 0
      %3314 = vmatpush1.bf16.msra.mxu0 0
      %3315 = vmatprep.subr.bf16.mxu0 0
      %3316 = vmatpush1.bf16.msra.mxu0 0
      %3317 = vmatprep.subr.bf16.mxu0 0
      %3318 = vmatpush1.bf16.msra.mxu0 0
      %3319 = vmatprep.subr.bf16.mxu0 0
      %3320 = vmatpush1.bf16.msra.mxu0 0
      %3321 = vmatprep.subr.bf16.mxu0 0
      %3322 = vmatpush1.bf16.msra.mxu0 0
      %3323 = vmatprep.subr.bf16.mxu0 0
      %3324 = vmatpush1.bf16.msra.mxu0 0
      %3325 = vmatprep.subr.bf16.mxu0 0
      %3326 = vmatpush1.bf16.msra.mxu0 0
      %3327 = vmatprep.subr.bf16.mxu0 0
      %3328 = vmatpush1.bf16.msra.mxu0 0
      %3329 = vmatprep.subr.bf16.mxu0 0
      %3330 = vmatpush1.bf16.msra.mxu0 0
      %3331 = vmatprep.subr.bf16.mxu0 0
      %3332 = vmatpush1.bf16.msra.mxu0 0
      %3333 = vmatprep.subr.bf16.mxu0 0
      %3334 = vmatpush1.bf16.msra.mxu0 0
      %3335 = vmatprep.mubr.bf16.mxu0 0
      %3336 = vmatmul.mubr.bf16.gmra.mrb[0].mxu0 %v3295
      %v3337 = vpop.f32.mrb[0].mxu0
      %v3338 = vadd.f32 0.0, %v3337
      %v3339 = vpop.f32.mrb[0].mxu0
      %v3340 = vpop.f32.mrb[0].mxu0
      %v3341 = vadd.f32 0.0, %v3340
      %v3342 = vpop.f32.mrb[0].mxu0
      %3343 = vmatprep.mubr.bf16.mxu0 0
      %3344 = vmatmul.mubr.bf16.gmra.mrb[0].mxu0 %v3298
      %v3345 = vpop.f32.mrb[0].mxu0
      %v3346 = vadd.f32 0.0, %v3345
      %v3347 = vpop.f32.mrb[0].mxu0
      %v3348 = vpop.f32.mrb[0].mxu0
      %v3349 = vpop.f32.mrb[0].mxu0
      %3350 = vdwg.mxu0
      %v3351 = vpack.c.bf16 %v3341, %v3338
      %v3352 = vpack.c.bf16 %v3346, %v3346
      %s3353 = scalar_lea.vmem %s5, 56
      %v3354 = vld [vmem:[%s3353] sm:$0xf]
      %v3355 = vld [vmem:[%s3353 + $0x4] sm:$0xf]
      %v3358 = vunpack.c.l.b16 %v3354
      %v3359 = vunpack.c.l.b16 %v3355
      %v3360 = vpack.c.b16 %v3359, %v3358
      %v3363 = vsel %vm1075, %v3351, 0
      %v3366 = vsel %vm1075, %v3352, 0
      %3368 = vmatprep.subr.bf16.mxu0 0
      %3369 = vmatpush1.bf16.msra.mxu0 %v3360
      %3370 = vmatprep.subr.bf16.mxu0 0
      %3371 = vmatpush1.bf16.msra.mxu0 0
      %3372 = vmatprep.subr.bf16.mxu0 0
      %3373 = vmatpush1.bf16.msra.mxu0 0
      %3374 = vmatprep.subr.bf16.mxu0 0
      %3375 = vmatpush1.bf16.msra.mxu0 0
      %3376 = vmatprep.subr.bf16.mxu0 0
      %3377 = vmatpush1.bf16.msra.mxu0 0
      %3378 = vmatprep.subr.bf16.mxu0 0
      %3379 = vmatpush1.bf16.msra.mxu0 0
      %3380 = vmatprep.subr.bf16.mxu0 0
      %3381 = vmatpush1.bf16.msra.mxu0 0
      %3382 = vmatprep.subr.bf16.mxu0 0
      %3383 = vmatpush1.bf16.msra.mxu0 0
      %3384 = vmatprep.subr.bf16.mxu0 0
      %3385 = vmatpush1.bf16.msra.mxu0 0
      %3386 = vmatprep.subr.bf16.mxu0 0
      %3387 = vmatpush1.bf16.msra.mxu0 0
      %3388 = vmatprep.subr.bf16.mxu0 0
      %3389 = vmatpush1.bf16.msra.mxu0 0
      %3390 = vmatprep.subr.bf16.mxu0 0
      %3391 = vmatpush1.bf16.msra.mxu0 0
      %3392 = vmatprep.subr.bf16.mxu0 0
      %3393 = vmatpush1.bf16.msra.mxu0 0
      %3394 = vmatprep.subr.bf16.mxu0 0
      %3395 = vmatpush1.bf16.msra.mxu0 0
      %3396 = vmatprep.subr.bf16.mxu0 0
      %3397 = vmatpush1.bf16.msra.mxu0 0
      %3398 = vmatprep.subr.bf16.mxu0 0
      %3399 = vmatpush1.bf16.msra.mxu0 0
      %3400 = vmatprep.mubr.bf16.mxu0 0
      %3401 = vmatmul.mubr.bf16.gmra.mrb[0].mxu0 %v3363
      %v3402 = vpop.f32.mrb[0].mxu0
      %v3403 = vadd.f32 0.0, %v3402
      %v3404 = vpop.f32.mrb[0].mxu0
      %v3405 = vpop.f32.mrb[0].mxu0
      %v3406 = vadd.f32 0.0, %v3405
      %v3407 = vpop.f32.mrb[0].mxu0
      %3408 = vmatprep.mubr.bf16.mxu0 0
      %3409 = vmatmul.mubr.bf16.gmra.mrb[0].mxu0 %v3366
      %v3410 = vpop.f32.mrb[0].mxu0
      %v3411 = vadd.f32 0.0, %v3410
      %v3412 = vpop.f32.mrb[0].mxu0
      %v3413 = vpop.f32.mrb[0].mxu0
      %v3414 = vpop.f32.mrb[0].mxu0
      %3415 = vdwg.mxu0
      %v3416 = vadd.f32 %v3177, %v3403
      %v3417 = vadd.f32 %v3178, %v3406
      %v3418 = vadd.f32 %v3179, %v3411
      %v3419 = vadd.f32 %v2292, %v3416
      %v3420 = vadd.f32 %v2293, %v3417
      %v3421 = vadd.f32 %v2294, %v3418
      %v3422 = vld [vmem:[%s2 + $0x14] ss:$0 sm:$0xff]
      %v3423 = vld [vmem:[%s2 + $0x15] ss:$0 sm:$0xff]
      %v3424 = vsel %vm896, %v3419, 0.0
      %3425 = vadd.xlane.f32.xlu0 %v3424
      %v3426 = vpop.xlane.xlu0 %3425
      %v3427 = vsel %vm896, %v3420, 0.0
      %3428 = vadd.xlane.f32.xlu0 %v3427
      %v3429 = vpop.xlane.xlu0 %3428
      %v3430 = vsel %vm903, %v3421, 0.0
      %3431 = vadd.xlane.f32.xlu0 %v3430
      %v3432 = vpop.xlane.xlu0 %3431
      %v3433 = vmul.f32 %v3426, %v907
      %v3434 = vmul.f32 %v3429, %v907
      %v3435 = vmul.f32 %v3432, %v907
      %v3436 = vsub.f32 %v3419, %v3433
      %v3437 = vsub.f32 %v3420, %v3434
      %v3438 = vsub.f32 %v3421, %v3435
      %v3439 = vmul.f32 %v3436, %v3436
      %v3440 = vmul.f32 %v3437, %v3437
      %v3441 = vmul.f32 %v3438, %v3438
      %v3442 = vsel %vm896, %v3439, 0.0
      %3443 = vadd.xlane.f32.xlu0 %v3442
      %v3444 = vpop.xlane.xlu0 %3443
      %v3445 = vsel %vm896, %v3440, 0.0
      %3446 = vadd.xlane.f32.xlu0 %v3445
      %v3447 = vpop.xlane.xlu0 %3446
      %v3448 = vsel %vm903, %v3441, 0.0
      %3449 = vadd.xlane.f32.xlu0 %v3448
      %v3450 = vpop.xlane.xlu0 %3449
      %v3451 = vmul.f32 %v3444, %v907
      %v3452 = vmul.f32 %v3447, %v907
      %v3453 = vmul.f32 %v3450, %v907
      %v3454 = vadd.f32 %v3451, 1e-06
      %v3455 = vadd.f32 %v3452, 1e-06
      %v3456 = vadd.f32 %v3453, 1e-06
      %v3457 = vrsqrt.pop %v3454
      %v3458 = vrsqrt.pop %v3455
      %v3459 = vrsqrt.pop %v3456
      %v3460 = vmul.f32 %v3436, %v3457
      %v3461 = vmul.f32 %v3437, %v3458
      %v3462 = vmul.f32 %v3438, %v3459
      %v3463 = vmul.f32 %v3460, %v3422
      %v3464 = vmul.f32 %v3461, %v3422
      %v3465 = vmul.f32 %v3462, %v3422
      %v3466 = vadd.f32 %v3463, %v3423
      %v3467 = vadd.f32 %v3464, %v3423
      %v3468 = vadd.f32 %v3465, %v3423
      %v3469 = vpack.c.bf16 %v3467, %v3466
      %v3470 = vpack.c.bf16 %v3468, %v3468
      %s3471 = scalar_lea.vmem %s6, 32
      %v3472 = vld [vmem:[%s3471] sm:$0xf]
      %v3473 = vld [vmem:[%s3471 + $0x4] sm:$0xf]
      %v3474 = vld [vmem:[%s3471 + $0x8] sm:$0xf]
      %v3475 = vld [vmem:[%s3471 + $0xc] sm:$0xf]
      %v3476 = vld [vmem:[%s3471 + $0x10] sm:$0xf]
      %v3477 = vld [vmem:[%s3471 + $0x14] sm:$0xf]
      %v3478 = vld [vmem:[%s3471 + $0x18] sm:$0xf]
      %v3479 = vld [vmem:[%s3471 + $0x1c] sm:$0xf]
      %v3480 = vld [vmem:[%s2 + $0x16] ss:$0 sm:$0xff]
      %v3489 = vunpack.c.l.b16 %v3472
      %v3490 = vunpack.c.l.b16 %v3473
      %v3491 = vunpack.c.l.b16 %v3474
      %v3492 = vunpack.c.l.b16 %v3475
      %v3493 = vunpack.c.l.b16 %v3476
      %v3494 = vunpack.c.l.b16 %v3477
      %v3495 = vunpack.c.l.b16 %v3478
      %v3496 = vunpack.c.l.b16 %v3479
      %v3497 = vpack.c.b16 %v3490, %v3489
      %v3498 = vpack.c.b16 %v3492, %v3491
      %v3499 = vpack.c.b16 %v3494, %v3493
      %v3500 = vpack.c.b16 %v3496, %v3495
      %v3506 = vsel %vm896, %v3469, 0
      %v3509 = vsel %vm896, %v3470, 0
      %3511 = vmatprep.subr.bf16.mxu0 0
      %3512 = vmatpush1.bf16.msra.mxu0 %v3497
      %3513 = vmatprep.subr.bf16.mxu0 0
      %3514 = vmatpush1.bf16.msra.mxu0 %v3498
      %3515 = vmatprep.subr.bf16.mxu0 0
      %3516 = vmatpush1.bf16.msra.mxu0 %v3499
      %3517 = vmatprep.subr.bf16.mxu0 0
      %3518 = vmatpush1.bf16.msra.mxu0 %v3500
      %3519 = vmatprep.subr.bf16.mxu0 0
      %3520 = vmatpush1.bf16.msra.mxu0 0
      %3521 = vmatprep.subr.bf16.mxu0 0
      %3522 = vmatpush1.bf16.msra.mxu0 0
      %3523 = vmatprep.subr.bf16.mxu0 0
      %3524 = vmatpush1.bf16.msra.mxu0 0
      %3525 = vmatprep.subr.bf16.mxu0 0
      %3526 = vmatpush1.bf16.msra.mxu0 0
      %3527 = vmatprep.subr.bf16.mxu0 0
      %3528 = vmatpush1.bf16.msra.mxu0 0
      %3529 = vmatprep.subr.bf16.mxu0 0
      %3530 = vmatpush1.bf16.msra.mxu0 0
      %3531 = vmatprep.subr.bf16.mxu0 0
      %3532 = vmatpush1.bf16.msra.mxu0 0
      %3533 = vmatprep.subr.bf16.mxu0 0
      %3534 = vmatpush1.bf16.msra.mxu0 0
      %3535 = vmatprep.subr.bf16.mxu0 0
      %3536 = vmatpush1.bf16.msra.mxu0 0
      %3537 = vmatprep.subr.bf16.mxu0 0
      %3538 = vmatpush1.bf16.msra.mxu0 0
      %3539 = vmatprep.subr.bf16.mxu0 0
      %3540 = vmatpush1.bf16.msra.mxu0 0
      %3541 = vmatprep.subr.bf16.mxu0 0
      %3542 = vmatpush1.bf16.msra.mxu0 0
      %3543 = vmatprep.mubr.bf16.mxu0 0
      %3544 = vmatmul.mubr.bf16.gmra.mrb[0].mxu0 %v3506
      %v3545 = vpop.f32.mrb[0].mxu0
      %v3546 = vadd.f32 %v3480, %v3545
      %v3547 = vpop.f32.mrb[0].mxu0
      %v3548 = vpop.f32.mrb[0].mxu0
      %v3549 = vadd.f32 %v3480, %v3548
      %v3550 = vpop.f32.mrb[0].mxu0
      %3551 = vmatprep.mubr.bf16.mxu0 0
      %3552 = vmatmul.mubr.bf16.gmra.mrb[0].mxu0 %v3509
      %v3553 = vpop.f32.mrb[0].mxu0
      %v3554 = vadd.f32 %v3480, %v3553
      %v3555 = vpop.f32.mrb[0].mxu0
      %v3556 = vpop.f32.mrb[0].mxu0
      %v3557 = vpop.f32.mrb[0].mxu0
      %3558 = vdwg.mxu0
      %v3559 = vmul.f32 %v3546, 0.5
      %v3560 = vmul.f32 %v3549, 0.5
      %v3561 = vmul.f32 %v3554, 0.5
      %v3562 = vmul.f32 %v3546, 0.70710677
      %v3563 = vmul.f32 %v3549, 0.70710677
      %v3564 = vmul.f32 %v3554, 0.70710677
      %v3565 = verf.f32.pop %v3562
      %v3566 = verf.f32.pop %v3563
      %v3567 = verf.f32.pop %v3564
      %v3568 = vadd.f32 %v3565, 1.0
      %v3569 = vadd.f32 %v3566, 1.0
      %v3570 = vadd.f32 %v3567, 1.0
      %v3571 = vmul.f32 %v3559, %v3568
      %v3572 = vmul.f32 %v3560, %v3569
      %v3573 = vmul.f32 %v3561, %v3570
      %v3574 = vpack.c.bf16 %v3572, %v3571
      %v3575 = vpack.c.bf16 %v3573, %v3573
      %s3576 = scalar_lea.vmem %s7, 64
      %v3577 = vld [vmem:[%s3576] sm:$0xf]
      %v3578 = vld [vmem:[%s3576 + $0x4] sm:$0xf]
      %v3579 = vld [vmem:[%s3576 + $0x8] sm:$0xf]
      %v3580 = vld [vmem:[%s3576 + $0xc] sm:$0xf]
      %v3581 = vld [vmem:[%s3576 + $0x10] sm:$0xf]
      %v3582 = vld [vmem:[%s3576 + $0x14] sm:$0xf]
      %v3583 = vld [vmem:[%s3576 + $0x18] sm:$0xf]
      %v3584 = vld [vmem:[%s3576 + $0x1c] sm:$0xf]
      %v3585 = vld [vmem:[%s3576 + $0x20] sm:$0xf]
      %v3586 = vld [vmem:[%s3576 + $0x24] sm:$0xf]
      %v3587 = vld [vmem:[%s3576 + $0x28] sm:$0xf]
      %v3588 = vld [vmem:[%s3576 + $0x2c] sm:$0xf]
      %v3589 = vld [vmem:[%s3576 + $0x30] sm:$0xf]
      %v3590 = vld [vmem:[%s3576 + $0x34] sm:$0xf]
      %v3591 = vld [vmem:[%s3576 + $0x38] sm:$0xf]
      %v3592 = vld [vmem:[%s3576 + $0x3c] sm:$0xf]
      %v3593 = vld [vmem:[%s2 + $0x17] ss:$0 sm:$0xff]
      %v3610 = vunpack.c.l.b16 %v3577
      %v3611 = vunpack.c.l.b16 %v3578
      %v3612 = vunpack.c.l.b16 %v3579
      %v3613 = vunpack.c.l.b16 %v3580
      %v3614 = vunpack.c.l.b16 %v3581
      %v3615 = vunpack.c.l.b16 %v3582
      %v3616 = vunpack.c.l.b16 %v3583
      %v3617 = vunpack.c.l.b16 %v3584
      %v3618 = vunpack.c.l.b16 %v3585
      %v3619 = vunpack.c.l.b16 %v3586
      %v3620 = vunpack.c.l.b16 %v3587
      %v3621 = vunpack.c.l.b16 %v3588
      %v3622 = vunpack.c.l.b16 %v3589
      %v3623 = vunpack.c.l.b16 %v3590
      %v3624 = vunpack.c.l.b16 %v3591
      %v3625 = vunpack.c.l.b16 %v3592
      %v3626 = vpack.c.b16 %v3611, %v3610
      %v3627 = vpack.c.b16 %v3613, %v3612
      %v3628 = vpack.c.b16 %v3615, %v3614
      %v3629 = vpack.c.b16 %v3617, %v3616
      %v3630 = vpack.c.b16 %v3619, %v3618
      %v3631 = vpack.c.b16 %v3621, %v3620
      %v3632 = vpack.c.b16 %v3623, %v3622
      %v3633 = vpack.c.b16 %v3625, %v3624
      %3642 = vmatprep.subr.bf16.mxu0 0
      %3643 = vmatpush1.bf16.msra.mxu0 %v3626
      %3644 = vmatprep.subr.bf16.mxu0 0
      %3645 = vmatpush1.bf16.msra.mxu0 %v3627
      %3646 = vmatprep.subr.bf16.mxu0 0
      %3647 = vmatpush1.bf16.msra.mxu0 %v3628
      %3648 = vmatprep.subr.bf16.mxu0 0
      %3649 = vmatpush1.bf16.msra.mxu0 %v3629
      %3650 = vmatprep.subr.bf16.mxu0 0
      %3651 = vmatpush1.bf16.msra.mxu0 %v3630
      %3652 = vmatprep.subr.bf16.mxu0 0
      %3653 = vmatpush1.bf16.msra.mxu0 %v3631
      %3654 = vmatprep.subr.bf16.mxu0 0
      %3655 = vmatpush1.bf16.msra.mxu0 %v3632
      %3656 = vmatprep.subr.bf16.mxu0 0
      %3657 = vmatpush1.bf16.msra.mxu0 %v3633
      %3658 = vmatprep.subr.bf16.mxu0 0
      %3659 = vmatpush1.bf16.msra.mxu0 0
      %3660 = vmatprep.subr.bf16.mxu0 0
      %3661 = vmatpush1.bf16.msra.mxu0 0
      %3662 = vmatprep.subr.bf16.mxu0 0
      %3663 = vmatpush1.bf16.msra.mxu0 0
      %3664 = vmatprep.subr.bf16.mxu0 0
      %3665 = vmatpush1.bf16.msra.mxu0 0
      %3666 = vmatprep.subr.bf16.mxu0 0
      %3667 = vmatpush1.bf16.msra.mxu0 0
      %3668 = vmatprep.subr.bf16.mxu0 0
      %3669 = vmatpush1.bf16.msra.mxu0 0
      %3670 = vmatprep.subr.bf16.mxu0 0
      %3671 = vmatpush1.bf16.msra.mxu0 0
      %3672 = vmatprep.subr.bf16.mxu0 0
      %3673 = vmatpush1.bf16.msra.mxu0 0
      %3674 = vmatprep.mubr.bf16.mxu0 0
      %3675 = vmatmul.mubr.bf16.gmra.mrb[0].mxu0 %v3574
      %v3676 = vpop.f32.mrb[0].mxu0
      %v3677 = vadd.f32 %v3593, %v3676
      %v3678 = vpop.f32.mrb[0].mxu0
      %v3679 = vpop.f32.mrb[0].mxu0
      %v3680 = vpop.f32.mrb[0].mxu0
      %3681 = vmatprep.mubr.bf16.mxu0 0
      %3682 = vmatmul.mubr.bf16.gmra.mrb[0].mxu0 %v3575
      %v3683 = vpop.f32.mrb[0].mxu0
      %v3684 = vpop.f32.mrb[0].mxu0
      %v3685 = vpop.f32.mrb[0].mxu0
      %v3686 = vpop.f32.mrb[0].mxu0
      %3687 = vdwg.mxu0
      %v3688 = vadd.f32 %v3419, %v3677
      %v3689 = vld [vmem:[%s2 + $0x20] ss:$0 sm:$0xff]
      %v3690 = vld [vmem:[%s2 + $0x21] ss:$0 sm:$0xff]
      %v3691 = vsel %vm903, %v3688, 0.0
      %3692 = vadd.xlane.f32.xlu0 %v3691
      %v3693 = vpop.xlane.xlu0 %3692
      %v3694 = vmul.f32 %v3693, %v907
      %v3695 = vsub.f32 %v3688, %v3694
      %v3696 = vmul.f32 %v3695, %v3695
      %v3697 = vsel %vm903, %v3696, 0.0
      %3698 = vadd.xlane.f32.xlu0 %v3697
      %v3699 = vpop.xlane.xlu0 %3698
      %v3700 = vmul.f32 %v3699, %v907
      %v3701 = vadd.f32 %v3700, 1e-06
      %v3702 = vrsqrt.pop %v3701
      %v3703 = vmul.f32 %v3695, %v3702
      %v3704 = vmul.f32 %v3703, %v3689
      %v3705 = vadd.f32 %v3704, %v3690
      %v3706 = vpack.c.bf16 %v3705, %v3705
      %v3707 = vld [vmem:[%s8] sm:$0xf]
      %v3708 = vld [vmem:[%s8 + $0x4] sm:$0xf]
      %v3709 = vld [vmem:[%s8 + $0x8] sm:$0xf]
      %v3710 = vld [vmem:[%s8 + $0xc] sm:$0xf]
      %v3711 = vld [vmem:[%s8 + $0x10] sm:$0xf]
      %v3712 = vld [vmem:[%s8 + $0x14] sm:$0xf]
      %v3713 = vld [vmem:[%s8 + $0x18] sm:$0xf]
      %v3714 = vld [vmem:[%s8 + $0x1c] sm:$0xf]
      %v3715 = vld [vmem:[%s2 + $0x22] ss:$0 sm:$0xff]
      %v3724 = vunpack.c.l.b16 %v3707
      %v3725 = vunpack.c.l.b16 %v3708
      %v3726 = vunpack.c.l.b16 %v3709
      %v3727 = vunpack.c.l.b16 %v3710
      %v3728 = vunpack.c.l.b16 %v3711
      %v3729 = vunpack.c.l.b16 %v3712
      %v3730 = vunpack.c.l.b16 %v3713
      %v3731 = vunpack.c.l.b16 %v3714
      %v3732 = vpack.c.b16 %v3725, %v3724
      %v3733 = vpack.c.b16 %v3727, %v3726
      %v3734 = vpack.c.b16 %v3729, %v3728
      %v3735 = vpack.c.b16 %v3731, %v3730
      %v3741 = vsel %vm896, %v3706, 0
      %3743 = vmatprep.subr.bf16.mxu0 0
      %3744 = vmatpush1.bf16.msra.mxu0 %v3732
      %3745 = vmatprep.subr.bf16.mxu0 0
      %3746 = vmatpush1.bf16.msra.mxu0 %v3733
      %3747 = vmatprep.subr.bf16.mxu0 0
      %3748 = vmatpush1.bf16.msra.mxu0 %v3734
      %3749 = vmatprep.subr.bf16.mxu0 0
      %3750 = vmatpush1.bf16.msra.mxu0 %v3735
      %3751 = vmatprep.subr.bf16.mxu0 0
      %3752 = vmatpush1.bf16.msra.mxu0 0
      %3753 = vmatprep.subr.bf16.mxu0 0
      %3754 = vmatpush1.bf16.msra.mxu0 0
      %3755 = vmatprep.subr.bf16.mxu0 0
      %3756 = vmatpush1.bf16.msra.mxu0 0
      %3757 = vmatprep.subr.bf16.mxu0 0
      %3758 = vmatpush1.bf16.msra.mxu0 0
      %3759 = vmatprep.subr.bf16.mxu0 0
      %3760 = vmatpush1.bf16.msra.mxu0 0
      %3761 = vmatprep.subr.bf16.mxu0 0
      %3762 = vmatpush1.bf16.msra.mxu0 0
      %3763 = vmatprep.subr.bf16.mxu0 0
      %3764 = vmatpush1.bf16.msra.mxu0 0
      %3765 = vmatprep.subr.bf16.mxu0 0
      %3766 = vmatpush1.bf16.msra.mxu0 0
      %3767 = vmatprep.subr.bf16.mxu0 0
      %3768 = vmatpush1.bf16.msra.mxu0 0
      %3769 = vmatprep.subr.bf16.mxu0 0
      %3770 = vmatpush1.bf16.msra.mxu0 0
      %3771 = vmatprep.subr.bf16.mxu0 0
      %3772 = vmatpush1.bf16.msra.mxu0 0
      %3773 = vmatprep.subr.bf16.mxu0 0
      %3774 = vmatpush1.bf16.msra.mxu0 0
      %3775 = vmatprep.mubr.bf16.mxu0 0
      %3776 = vmatmul.mubr.bf16.gmra.mrb[0].mxu0 %v3741
      %v3777 = vpop.f32.mrb[0].mxu0
      %v3778 = vadd.f32 %v3715, %v3777
      %v3779 = vpop.f32.mrb[0].mxu0
      %v3780 = vpop.f32.mrb[0].mxu0
      %v3781 = vpop.f32.mrb[0].mxu0
      %3782 = vdwg.mxu0
      %3783 = vst [vmem:[%s330] sm:$0xf] %v3778
      %p3784 = scmp.lt.s32.totalorder %s20, 1
      %s3785 = scalar_select %p3784, %s20, 1
      %s3786 = smul.addr %s3785, 4
      %s3787 = scalar_lea.vmem %s9, %s3786
      // Predicated region
      $region57: #{vit_forward.1} parent=55 // pred_check
        %p3788 = pneg %p232
      $region58: #{vit_forward.1} parent=55 // pred_check_branch
        %3790 = sbr.rel (%p3788) target = $region60
      $region59: #{vit_forward.1} parent=55 // pred_region
        _
      $region60: #{vit_forward.1} parent=55 // pred_fallthru
        _
    $region56: #{vit_forward.1} parent=5 // pred_fallthru
      _
    %p3791 = scmp.le.s32.totalorder 2, %s15
    // Predicated region
    $region61: #{vit_forward.1} parent=5 // pred_check
      %p3792 = pneg %p3791
    $region62: #{vit_forward.1} parent=5 // pred_check_branch
      %3794 = sbr.rel (%p3792) target = $region64
    $region63: #{vit_forward.1} parent=5 // pred_region
      %s3795 = ssub.s32 %s15, 2
      // Predicated region
      $region65: #{vit_forward.1} parent=63 // pred_check
        %p3796 = pneg %p238
      $region66: #{vit_forward.1} parent=63 // pred_check_branch
        %3798 = sbr.rel (%p3796) target = $region68
      $region67: #{vit_forward.1} parent=63 // pred_region
        %p3799 = scmp.lt.s32.totalorder %s21, 1
        %s3800 = scalar_select %p3799, %s21, 1
        %s3801 = smul.addr %s3800, 4
        %s3802 = scalar_lea.vmem %s9, %s3801
      $region68: #{vit_forward.1} parent=63 // pred_fallthru
        _
    $region64: #{vit_forward.1} parent=5 // pred_fallthru
      _
  $region6: #{vit_forward.1} parent=0 // loop_footer
    %s19 = sadd.s32 1, %s15
  $region7: #{vit_forward.1} parent=0 // loop_footer_branch
    %14 = sbr.rel target = $region3
  $region8: #{vit_forward.1} parent=0 // loop_exit
    _

</llo_original>
